<compile_context>
chip_gen: v5e
topology: v5e:2x2
jax: 0.10.0
libtpu: 0.0.40
codegen_flags: <defaults>
</compile_context>

<pallas_src>
import numpy as np
import jax
import jax.numpy as jnp
from jax.experimental import pallas as pl
from jax.experimental.pallas import tpu as pltpu

PAD = 128  # lane-aligned block that carries the 3 softmax denominators


# ----------------------------------------------------------------------------
# Pallas kernel: one grid step == one full SEGNN_Layer forward.  ent/rel are
# carried across layers in the (block-index-invariant) output buffers.
# ----------------------------------------------------------------------------
def _segnn_kernel(ent_in_ref, rel_in_ref,
                  src_oh_ref, dst_oh_ref, etp_oh_ref, relpair_ref,
                  dmt_ref, inm_ref, outm_ref, invc_ref, haspair_ref,
                  wcat_ref, bcat_ref, bns_ref, bnb_ref, wre_ref, bre_ref,
                  ent_out_ref, rel_out_ref,
                  big_sc):
    f32 = jnp.float32
    bf16 = jnp.bfloat16
    N, D = ent_out_ref.shape
    E = src_oh_ref.shape[0]

    layer = pl.program_id(0)

    @pl.when(layer == 0)
    def _():
        ent_out_ref[...] = ent_in_ref[...]
        rel_out_ref[...] = rel_in_ref[...]

    ent = ent_out_ref[...]            # [N,D] f32, carried across layers
    rel = rel_out_ref[...]            # [R,D] f32
    ent_b = ent.astype(bf16)
    rel_b = rel.astype(bf16)

    # ---- MXU one-hot gathers (replaces the serialized per-row loop) --------
    src_e = jnp.dot(src_oh_ref[...], ent_b, preferred_element_type=f32)   # [E,D]
    dst_e = jnp.dot(dst_oh_ref[...], ent_b, preferred_element_type=f32)   # [E,D]
    rel_e = jnp.dot(etp_oh_ref[...], rel_b, preferred_element_type=f32)   # [E,D]
    comp_e = src_e * rel_e            # CompLayer comp_fn == 'mul'

    inm = inm_ref[...]                # [E,1]
    outm = outm_ref[...]              # [E,1]

    # ---- edge_softmax numerators, three separate [E,1] columns -------------
    # Per-destination max -> per-logit-type global max: softmax is invariant
    # to any shift constant within a destination group.
    def softmax_num(logit):
        return jnp.exp(logit - jnp.max(logit))

    ex_e = softmax_num(jnp.sum(rel_e * dst_e, axis=-1, keepdims=True))
    ex_n = softmax_num(jnp.sum(src_e * dst_e, axis=-1, keepdims=True))
    ex_c = softmax_num(jnp.sum(comp_e * dst_e, axis=-1, keepdims=True))

    # ---- fused w_o|w_i projection + in/out-edge masking ---------------------
    def project(comp_b, k):
        proj = jnp.dot(comp_b, wcat_ref[k], preferred_element_type=f32)   # [E,2D]
        proj = proj + bcat_ref[k]
        return outm * proj[:, :D] + inm * proj[:, D:]

    h_edge = project(rel_e.astype(bf16), 0)    # EdgeLayer message
    h_node = project(src_e.astype(bf16), 1)    # NodeLayer message
    h_comp = project(comp_e.astype(bf16), 2)   # CompLayer message

    # ---- build the scatter operand directly in bf16 scratch ----------------
    big_sc[:, 0 * D:1 * D] = (h_edge * ex_e).astype(bf16)
    big_sc[:, 1 * D:2 * D] = (h_node * ex_n).astype(bf16)
    big_sc[:, 2 * D:3 * D] = (h_comp * ex_c).astype(bf16)
    lane = jax.lax.broadcasted_iota(jnp.int32, (E, PAD), 1)
    ex_tile = jnp.where(lane == 0, ex_e, 0.0)
    ex_tile = jnp.where(lane == 1, ex_n, ex_tile)
    ex_tile = jnp.where(lane == 2, ex_c, ex_tile)
    big_sc[:, 3 * D:3 * D + PAD] = ex_tile.astype(bf16)

    # ---- one batched scatter-sum over destination nodes ---------------------
    agg = jnp.dot(dmt_ref[...], big_sc[...], preferred_element_type=f32)  # [N,3D+PAD]

    def node_block(k):
        den = agg[:, 3 * D + k:3 * D + k + 1]            # [N,1] softmax denominator
        inv = jnp.where(den > 0.0, 1.0 / den, 0.0)       # zero in-degree nodes
        neigh = agg[:, k * D:(k + 1) * D] * inv
        # BatchNorm1d (eval, running stats) folded into scale/shift, then tanh
        return jnp.tanh(neigh * bns_ref[k] + bnb_ref[k])

    edge_out = node_block(0)
    node_out = node_block(1)
    comp_out = node_block(2)
    # loop_ent_emb = ent_emb (w_loop is unused by the PyTorch forward)
    ent_out_ref[...] = comp_out + ent + edge_out + node_out

    # ---- update_relations: aggregate -> mean -> project ----------------------
    # sum_p(pair_p @ W + b)/cnt == (mean_p pair_p) @ W + b   (for cnt > 0).
    pair_agg = jnp.dot(relpair_ref[...], ent_b, preferred_element_type=f32)  # [R,D]
    mean_pair = pair_agg * invc_ref[...]
    upd = jnp.dot(mean_pair.astype(bf16), wre_ref[...], preferred_element_type=f32)
    upd = (upd + bre_ref[...]) * haspair_ref[...]        # mask empty relations
    rel_out_ref[...] = rel + jnp.tanh(upd)


def _const_spec(shape):
    nd = len(shape)
    return pl.BlockSpec(shape, lambda l, _nd=nd: (0,) * _nd)


def _layer_spec(shape):
    nd = len(shape)
    return pl.BlockSpec((None,) + tuple(shape[1:]),
                        lambda l, _nd=nd: (l,) + (0,) * (_nd - 1))


def segnn_forward(ent0, rel0, graph, packed, num_layers):
    (src_oh, dst_oh, etp_oh, relpair, dmt, inm, outm, inv_cnt, haspair) = graph
    (wcat, bcat, bns, bnb, wre, bre) = packed
    N, D = ent0.shape
    R = rel0.shape[0]
    E = src_oh.shape[0]

    in_specs = [
        _const_spec(ent0.shape), _const_spec(rel0.shape),
        _const_spec(src_oh.shape), _const_spec(dst_oh.shape),
        _const_spec(etp_oh.shape), _const_spec(relpair.shape),
        _const_spec(dmt.shape), _const_spec(inm.shape), _const_spec(outm.shape),
        _const_spec(inv_cnt.shape), _const_spec(haspair.shape),
        _layer_spec(wcat.shape), _layer_spec(bcat.shape),
        _layer_spec(bns.shape), _layer_spec(bnb.shape),
        _layer_spec(wre.shape), _layer_spec(bre.shape),
    ]
    out_specs = (pl.BlockSpec((N, D), lambda l: (0, 0)),
                 pl.BlockSpec((R, D), lambda l: (0, 0)))

    return pl.pallas_call(
        _segnn_kernel,
        grid=(num_layers,),
        in_specs=in_specs,
        out_specs=out_specs,
        out_shape=(jax.ShapeDtypeStruct((N, D), jnp.float32),
                   jax.ShapeDtypeStruct((R, D), jnp.float32)),
        scratch_shapes=[pltpu.VMEM((E, 3 * D + PAD), jnp.bfloat16)],
        compiler_params=pltpu.CompilerParams(
            dimension_semantics=("arbitrary",),
            vmem_limit_bytes=32 * 1024 * 1024),
    )(ent0, rel0, src_oh, dst_oh, etp_oh, relpair, dmt, inm, outm,
      inv_cnt, haspair, wcat, bcat, bns, bnb, wre, bre)


# ----------------------------------------------------------------------------
# Pure-JAX reference (f32, gather / segment ops) for correctness checking.
# ----------------------------------------------------------------------------
def reference_layer(ent, rel, src, dst, etype, inm, outm, heads, tails,
                    relmask, params, N, R):
    WO, WI, BO, BI, BNS, BNB, WRE, BRE = params
    src_e, dst_e, rel_e = ent[src], ent[dst], rel[etype]

    def edge_softmax(logits):
        mx = jax.ops.segment_max(logits, dst, num_segments=N)
        ex = jnp.exp(logits - mx[dst])
        den = jax.ops.segment_sum(ex, dst, num_segments=N)
        return ex / den[dst]

    def sub(comp, logits, k):
        attn = edge_softmax(logits)[:, None]
        h = outm[:, None] * (comp @ WO[k] + BO[k]) \
          + inm[:, None] * (comp @ WI[k] + BI[k])
        neigh = jax.ops.segment_sum(h * attn, dst, num_segments=N)
        return jnp.tanh(neigh * BNS[k] + BNB[k])

    edge_out = sub(rel_e, jnp.sum(rel_e * dst_e, -1), 0)
    node_out = sub(src_e, jnp.sum(src_e * dst_e, -1), 1)
    comp_e = src_e * rel_e
    comp_out = sub(comp_e, jnp.sum(comp_e * dst_e, -1), 2)
    ent_out = comp_out + ent + edge_out + node_out

    pair = ent[tails] - ent[heads]
    upd = pair @ WRE + BRE
    sums = jax.ops.segment_sum(upd, relmask, num_segments=R)
    cnt = jnp.maximum(
        jax.ops.segment_sum(jnp.ones(relmask.shape, jnp.float32), relmask,
                            num_segments=R), 1.0)
    rel_out = rel + jnp.tanh(sums / cnt[:, None])
    return ent_out, rel_out


# ----------------------------------------------------------------------------
# Deterministic parameter init (only weights used by the forward: w_o / w_i
# per sublayer, BatchNorm, w_rel_edge; w / w_attn / w_loop / w_rel are unused
# by the PyTorch forward and skipped).
# ----------------------------------------------------------------------------
def init_layer_params(key, D):
    std_w = (2.0 / (D + D)) ** 0.5           # xavier-normal
    bb = 1.0 / (D ** 0.5)
    ks = jax.random.split(key, 6)
    WO = jax.random.normal(ks[0], (3, D, D)) * std_w
    WI = jax.random.normal(ks[1], (3, D, D)) * std_w
    BO = jax.random.uniform(ks[2], (3, 1, D), minval=-bb, maxval=bb)
    BI = jax.random.uniform(ks[3], (3, 1, D), minval=-bb, maxval=bb)
    WRE = jax.random.normal(ks[4], (D, D)) * std_w
    BRE = jax.random.uniform(ks[5], (1, D), minval=-bb, maxval=bb)
    eps = 1e-5                                # BatchNorm1d eval: running stats 0/1
    BNS = jnp.ones((3, 1, D)) / jnp.sqrt(1.0 + eps)
    BNB = jnp.zeros((3, 1, D))
    return tuple(x.astype(jnp.float32)
                 for x in (WO, WI, BO, BI, BNS, BNB, WRE, BRE))


def pack_params(layer_params):
    """Stack per-layer params along a leading layer axis for the fused grid."""
    WO = jnp.stack([p[0] for p in layer_params])    # [L,3,D,D]
    WI = jnp.stack([p[1] for p in layer_params])
    BO = jnp.stack([p[2] for p in layer_params])    # [L,3,1,D]
    BI = jnp.stack([p[3] for p in layer_params])
    BNS = jnp.stack([p[4] for p in layer_params])
    BNB = jnp.stack([p[5] for p in layer_params])
    WRE = jnp.stack([p[6] for p in layer_params])   # [L,D,D]
    BRE = jnp.stack([p[7] for p in layer_params])   # [L,1,D]
    wcat = jnp.concatenate([WO, WI], axis=-1).astype(jnp.bfloat16)   # [L,3,D,2D]
    bcat = jnp.concatenate([BO, BI], axis=-1).astype(jnp.float32)    # [L,3,1,2D]
    return (wcat, bcat, BNS.astype(jnp.float32), BNB.astype(jnp.float32),
            WRE.astype(jnp.bfloat16), BRE.astype(jnp.float32))


if __name__ == "__main__":
    key = jax.random.PRNGKey(0)
    N, R, D = 64, 8, 128          # num_ent, num_rel (incl. inverse), in=out dim
    E_half = 64
    LAYERS = 2
    NUM_SAMPLES = 20

    k1, k2, k3, ke, kr, kp = jax.random.split(key, 6)
    src0 = jax.random.randint(k1, (E_half,), 0, N)
    dst0 = jax.random.randint(k2, (E_half,), 0, N)
    et0 = jax.random.randint(k3, (E_half,), 0, R // 2)
    src = jnp.concatenate([src0, dst0]).astype(jnp.int32)   # reverse edges appended
    dst = jnp.concatenate([dst0, src0]).astype(jnp.int32)
    etype = jnp.concatenate([et0, et0 + R // 2]).astype(jnp.int32)
    E = 2 * E_half
    out_mask = jnp.concatenate([jnp.ones(E_half), jnp.zeros(E_half)]).astype(jnp.float32)
    in_mask = (1.0 - out_mask).astype(jnp.float32)

    # rel2ent_pairs: deterministic truncation to num_samples per relation
    src_np, dst_np, et_np = np.asarray(src), np.asarray(dst), np.asarray(etype)
    heads_l, tails_l, relm_l = [], [], []
    for r in range(R):
        idx = np.nonzero(et_np == r)[0][:NUM_SAMPLES]
        heads_l.extend(src_np[idx]); tails_l.extend(dst_np[idx])
        relm_l.extend([r] * len(idx))
    heads_np = np.array(heads_l, np.int32)
    tails_np = np.array(tails_l, np.int32)
    relmask_np = np.array(relm_l, np.int32)
    heads, tails, relmask = map(jnp.asarray, (heads_np, tails_np, relmask_np))

    f32, bf16 = jnp.float32, jnp.bfloat16
    # One-hot gather matrices (bf16 exact) and the scatter matrix.
    src_oh = jax.nn.one_hot(src, N, dtype=bf16)          # [E, N]
    dst_oh = jax.nn.one_hot(dst, N, dtype=bf16)          # [E, N]
    etp_oh = jax.nn.one_hot(etype, R, dtype=bf16)        # [E, R]
    dmt = jax.nn.one_hot(dst, N, dtype=bf16).T           # [N, E]  scatter matrix

    # relpair[r, v] = #(pairs of rel r with tail v) - #(pairs with head v)
    # (= rmt @ (onehot(tails) - onehot(heads)), folded host-side; integers,
    #  exact in bf16 since counts <= num_samples)
    rp = np.zeros((R, N), np.float32)
    for r, h, t in zip(relmask_np, heads_np, tails_np):
        rp[r, t] += 1.0
        rp[r, h] -= 1.0
    relpair = jnp.asarray(rp, dtype=bf16)                # [R, N]

    cnt = np.bincount(relmask_np, minlength=R).astype(np.float32)
    inv_cnt = jnp.asarray(1.0 / np.maximum(cnt, 1.0), dtype=f32)[:, None]   # [R,1]
    haspair = jnp.asarray((cnt > 0).astype(np.float32))[:, None]            # [R,1]

    graph = (src_oh, dst_oh, etp_oh, relpair, dmt,
             in_mask[:, None], out_mask[:, None], inv_cnt, haspair)

    # embeddings (xavier-normal)
    ent0 = (jax.random.normal(ke, (N, D)) * (2.0 / (N + D)) ** 0.5).astype(f32)
    rel0 = (jax.random.normal(kr, (R, D)) * (2.0 / (R + D)) ** 0.5).astype(f32)
    layer_params = [init_layer_params(k, D) for k in jax.random.split(kp, LAYERS)]

    # ---- Pallas forward (both layers fused into one pallas_call) ----
    ent, relv = segnn_forward(ent0, rel0, graph, pack_params(layer_params), LAYERS)
    jax.block_until_ready((ent, relv))

    # ---- pure-JAX f32 reference check ----
    ent_c, rel_c = ent0, rel0
    for p in layer_params:
        ent_c, rel_c = reference_layer(ent_c, rel_c, src, dst, etype, in_mask,
                                       out_mask, heads, tails, relmask, p, N, R)

    # kernel uses bf16 MXU operands (f32 accumulation) vs f32 reference
    assert jnp.allclose(ent, ent_c, atol=3e-2, rtol=3e-2), "ent mismatch"
    assert jnp.allclose(relv, rel_c, atol=3e-2, rtol=3e-2), "rel mismatch"

    print("KERNEL_OK")
</pallas_src>

<mosaic_0001>
module attributes {stable_mosaic.version = 11 : i64} {
  func.func @_segnn_kernel(%arg0: i32, %arg1: memref<64x128xf32, #tpu.memory_space<vmem>>, %arg2: memref<8x128xf32, #tpu.memory_space<vmem>>, %arg3: memref<128x64xbf16, #tpu.memory_space<vmem>>, %arg4: memref<128x64xbf16, #tpu.memory_space<vmem>>, %arg5: memref<128x8xbf16, #tpu.memory_space<vmem>>, %arg6: memref<8x64xbf16, #tpu.memory_space<vmem>>, %arg7: memref<64x128xbf16, #tpu.memory_space<vmem>>, %arg8: memref<128x1xf32, #tpu.memory_space<vmem>>, %arg9: memref<128x1xf32, #tpu.memory_space<vmem>>, %arg10: memref<8x1xf32, #tpu.memory_space<vmem>>, %arg11: memref<8x1xf32, #tpu.memory_space<vmem>>, %arg12: memref<1x3x128x256xbf16, #tpu.memory_space<vmem>>, %arg13: memref<1x3x1x256xf32, #tpu.memory_space<vmem>>, %arg14: memref<1x3x1x128xf32, #tpu.memory_space<vmem>>, %arg15: memref<1x3x1x128xf32, #tpu.memory_space<vmem>>, %arg16: memref<1x128x128xbf16, #tpu.memory_space<vmem>>, %arg17: memref<1x1x128xf32, #tpu.memory_space<vmem>>, %arg18: memref<64x128xf32, #tpu.memory_space<vmem>>, %arg19: memref<8x128xf32, #tpu.memory_space<vmem>>, %arg20: memref<128x512xbf16, #tpu.memory_space<vmem>>) attributes {dimension_semantics = [#tpu.dimension_semantics<arbitrary>], iteration_bounds = array<i64: 2>, scalar_prefetch = 0 : i64, scratch_operands = 1 : i64, tpu.core_type = #tpu.core_type<tc>, window_params = [{pipeline_mode = #tpu.pipeline_mode<synchronous>, transform_indices = @transform_0, window_bounds = array<i64: 64, 128>}, {pipeline_mode = #tpu.pipeline_mode<synchronous>, transform_indices = @transform_1, window_bounds = array<i64: 8, 128>}, {pipeline_mode = #tpu.pipeline_mode<synchronous>, transform_indices = @transform_2, window_bounds = array<i64: 128, 64>}, {pipeline_mode = #tpu.pipeline_mode<synchronous>, transform_indices = @transform_3, window_bounds = array<i64: 128, 64>}, {pipeline_mode = #tpu.pipeline_mode<synchronous>, transform_indices = @transform_4, window_bounds = array<i64: 128, 8>}, {pipeline_mode = #tpu.pipeline_mode<synchronous>, transform_indices = @transform_5, window_bounds = array<i64: 8, 64>}, {pipeline_mode = #tpu.pipeline_mode<synchronous>, transform_indices = @transform_6, window_bounds = array<i64: 64, 128>}, {pipeline_mode = #tpu.pipeline_mode<synchronous>, transform_indices = @transform_7, window_bounds = array<i64: 128, 1>}, {pipeline_mode = #tpu.pipeline_mode<synchronous>, transform_indices = @transform_8, window_bounds = array<i64: 128, 1>}, {pipeline_mode = #tpu.pipeline_mode<synchronous>, transform_indices = @transform_9, window_bounds = array<i64: 8, 1>}, {pipeline_mode = #tpu.pipeline_mode<synchronous>, transform_indices = @transform_10, window_bounds = array<i64: 8, 1>}, {transform_indices = @transform_11, window_bounds = array<i64: 1, 3, 128, 256>}, {transform_indices = @transform_12, window_bounds = array<i64: 1, 3, 1, 256>}, {transform_indices = @transform_13, window_bounds = array<i64: 1, 3, 1, 128>}, {transform_indices = @transform_14, window_bounds = array<i64: 1, 3, 1, 128>}, {transform_indices = @transform_15, window_bounds = array<i64: 1, 128, 128>}, {transform_indices = @transform_16, window_bounds = array<i64: 1, 1, 128>}, {pipeline_mode = #tpu.pipeline_mode<synchronous>, transform_indices = @transform_17, window_bounds = array<i64: 64, 128>}, {pipeline_mode = #tpu.pipeline_mode<synchronous>, transform_indices = @transform_18, window_bounds = array<i64: 8, 128>}]} {
    %c0_i32 = arith.constant 0 : i32
    %0 = arith.cmpi eq, %arg0, %c0_i32 : i32
    %1 = arith.extui %0 : i1 to i32
    %c0_i32_0 = arith.constant 0 : i32
    %2 = arith.cmpi ne, %1, %c0_i32_0 : i32
    scf.if %2 {
      %c0_110 = arith.constant 0 : index
      %c0_111 = arith.constant 0 : index
      %205 = vector.load %arg1[%c0_110, %c0_111] : memref<64x128xf32, #tpu.memory_space<vmem>>, vector<64x128xf32>
      %c0_112 = arith.constant 0 : index
      %c0_113 = arith.constant 0 : index
      %206 = vector.load %arg18[%c0_112, %c0_113] : memref<64x128xf32, #tpu.memory_space<vmem>>, vector<64x128xf32>
      tpu.vector_store %arg18[%c0_112, %c0_113], %205 {strides = array<i32>} : memref<64x128xf32, #tpu.memory_space<vmem>>, vector<64x128xf32>,
      %c0_114 = arith.constant 0 : index
      %c0_115 = arith.constant 0 : index
      %207 = vector.load %arg2[%c0_114, %c0_115] : memref<8x128xf32, #tpu.memory_space<vmem>>, vector<8x128xf32>
      %c0_116 = arith.constant 0 : index
      %c0_117 = arith.constant 0 : index
      %208 = vector.load %arg19[%c0_116, %c0_117] : memref<8x128xf32, #tpu.memory_space<vmem>>, vector<8x128xf32>
      tpu.vector_store %arg19[%c0_116, %c0_117], %207 {strides = array<i32>} : memref<8x128xf32, #tpu.memory_space<vmem>>, vector<8x128xf32>,
    } else {
    }
    %c0 = arith.constant 0 : index
    %c0_1 = arith.constant 0 : index
    %3 = vector.load %arg18[%c0, %c0_1] : memref<64x128xf32, #tpu.memory_space<vmem>>, vector<64x128xf32>
    %c0_2 = arith.constant 0 : index
    %c0_3 = arith.constant 0 : index
    %4 = vector.load %arg19[%c0_2, %c0_3] : memref<8x128xf32, #tpu.memory_space<vmem>>, vector<8x128xf32>
    %5 = arith.truncf %3 : vector<64x128xf32> to vector<64x128xbf16>
    %6 = arith.truncf %4 : vector<8x128xf32> to vector<8x128xbf16>
    %c0_4 = arith.constant 0 : index
    %c0_5 = arith.constant 0 : index
    %7 = vector.load %arg3[%c0_4, %c0_5] : memref<128x64xbf16, #tpu.memory_space<vmem>>, vector<128x64xbf16>
    %cst = arith.constant dense<0.000000e+00> : vector<128x128xf32>
    %8 = tpu.matmul %7, %5, %cst {dimension_numbers = #tpu.dot_dimension_numbers<[1], [0], [0], [1], [0, 0, 1, 1], [], []>} : vector<128x64xbf16>, vector<64x128xbf16>, vector<128x128xf32> -> vector<128x128xf32>
    %c0_6 = arith.constant 0 : index
    %c0_7 = arith.constant 0 : index
    %9 = vector.load %arg4[%c0_6, %c0_7] : memref<128x64xbf16, #tpu.memory_space<vmem>>, vector<128x64xbf16>
    %cst_8 = arith.constant dense<0.000000e+00> : vector<128x128xf32>
    %10 = tpu.matmul %9, %5, %cst_8 {dimension_numbers = #tpu.dot_dimension_numbers<[1], [0], [0], [1], [0, 0, 1, 1], [], []>} : vector<128x64xbf16>, vector<64x128xbf16>, vector<128x128xf32> -> vector<128x128xf32>
    %c0_9 = arith.constant 0 : index
    %c0_10 = arith.constant 0 : index
    %11 = vector.load %arg5[%c0_9, %c0_10] : memref<128x8xbf16, #tpu.memory_space<vmem>>, vector<128x8xbf16>
    %cst_11 = arith.constant dense<0.000000e+00> : vector<128x128xf32>
    %12 = tpu.matmul %11, %6, %cst_11 {dimension_numbers = #tpu.dot_dimension_numbers<[1], [0], [0], [1], [0, 0, 1, 1], [], []>} : vector<128x8xbf16>, vector<8x128xbf16>, vector<128x128xf32> -> vector<128x128xf32>
    %13 = arith.mulf %8, %12 : vector<128x128xf32>
    %c0_12 = arith.constant 0 : index
    %c0_13 = arith.constant 0 : index
    %14 = vector.load %arg8[%c0_12, %c0_13] : memref<128x1xf32, #tpu.memory_space<vmem>>, vector<128x1xf32>
    %c0_14 = arith.constant 0 : index
    %c0_15 = arith.constant 0 : index
    %15 = vector.load %arg9[%c0_14, %c0_15] : memref<128x1xf32, #tpu.memory_space<vmem>>, vector<128x1xf32>
    %16 = arith.mulf %12, %10 : vector<128x128xf32>
    %cst_16 = arith.constant dense<0.000000e+00> : vector<128xf32>
    %17 = vector.multi_reduction <add>, %16, %cst_16 [1] : vector<128x128xf32> to vector<128xf32>
    %18 = vector.shape_cast %17 : vector<128xf32> to vector<128x1xf32>
    %19 = vector.shape_cast %18 : vector<128x1xf32> to vector<1x128x1xf32>
    %cst_17 = arith.constant dense<0xFF800000> : vector<1xf32>
    %20 = vector.multi_reduction <maximumf>, %19, %cst_17 [1, 2] : vector<1x128x1xf32> to vector<1xf32>
    %21 = vector.shape_cast %20 : vector<1xf32> to vector<1x1x1xf32>
    %22 = vector.extract %21[0, 0, 0] : f32 from vector<1x1x1xf32>
    %23 = vector.broadcast %22 : f32 to vector<128x1xf32>
    %24 = arith.subf %18, %23 : vector<128x1xf32>
    %25 = math.exp %24 : vector<128x1xf32>
    %26 = arith.mulf %8, %10 : vector<128x128xf32>
    %cst_18 = arith.constant dense<0.000000e+00> : vector<128xf32>
    %27 = vector.multi_reduction <add>, %26, %cst_18 [1] : vector<128x128xf32> to vector<128xf32>
    %28 = vector.shape_cast %27 : vector<128xf32> to vector<128x1xf32>
    %29 = vector.shape_cast %28 : vector<128x1xf32> to vector<1x128x1xf32>
    %cst_19 = arith.constant dense<0xFF800000> : vector<1xf32>
    %30 = vector.multi_reduction <maximumf>, %29, %cst_19 [1, 2] : vector<1x128x1xf32> to vector<1xf32>
    %31 = vector.shape_cast %30 : vector<1xf32> to vector<1x1x1xf32>
    %32 = vector.extract %31[0, 0, 0] : f32 from vector<1x1x1xf32>
    %33 = vector.broadcast %32 : f32 to vector<128x1xf32>
    %34 = arith.subf %28, %33 : vector<128x1xf32>
    %35 = math.exp %34 : vector<128x1xf32>
    %36 = arith.mulf %13, %10 : vector<128x128xf32>
    %cst_20 = arith.constant dense<0.000000e+00> : vector<128xf32>
    %37 = vector.multi_reduction <add>, %36, %cst_20 [1] : vector<128x128xf32> to vector<128xf32>
    %38 = vector.shape_cast %37 : vector<128xf32> to vector<128x1xf32>
    %39 = vector.shape_cast %38 : vector<128x1xf32> to vector<1x128x1xf32>
    %cst_21 = arith.constant dense<0xFF800000> : vector<1xf32>
    %40 = vector.multi_reduction <maximumf>, %39, %cst_21 [1, 2] : vector<1x128x1xf32> to vector<1xf32>
    %41 = vector.shape_cast %40 : vector<1xf32> to vector<1x1x1xf32>
    %42 = vector.extract %41[0, 0, 0] : f32 from vector<1x1x1xf32>
    %43 = vector.broadcast %42 : f32 to vector<128x1xf32>
    %44 = arith.subf %38, %43 : vector<128x1xf32>
    %45 = math.exp %44 : vector<128x1xf32>
    %46 = arith.truncf %12 : vector<128x128xf32> to vector<128x128xbf16>
    %c0_22 = arith.constant 0 : index
    %c0_23 = arith.constant 0 : index
    %c0_24 = arith.constant 0 : index
    %c0_25 = arith.constant 0 : index
    %47 = vector.load %arg12[%c0_22, %c0_23, %c0_24, %c0_25] : memref<1x3x128x256xbf16, #tpu.memory_space<vmem>>, vector<1x1x128x256xbf16>
    %48 = vector.shape_cast %47 : vector<1x1x128x256xbf16> to vector<128x256xbf16>
    %cst_26 = arith.constant dense<0.000000e+00> : vector<128x256xf32>
    %49 = tpu.matmul %46, %48, %cst_26 {dimension_numbers = #tpu.dot_dimension_numbers<[1], [0], [0], [1], [0, 0, 1, 1], [], []>} : vector<128x128xbf16>, vector<128x256xbf16>, vector<128x256xf32> -> vector<128x256xf32>
    %c0_27 = arith.constant 0 : index
    %c0_28 = arith.constant 0 : index
    %c0_29 = arith.constant 0 : index
    %c0_30 = arith.constant 0 : index
    %50 = vector.load %arg13[%c0_27, %c0_28, %c0_29, %c0_30] : memref<1x3x1x256xf32, #tpu.memory_space<vmem>>, vector<1x1x1x256xf32>
    %51 = vector.shape_cast %50 : vector<1x1x1x256xf32> to vector<1x256xf32>
    %52 = vector.broadcast %51 : vector<1x256xf32> to vector<128x256xf32>
    %53 = arith.addf %49, %52 : vector<128x256xf32>
    %54 = vector.extract_strided_slice %53 {offsets = [0, 0], sizes = [128, 128], strides = [1, 1]} : vector<128x256xf32> to vector<128x128xf32>
    %55 = vector.broadcast %15 : vector<128x1xf32> to vector<128x128xf32>
    %56 = arith.mulf %55, %54 : vector<128x128xf32>
    %57 = vector.extract_strided_slice %53 {offsets = [0, 128], sizes = [128, 128], strides = [1, 1]} : vector<128x256xf32> to vector<128x128xf32>
    %58 = vector.broadcast %14 : vector<128x1xf32> to vector<128x128xf32>
    %59 = arith.mulf %58, %57 : vector<128x128xf32>
    %60 = arith.addf %56, %59 : vector<128x128xf32>
    %61 = arith.truncf %8 : vector<128x128xf32> to vector<128x128xbf16>
    %c0_31 = arith.constant 0 : index
    %c1 = arith.constant 1 : index
    %c0_32 = arith.constant 0 : index
    %c0_33 = arith.constant 0 : index
    %62 = vector.load %arg12[%c0_31, %c1, %c0_32, %c0_33] : memref<1x3x128x256xbf16, #tpu.memory_space<vmem>>, vector<1x1x128x256xbf16>
    %63 = vector.shape_cast %62 : vector<1x1x128x256xbf16> to vector<128x256xbf16>
    %cst_34 = arith.constant dense<0.000000e+00> : vector<128x256xf32>
    %64 = tpu.matmul %61, %63, %cst_34 {dimension_numbers = #tpu.dot_dimension_numbers<[1], [0], [0], [1], [0, 0, 1, 1], [], []>} : vector<128x128xbf16>, vector<128x256xbf16>, vector<128x256xf32> -> vector<128x256xf32>
    %c0_35 = arith.constant 0 : index
    %c1_36 = arith.constant 1 : index
    %c0_37 = arith.constant 0 : index
    %c0_38 = arith.constant 0 : index
    %65 = vector.load %arg13[%c0_35, %c1_36, %c0_37, %c0_38] : memref<1x3x1x256xf32, #tpu.memory_space<vmem>>, vector<1x1x1x256xf32>
    %66 = vector.shape_cast %65 : vector<1x1x1x256xf32> to vector<1x256xf32>
    %67 = vector.broadcast %66 : vector<1x256xf32> to vector<128x256xf32>
    %68 = arith.addf %64, %67 : vector<128x256xf32>
    %69 = vector.extract_strided_slice %68 {offsets = [0, 0], sizes = [128, 128], strides = [1, 1]} : vector<128x256xf32> to vector<128x128xf32>
    %70 = vector.broadcast %15 : vector<128x1xf32> to vector<128x128xf32>
    %71 = arith.mulf %70, %69 : vector<128x128xf32>
    %72 = vector.extract_strided_slice %68 {offsets = [0, 128], sizes = [128, 128], strides = [1, 1]} : vector<128x256xf32> to vector<128x128xf32>
    %73 = vector.broadcast %14 : vector<128x1xf32> to vector<128x128xf32>
    %74 = arith.mulf %73, %72 : vector<128x128xf32>
    %75 = arith.addf %71, %74 : vector<128x128xf32>
    %76 = arith.truncf %13 : vector<128x128xf32> to vector<128x128xbf16>
    %c0_39 = arith.constant 0 : index
    %c2 = arith.constant 2 : index
    %c0_40 = arith.constant 0 : index
    %c0_41 = arith.constant 0 : index
    %77 = vector.load %arg12[%c0_39, %c2, %c0_40, %c0_41] : memref<1x3x128x256xbf16, #tpu.memory_space<vmem>>, vector<1x1x128x256xbf16>
    %78 = vector.shape_cast %77 : vector<1x1x128x256xbf16> to vector<128x256xbf16>
    %cst_42 = arith.constant dense<0.000000e+00> : vector<128x256xf32>
    %79 = tpu.matmul %76, %78, %cst_42 {dimension_numbers = #tpu.dot_dimension_numbers<[1], [0], [0], [1], [0, 0, 1, 1], [], []>} : vector<128x128xbf16>, vector<128x256xbf16>, vector<128x256xf32> -> vector<128x256xf32>
    %c0_43 = arith.constant 0 : index
    %c2_44 = arith.constant 2 : index
    %c0_45 = arith.constant 0 : index
    %c0_46 = arith.constant 0 : index
    %80 = vector.load %arg13[%c0_43, %c2_44, %c0_45, %c0_46] : memref<1x3x1x256xf32, #tpu.memory_space<vmem>>, vector<1x1x1x256xf32>
    %81 = vector.shape_cast %80 : vector<1x1x1x256xf32> to vector<1x256xf32>
    %82 = vector.broadcast %81 : vector<1x256xf32> to vector<128x256xf32>
    %83 = arith.addf %79, %82 : vector<128x256xf32>
    %84 = vector.extract_strided_slice %83 {offsets = [0, 0], sizes = [128, 128], strides = [1, 1]} : vector<128x256xf32> to vector<128x128xf32>
    %85 = vector.broadcast %15 : vector<128x1xf32> to vector<128x128xf32>
    %86 = arith.mulf %85, %84 : vector<128x128xf32>
    %87 = vector.extract_strided_slice %83 {offsets = [0, 128], sizes = [128, 128], strides = [1, 1]} : vector<128x256xf32> to vector<128x128xf32>
    %88 = vector.broadcast %14 : vector<128x1xf32> to vector<128x128xf32>
    %89 = arith.mulf %88, %87 : vector<128x128xf32>
    %90 = arith.addf %86, %89 : vector<128x128xf32>
    %91 = vector.broadcast %25 : vector<128x1xf32> to vector<128x128xf32>
    %92 = arith.mulf %60, %91 : vector<128x128xf32>
    %93 = arith.truncf %92 : vector<128x128xf32> to vector<128x128xbf16>
    %c0_47 = arith.constant 0 : index
    %c0_48 = arith.constant 0 : index
    %94 = vector.load %arg20[%c0_47, %c0_48] : memref<128x512xbf16, #tpu.memory_space<vmem>>, vector<128x128xbf16>
    tpu.vector_store %arg20[%c0_47, %c0_48], %93 {strides = array<i32>} : memref<128x512xbf16, #tpu.memory_space<vmem>>, vector<128x128xbf16>,
    %95 = vector.broadcast %35 : vector<128x1xf32> to vector<128x128xf32>
    %96 = arith.mulf %75, %95 : vector<128x128xf32>
    %97 = arith.truncf %96 : vector<128x128xf32> to vector<128x128xbf16>
    %c0_49 = arith.constant 0 : index
    %c128 = arith.constant 128 : index
    %98 = vector.load %arg20[%c0_49, %c128] : memref<128x512xbf16, #tpu.memory_space<vmem>>, vector<128x128xbf16>
    tpu.vector_store %arg20[%c0_49, %c128], %97 {strides = array<i32>} : memref<128x512xbf16, #tpu.memory_space<vmem>>, vector<128x128xbf16>,
    %99 = vector.broadcast %45 : vector<128x1xf32> to vector<128x128xf32>
    %100 = arith.mulf %90, %99 : vector<128x128xf32>
    %101 = arith.truncf %100 : vector<128x128xf32> to vector<128x128xbf16>
    %c0_50 = arith.constant 0 : index
    %c256 = arith.constant 256 : index
    %102 = vector.load %arg20[%c0_50, %c256] : memref<128x512xbf16, #tpu.memory_space<vmem>>, vector<128x128xbf16>
    tpu.vector_store %arg20[%c0_50, %c256], %101 {strides = array<i32>} : memref<128x512xbf16, #tpu.memory_space<vmem>>, vector<128x128xbf16>,
    %103 = tpu.iota {dimensions = array<i32: 1>} : vector<128x128xi32>
    %c0_i32_51 = arith.constant 0 : i32
    %104 = vector.broadcast %c0_i32_51 : i32 to vector<128x128xi32>
    %105 = arith.cmpi eq, %103, %104 : vector<128x128xi32>
    %cst_52 = arith.constant 0.000000e+00 : f32
    %106 = vector.shape_cast %25 : vector<128x1xf32> to vector<128x1xf32>
    %107 = vector.broadcast %106 : vector<128x1xf32> to vector<128x128xf32>
    %108 = vector.broadcast %cst_52 : f32 to vector<128x128xf32>
    %109 = arith.select %105, %107, %108 : vector<128x128xi1>, vector<128x128xf32>
    %c1_i32 = arith.constant 1 : i32
    %110 = vector.broadcast %c1_i32 : i32 to vector<128x128xi32>
    %111 = arith.cmpi eq, %103, %110 : vector<128x128xi32>
    %112 = vector.shape_cast %35 : vector<128x1xf32> to vector<128x1xf32>
    %113 = vector.broadcast %112 : vector<128x1xf32> to vector<128x128xf32>
    %114 = arith.select %111, %113, %109 : vector<128x128xi1>, vector<128x128xf32>
    %c2_i32 = arith.constant 2 : i32
    %115 = vector.broadcast %c2_i32 : i32 to vector<128x128xi32>
    %116 = arith.cmpi eq, %103, %115 : vector<128x128xi32>
    %117 = vector.shape_cast %45 : vector<128x1xf32> to vector<128x1xf32>
    %118 = vector.broadcast %117 : vector<128x1xf32> to vector<128x128xf32>
    %119 = arith.select %116, %118, %114 : vector<128x128xi1>, vector<128x128xf32>
    %120 = arith.truncf %119 : vector<128x128xf32> to vector<128x128xbf16>
    %c0_53 = arith.constant 0 : index
    %c384 = arith.constant 384 : index
    %121 = vector.load %arg20[%c0_53, %c384] : memref<128x512xbf16, #tpu.memory_space<vmem>>, vector<128x128xbf16>
    tpu.vector_store %arg20[%c0_53, %c384], %120 {strides = array<i32>} : memref<128x512xbf16, #tpu.memory_space<vmem>>, vector<128x128xbf16>,
    %c0_54 = arith.constant 0 : index
    %c0_55 = arith.constant 0 : index
    %122 = vector.load %arg7[%c0_54, %c0_55] : memref<64x128xbf16, #tpu.memory_space<vmem>>, vector<64x128xbf16>
    %c0_56 = arith.constant 0 : index
    %c0_57 = arith.constant 0 : index
    %123 = vector.load %arg20[%c0_56, %c0_57] : memref<128x512xbf16, #tpu.memory_space<vmem>>, vector<128x512xbf16>
    %cst_58 = arith.constant dense<0.000000e+00> : vector<64x512xf32>
    %124 = tpu.matmul %122, %123, %cst_58 {dimension_numbers = #tpu.dot_dimension_numbers<[1], [0], [0], [1], [0, 0, 1, 1], [], []>} : vector<64x128xbf16>, vector<128x512xbf16>, vector<64x512xf32> -> vector<64x512xf32>
    %125 = vector.extract_strided_slice %124 {offsets = [0, 384], sizes = [64, 1], strides = [1, 1]} : vector<64x512xf32> to vector<64x1xf32>
    %cst_59 = arith.constant 0.000000e+00 : f32
    %126 = vector.broadcast %cst_59 : f32 to vector<64x1xf32>
    %127 = arith.cmpf ogt, %125, %126 : vector<64x1xf32>
    %cst_60 = arith.constant 1.000000e+00 : f32
    %128 = vector.broadcast %cst_60 : f32 to vector<64x1xf32>
    %129 = arith.divf %128, %125 : vector<64x1xf32>
    %cst_61 = arith.constant 0.000000e+00 : f32
    %130 = vector.broadcast %cst_61 : f32 to vector<64x1xf32>
    %131 = arith.select %127, %129, %130 : vector<64x1xi1>, vector<64x1xf32>
    %132 = vector.extract_strided_slice %124 {offsets = [0, 0], sizes = [64, 128], strides = [1, 1]} : vector<64x512xf32> to vector<64x128xf32>
    %133 = vector.broadcast %131 : vector<64x1xf32> to vector<64x128xf32>
    %134 = arith.mulf %132, %133 : vector<64x128xf32>
    %c0_62 = arith.constant 0 : index
    %c0_63 = arith.constant 0 : index
    %c0_64 = arith.constant 0 : index
    %c0_65 = arith.constant 0 : index
    %135 = vector.load %arg14[%c0_62, %c0_63, %c0_64, %c0_65] : memref<1x3x1x128xf32, #tpu.memory_space<vmem>>, vector<1x1x1x128xf32>
    %136 = vector.shape_cast %135 : vector<1x1x1x128xf32> to vector<1x128xf32>
    %137 = vector.broadcast %136 : vector<1x128xf32> to vector<64x128xf32>
    %138 = arith.mulf %134, %137 : vector<64x128xf32>
    %c0_66 = arith.constant 0 : index
    %c0_67 = arith.constant 0 : index
    %c0_68 = arith.constant 0 : index
    %c0_69 = arith.constant 0 : index
    %139 = vector.load %arg15[%c0_66, %c0_67, %c0_68, %c0_69] : memref<1x3x1x128xf32, #tpu.memory_space<vmem>>, vector<1x1x1x128xf32>
    %140 = vector.shape_cast %139 : vector<1x1x1x128xf32> to vector<1x128xf32>
    %141 = vector.broadcast %140 : vector<1x128xf32> to vector<64x128xf32>
    %142 = arith.addf %138, %141 : vector<64x128xf32>
    %143 = math.tanh %142 : vector<64x128xf32>
    %144 = vector.extract_strided_slice %124 {offsets = [0, 385], sizes = [64, 1], strides = [1, 1]} : vector<64x512xf32> to vector<64x1xf32>
    %cst_70 = arith.constant 0.000000e+00 : f32
    %145 = vector.broadcast %cst_70 : f32 to vector<64x1xf32>
    %146 = arith.cmpf ogt, %144, %145 : vector<64x1xf32>
    %cst_71 = arith.constant 1.000000e+00 : f32
    %147 = vector.broadcast %cst_71 : f32 to vector<64x1xf32>
    %148 = arith.divf %147, %144 : vector<64x1xf32>
    %cst_72 = arith.constant 0.000000e+00 : f32
    %149 = vector.broadcast %cst_72 : f32 to vector<64x1xf32>
    %150 = arith.select %146, %148, %149 : vector<64x1xi1>, vector<64x1xf32>
    %151 = vector.extract_strided_slice %124 {offsets = [0, 128], sizes = [64, 128], strides = [1, 1]} : vector<64x512xf32> to vector<64x128xf32>
    %152 = vector.broadcast %150 : vector<64x1xf32> to vector<64x128xf32>
    %153 = arith.mulf %151, %152 : vector<64x128xf32>
    %c0_73 = arith.constant 0 : index
    %c1_74 = arith.constant 1 : index
    %c0_75 = arith.constant 0 : index
    %c0_76 = arith.constant 0 : index
    %154 = vector.load %arg14[%c0_73, %c1_74, %c0_75, %c0_76] : memref<1x3x1x128xf32, #tpu.memory_space<vmem>>, vector<1x1x1x128xf32>
    %155 = vector.shape_cast %154 : vector<1x1x1x128xf32> to vector<1x128xf32>
    %156 = vector.broadcast %155 : vector<1x128xf32> to vector<64x128xf32>
    %157 = arith.mulf %153, %156 : vector<64x128xf32>
    %c0_77 = arith.constant 0 : index
    %c1_78 = arith.constant 1 : index
    %c0_79 = arith.constant 0 : index
    %c0_80 = arith.constant 0 : index
    %158 = vector.load %arg15[%c0_77, %c1_78, %c0_79, %c0_80] : memref<1x3x1x128xf32, #tpu.memory_space<vmem>>, vector<1x1x1x128xf32>
    %159 = vector.shape_cast %158 : vector<1x1x1x128xf32> to vector<1x128xf32>
    %160 = vector.broadcast %159 : vector<1x128xf32> to vector<64x128xf32>
    %161 = arith.addf %157, %160 : vector<64x128xf32>
    %162 = math.tanh %161 : vector<64x128xf32>
    %163 = vector.extract_strided_slice %124 {offsets = [0, 386], sizes = [64, 1], strides = [1, 1]} : vector<64x512xf32> to vector<64x1xf32>
    %cst_81 = arith.constant 0.000000e+00 : f32
    %164 = vector.broadcast %cst_81 : f32 to vector<64x1xf32>
    %165 = arith.cmpf ogt, %163, %164 : vector<64x1xf32>
    %cst_82 = arith.constant 1.000000e+00 : f32
    %166 = vector.broadcast %cst_82 : f32 to vector<64x1xf32>
    %167 = arith.divf %166, %163 : vector<64x1xf32>
    %cst_83 = arith.constant 0.000000e+00 : f32
    %168 = vector.broadcast %cst_83 : f32 to vector<64x1xf32>
    %169 = arith.select %165, %167, %168 : vector<64x1xi1>, vector<64x1xf32>
    %170 = vector.extract_strided_slice %124 {offsets = [0, 256], sizes = [64, 128], strides = [1, 1]} : vector<64x512xf32> to vector<64x128xf32>
    %171 = vector.broadcast %169 : vector<64x1xf32> to vector<64x128xf32>
    %172 = arith.mulf %170, %171 : vector<64x128xf32>
    %c0_84 = arith.constant 0 : index
    %c2_85 = arith.constant 2 : index
    %c0_86 = arith.constant 0 : index
    %c0_87 = arith.constant 0 : index
    %173 = vector.load %arg14[%c0_84, %c2_85, %c0_86, %c0_87] : memref<1x3x1x128xf32, #tpu.memory_space<vmem>>, vector<1x1x1x128xf32>
    %174 = vector.shape_cast %173 : vector<1x1x1x128xf32> to vector<1x128xf32>
    %175 = vector.broadcast %174 : vector<1x128xf32> to vector<64x128xf32>
    %176 = arith.mulf %172, %175 : vector<64x128xf32>
    %c0_88 = arith.constant 0 : index
    %c2_89 = arith.constant 2 : index
    %c0_90 = arith.constant 0 : index
    %c0_91 = arith.constant 0 : index
    %177 = vector.load %arg15[%c0_88, %c2_89, %c0_90, %c0_91] : memref<1x3x1x128xf32, #tpu.memory_space<vmem>>, vector<1x1x1x128xf32>
    %178 = vector.shape_cast %177 : vector<1x1x1x128xf32> to vector<1x128xf32>
    %179 = vector.broadcast %178 : vector<1x128xf32> to vector<64x128xf32>
    %180 = arith.addf %176, %179 : vector<64x128xf32>
    %181 = math.tanh %180 : vector<64x128xf32>
    %182 = arith.addf %181, %3 : vector<64x128xf32>
    %183 = arith.addf %182, %143 : vector<64x128xf32>
    %184 = arith.addf %183, %162 : vector<64x128xf32>
    %c0_92 = arith.constant 0 : index
    %c0_93 = arith.constant 0 : index
    %185 = vector.load %arg18[%c0_92, %c0_93] : memref<64x128xf32, #tpu.memory_space<vmem>>, vector<64x128xf32>
    tpu.vector_store %arg18[%c0_92, %c0_93], %184 {strides = array<i32>} : memref<64x128xf32, #tpu.memory_space<vmem>>, vector<64x128xf32>,
    %c0_94 = arith.constant 0 : index
    %c0_95 = arith.constant 0 : index
    %186 = vector.load %arg6[%c0_94, %c0_95] : memref<8x64xbf16, #tpu.memory_space<vmem>>, vector<8x64xbf16>
    %cst_96 = arith.constant dense<0.000000e+00> : vector<8x128xf32>
    %187 = tpu.matmul %186, %5, %cst_96 {dimension_numbers = #tpu.dot_dimension_numbers<[1], [0], [0], [1], [0, 0, 1, 1], [], []>} : vector<8x64xbf16>, vector<64x128xbf16>, vector<8x128xf32> -> vector<8x128xf32>
    %c0_97 = arith.constant 0 : index
    %c0_98 = arith.constant 0 : index
    %188 = vector.load %arg10[%c0_97, %c0_98] : memref<8x1xf32, #tpu.memory_space<vmem>>, vector<8x1xf32>
    %189 = vector.broadcast %188 : vector<8x1xf32> to vector<8x128xf32>
    %190 = arith.mulf %187, %189 : vector<8x128xf32>
    %191 = arith.truncf %190 : vector<8x128xf32> to vector<8x128xbf16>
    %c0_99 = arith.constant 0 : index
    %c0_100 = arith.constant 0 : index
    %c0_101 = arith.constant 0 : index
    %192 = vector.load %arg16[%c0_99, %c0_100, %c0_101] : memref<1x128x128xbf16, #tpu.memory_space<vmem>>, vector<1x128x128xbf16>
    %193 = vector.shape_cast %192 : vector<1x128x128xbf16> to vector<128x128xbf16>
    %cst_102 = arith.constant dense<0.000000e+00> : vector<8x128xf32>
    %194 = tpu.matmul %191, %193, %cst_102 {dimension_numbers = #tpu.dot_dimension_numbers<[1], [0], [0], [1], [0, 0, 1, 1], [], []>} : vector<8x128xbf16>, vector<128x128xbf16>, vector<8x128xf32> -> vector<8x128xf32>
    %c0_103 = arith.constant 0 : index
    %c0_104 = arith.constant 0 : index
    %c0_105 = arith.constant 0 : index
    %195 = vector.load %arg17[%c0_103, %c0_104, %c0_105] : memref<1x1x128xf32, #tpu.memory_space<vmem>>, vector<1x1x128xf32>
    %196 = vector.shape_cast %195 : vector<1x1x128xf32> to vector<1x128xf32>
    %197 = vector.broadcast %196 : vector<1x128xf32> to vector<8x128xf32>
    %198 = arith.addf %194, %197 : vector<8x128xf32>
    %c0_106 = arith.constant 0 : index
    %c0_107 = arith.constant 0 : index
    %199 = vector.load %arg11[%c0_106, %c0_107] : memref<8x1xf32, #tpu.memory_space<vmem>>, vector<8x1xf32>
    %200 = vector.broadcast %199 : vector<8x1xf32> to vector<8x128xf32>
    %201 = arith.mulf %198, %200 : vector<8x128xf32>
    %202 = math.tanh %201 : vector<8x128xf32>
    %203 = arith.addf %4, %202 : vector<8x128xf32>
    %c0_108 = arith.constant 0 : index
    %c0_109 = arith.constant 0 : index
    %204 = vector.load %arg19[%c0_108, %c0_109] : memref<8x128xf32, #tpu.memory_space<vmem>>, vector<8x128xf32>
    tpu.vector_store %arg19[%c0_108, %c0_109], %203 {strides = array<i32>} : memref<8x128xf32, #tpu.memory_space<vmem>>, vector<8x128xf32>,
    return
  }
  func.func @transform_0(%arg0: i32) -> (i32, i32) {
    %c0_i32 = arith.constant 0 : i32
    %c0_i32_0 = arith.constant 0 : i32
    %c0_i32_1 = arith.constant 0 : i32
    return %c0_i32, %c0_i32_0 : i32, i32
  }
  func.func @transform_1(%arg0: i32) -> (i32, i32) {
    %c0_i32 = arith.constant 0 : i32
    %c0_i32_0 = arith.constant 0 : i32
    %c0_i32_1 = arith.constant 0 : i32
    return %c0_i32, %c0_i32_0 : i32, i32
  }
  func.func @transform_2(%arg0: i32) -> (i32, i32) {
    %c0_i32 = arith.constant 0 : i32
    %c0_i32_0 = arith.constant 0 : i32
    %c0_i32_1 = arith.constant 0 : i32
    return %c0_i32, %c0_i32_0 : i32, i32
  }
  func.func @transform_3(%arg0: i32) -> (i32, i32) {
    %c0_i32 = arith.constant 0 : i32
    %c0_i32_0 = arith.constant 0 : i32
    %c0_i32_1 = arith.constant 0 : i32
    return %c0_i32, %c0_i32_0 : i32, i32
  }
  func.func @transform_4(%arg0: i32) -> (i32, i32) {
    %c0_i32 = arith.constant 0 : i32
    %c0_i32_0 = arith.constant 0 : i32
    %c0_i32_1 = arith.constant 0 : i32
    return %c0_i32, %c0_i32_0 : i32, i32
  }
  func.func @transform_5(%arg0: i32) -> (i32, i32) {
    %c0_i32 = arith.constant 0 : i32
    %c0_i32_0 = arith.constant 0 : i32
    %c0_i32_1 = arith.constant 0 : i32
    return %c0_i32, %c0_i32_0 : i32, i32
  }
  func.func @transform_6(%arg0: i32) -> (i32, i32) {
    %c0_i32 = arith.constant 0 : i32
    %c0_i32_0 = arith.constant 0 : i32
    %c0_i32_1 = arith.constant 0 : i32
    return %c0_i32, %c0_i32_0 : i32, i32
  }
  func.func @transform_7(%arg0: i32) -> (i32, i32) {
    %c0_i32 = arith.constant 0 : i32
    %c0_i32_0 = arith.constant 0 : i32
    %c0_i32_1 = arith.constant 0 : i32
    return %c0_i32, %c0_i32_0 : i32, i32
  }
  func.func @transform_8(%arg0: i32) -> (i32, i32) {
    %c0_i32 = arith.constant 0 : i32
    %c0_i32_0 = arith.constant 0 : i32
    %c0_i32_1 = arith.constant 0 : i32
    return %c0_i32, %c0_i32_0 : i32, i32
  }
  func.func @transform_9(%arg0: i32) -> (i32, i32) {
    %c0_i32 = arith.constant 0 : i32
    %c0_i32_0 = arith.constant 0 : i32
    %c0_i32_1 = arith.constant 0 : i32
    return %c0_i32, %c0_i32_0 : i32, i32
  }
  func.func @transform_10(%arg0: i32) -> (i32, i32) {
    %c0_i32 = arith.constant 0 : i32
    %c0_i32_0 = arith.constant 0 : i32
    %c0_i32_1 = arith.constant 0 : i32
    return %c0_i32, %c0_i32_0 : i32, i32
  }
  func.func @transform_11(%arg0: i32) -> (i32, i32, i32, i32) {
    %c0_i32 = arith.constant 0 : i32
    %c0_i32_0 = arith.constant 0 : i32
    %c0_i32_1 = arith.constant 0 : i32
    %c0_i32_2 = arith.constant 0 : i32
    return %arg0, %c0_i32, %c0_i32_0, %c0_i32_1 : i32, i32, i32, i32
  }
  func.func @transform_12(%arg0: i32) -> (i32, i32, i32, i32) {
    %c0_i32 = arith.constant 0 : i32
    %c0_i32_0 = arith.constant 0 : i32
    %c0_i32_1 = arith.constant 0 : i32
    %c0_i32_2 = arith.constant 0 : i32
    return %arg0, %c0_i32, %c0_i32_0, %c0_i32_1 : i32, i32, i32, i32
  }
  func.func @transform_13(%arg0: i32) -> (i32, i32, i32, i32) {
    %c0_i32 = arith.constant 0 : i32
    %c0_i32_0 = arith.constant 0 : i32
    %c0_i32_1 = arith.constant 0 : i32
    %c0_i32_2 = arith.constant 0 : i32
    return %arg0, %c0_i32, %c0_i32_0, %c0_i32_1 : i32, i32, i32, i32
  }
  func.func @transform_14(%arg0: i32) -> (i32, i32, i32, i32) {
    %c0_i32 = arith.constant 0 : i32
    %c0_i32_0 = arith.constant 0 : i32
    %c0_i32_1 = arith.constant 0 : i32
    %c0_i32_2 = arith.constant 0 : i32
    return %arg0, %c0_i32, %c0_i32_0, %c0_i32_1 : i32, i32, i32, i32
  }
  func.func @transform_15(%arg0: i32) -> (i32, i32, i32) {
    %c0_i32 = arith.constant 0 : i32
    %c0_i32_0 = arith.constant 0 : i32
    %c0_i32_1 = arith.constant 0 : i32
    return %arg0, %c0_i32, %c0_i32_0 : i32, i32, i32
  }
  func.func @transform_16(%arg0: i32) -> (i32, i32, i32) {
    %c0_i32 = arith.constant 0 : i32
    %c0_i32_0 = arith.constant 0 : i32
    %c0_i32_1 = arith.constant 0 : i32
    return %arg0, %c0_i32, %c0_i32_0 : i32, i32, i32
  }
  func.func @transform_17(%arg0: i32) -> (i32, i32) {
    %c0_i32 = arith.constant 0 : i32
    %c0_i32_0 = arith.constant 0 : i32
    %c0_i32_1 = arith.constant 0 : i32
    return %c0_i32, %c0_i32_0 : i32, i32
  }
  func.func @transform_18(%arg0: i32) -> (i32, i32) {
    %c0_i32 = arith.constant 0 : i32
    %c0_i32_0 = arith.constant 0 : i32
    %c0_i32_1 = arith.constant 0 : i32
    return %c0_i32, %c0_i32_0 : i32, i32
  }
}

</mosaic_0001>

<llo_original>
// kernel: tpu_custom_call.1
$region0: #{tpu_custom_call.1}
  #allocation0 [shape = 'u32[]', space=smem, size = 0x4, offset = 0x4, fixed_abs, tag = 'smem constant byte address 0x4 - core index']
  #allocation1 [shape = 'u32[72,128]{1,0:T(1,128)}', space=vmem, size = 0x9000, scoped, tag = 'internal scratch']
  #allocation2 [shape = 'bf16[128,512]{1,0:T(8,128)(2,1)}', space=vmem, size = 0x20000, scoped, tag = 'scratch operand']
  %s0 = inlined_call_operand.vmem [shape: f32[64,128], index: 0, kind: input, shape index: {}]
  %s1 = inlined_call_operand.vmem [shape: f32[8,128], index: 1, kind: input, shape index: {}]
  %s2 = inlined_call_operand.vmem [shape: bf16[128,64], index: 2, kind: input, shape index: {}]
  %s3 = inlined_call_operand.vmem [shape: bf16[128,64], index: 3, kind: input, shape index: {}]
  %s4 = inlined_call_operand.vmem [shape: bf16[128,8], index: 4, kind: input, shape index: {}]
  %s5 = inlined_call_operand.vmem [shape: bf16[8,64], index: 5, kind: input, shape index: {}]
  %s6 = inlined_call_operand.vmem [shape: bf16[64,128], index: 6, kind: input, shape index: {}]
  %s7 = inlined_call_operand.vmem [shape: f32[128,1], index: 7, kind: input, shape index: {}]
  %s8 = inlined_call_operand.vmem [shape: f32[128,1], index: 8, kind: input, shape index: {}]
  %s9 = inlined_call_operand.vmem [shape: f32[8,1], index: 9, kind: input, shape index: {}]
  %s10 = inlined_call_operand.vmem [shape: f32[8,1], index: 10, kind: input, shape index: {}]
  %s11 = inlined_call_operand.hbm [shape: bf16[2,3,128,256], index: 11, kind: input, shape index: {}]
  %s12 = inlined_call_operand.vmem [shape: f32[2,3,1,256], index: 12, kind: input, shape index: {}]
  %s13 = inlined_call_operand.vmem [shape: f32[2,3,1,128], index: 13, kind: input, shape index: {}]
  %s14 = inlined_call_operand.vmem [shape: f32[2,3,1,128], index: 14, kind: input, shape index: {}]
  %s15 = inlined_call_operand.vmem [shape: bf16[2,128,128], index: 15, kind: input, shape index: {}]
  %s16 = inlined_call_operand.vmem [shape: f32[2,1,128], index: 16, kind: input, shape index: {}]
  %s17 = inlined_call_operand.hbm [shape: f32[64,128], index: 17, kind: output, shape index: {0}]
  %s18 = inlined_call_operand.hbm [shape: f32[8,128], index: 18, kind: output, shape index: {1}]
  %19 = xla_tuple %s17, %s18
  %s20 = sld [smem:[#allocation0]]
  $region117: #{tpu_custom_call.1} parent=0
    _
  %s22 = ssub.s32 1, %s20
  %s23 = scalar_select 0, %s22, %s20
  $region1: #{tpu_custom_call.1} parent=0
    #allocation3 [shape = 'u8[393216]{0}', space=vmem, size = 0x60000, scoped, tag = 'input window, operand 11']
    #allocation4 [shape = 's32[2]{0}', space=sflag, size = 0x8, scoped, tag = 'scoped memory for tpu_custom_call.1']
    #allocation5 [shape = 's32[2]{0}', space=sflag, size = 0x8, scoped, tag = 'scoped memory for tpu_custom_call.1']
    #allocation6 [shape = 'u8[32768]{0}', space=vmem, size = 0x8000, scoped, tag = 'output window, operand 0, single buffered']
    #allocation7 [shape = 'u8[4096]{0}', space=vmem, size = 0x1000, scoped, tag = 'output window, operand 1, single buffered']
    #allocation8 [shape = 's32[1]{0}', space=sflag, size = 0x4, scoped, tag = 'scoped memory for tpu_custom_call.1']
    %24 = vsyncpa [#allocation4], 0
    %s25 = scalar_lea.sflag [#allocation4], 1
    %26 = vsyncpa %s25, 0
    %27 = vsyncpa [#allocation5], 0
    %28 = vsyncpa [#allocation8], 0
    loop: start=0, step=1, limit=4
    $region2: #{tpu_custom_call.1} parent=1 // loop_pre_header
      _
    $region3: #{tpu_custom_call.1} parent=1 // loop_header
      %s30 = sphi 0, %s34
      %p31 = scmp.ge.s32.totalorder %s30, 4
      %s38 = sphi 0, %s38
      %s40 = sphi 0, %s38
      %s41 = sphi 0, %s40
      %s55 = sphi 0, %s41
      %s59 = sphi 0, %s59
      %s61 = sphi 0, %s59
      %s62 = sphi 0, %s61
      %s76 = sphi 0, %s62
      %s80 = sphi 0, %s80
      %s82 = sphi 0, %s80
      %s83 = sphi 0, %s82
      %s97 = sphi 0, %s83
      %s101 = sphi 0, %s101
      %s103 = sphi 0, %s101
      %s104 = sphi 0, %s103
      %s118 = sphi 0, %s104
      %s122 = sphi 0, %s122
      %s124 = sphi 0, %s122
      %s125 = sphi 0, %s124
      %s139 = sphi 0, %s125
      %s143 = sphi 0, %s143
      %s145 = sphi 0, %s143
      %s146 = sphi 0, %s145
      %s160 = sphi 0, %s146
      %s164 = sphi 0, %s164
      %s166 = sphi 0, %s164
      %s167 = sphi 0, %s166
      %s181 = sphi 0, %s167
      %s185 = sphi 0, %s185
      %s187 = sphi 0, %s185
      %s188 = sphi 0, %s187
      %s202 = sphi 0, %s188
      %s206 = sphi 0, %s206
      %s208 = sphi 0, %s206
      %s209 = sphi 0, %s208
      %s223 = sphi 0, %s209
      %s227 = sphi 0, %s227
      %s229 = sphi 0, %s227
      %s230 = sphi 0, %s229
      %s244 = sphi 0, %s230
      %s248 = sphi 0, %s248
      %s250 = sphi 0, %s248
      %s251 = sphi 0, %s250
      %s265 = sphi 0, %s251
      %s271 = sphi 0, %s273
      %s274 = sphi 0, %s271
      %s275 = sphi 0, %s274
      %s291 = sphi 0, %s275
      %s297 = sphi 0, %s299
      %s300 = sphi 0, %s297
      %s301 = sphi 0, %s300
      %s317 = sphi 0, %s301
      %s323 = sphi 0, %s325
      %s326 = sphi 0, %s323
      %s327 = sphi 0, %s326
      %s343 = sphi 0, %s327
      %s349 = sphi 0, %s351
      %s352 = sphi 0, %s349
      %s353 = sphi 0, %s352
      %s369 = sphi 0, %s353
      %s375 = sphi 0, %s377
      %s378 = sphi 0, %s375
      %s379 = sphi 0, %s378
      %s395 = sphi 0, %s379
      %s401 = sphi 0, %s403
      %s404 = sphi 0, %s401
      %s405 = sphi 0, %s404
      %s421 = sphi 0, %s405
      %s425 = sphi 0, %s425
      %s427 = sphi 0, %s425
      %s428 = sphi 0, %s427
      %s442 = sphi 0, %s428
      %s446 = sphi 0, %s446
      %s448 = sphi 0, %s446
      %s449 = sphi 0, %s448
      %s463 = sphi 0, %s449
    $region4: #{tpu_custom_call.1} parent=1 // loop_header_branch
      %33 = sbr.rel (%p31) target = $region8
    $region5: #{tpu_custom_call.1} parent=1 // loop_body
      %s35 = ssub.s32 %s30, 1
      %s36 = ssub.s32 %s30, 2
      %s37 = sadd.s32 %s30, 1
      %s39 = sadd.s32 %s38, 1
      %p42 = scmp.eq.s32.totalorder %s30, 1
      %p43 = scmp.ne.s32.totalorder %s38, %s40
      %p44 = scmp.eq.s32.totalorder %s30, 0
      %p45 = por %p43, %p44
      %p46 = scmp.ne.s32.totalorder %s38, %s40
      %p47 = scmp.eq.s32.totalorder %s35, 1
      %p48 = por %p46, %p47
      %p49 = scmp.ne.s32.totalorder %s40, %s41
      %p50 = scmp.eq.s32.totalorder %s35, 0
      %p51 = por %p49, %p50
      %p52 = scmp.ne.s32.totalorder %s40, %s41
      %p53 = scmp.eq.s32.totalorder %s36, 1
      %p54 = por %p52, %p53
      %p56 = scmp.ne.s32.totalorder %s41, %s55
      %p57 = scmp.eq.s32.totalorder %s36, 0
      %p58 = por %p56, %p57
      %s60 = sadd.s32 %s59, 1
      %p63 = scmp.eq.s32.totalorder %s30, 1
      %p64 = scmp.ne.s32.totalorder %s59, %s61
      %p65 = scmp.eq.s32.totalorder %s30, 0
      %p66 = por %p64, %p65
      %p67 = scmp.ne.s32.totalorder %s59, %s61
      %p68 = scmp.eq.s32.totalorder %s35, 1
      %p69 = por %p67, %p68
      %p70 = scmp.ne.s32.totalorder %s61, %s62
      %p71 = scmp.eq.s32.totalorder %s35, 0
      %p72 = por %p70, %p71
      %p73 = scmp.ne.s32.totalorder %s61, %s62
      %p74 = scmp.eq.s32.totalorder %s36, 1
      %p75 = por %p73, %p74
      %p77 = scmp.ne.s32.totalorder %s62, %s76
      %p78 = scmp.eq.s32.totalorder %s36, 0
      %p79 = por %p77, %p78
      %s81 = sadd.s32 %s80, 1
      %p84 = scmp.eq.s32.totalorder %s30, 1
      %p85 = scmp.ne.s32.totalorder %s80, %s82
      %p86 = scmp.eq.s32.totalorder %s30, 0
      %p87 = por %p85, %p86
      %p88 = scmp.ne.s32.totalorder %s80, %s82
      %p89 = scmp.eq.s32.totalorder %s35, 1
      %p90 = por %p88, %p89
      %p91 = scmp.ne.s32.totalorder %s82, %s83
      %p92 = scmp.eq.s32.totalorder %s35, 0
      %p93 = por %p91, %p92
      %p94 = scmp.ne.s32.totalorder %s82, %s83
      %p95 = scmp.eq.s32.totalorder %s36, 1
      %p96 = por %p94, %p95
      %p98 = scmp.ne.s32.totalorder %s83, %s97
      %p99 = scmp.eq.s32.totalorder %s36, 0
      %p100 = por %p98, %p99
      %s102 = sadd.s32 %s101, 1
      %p105 = scmp.eq.s32.totalorder %s30, 1
      %p106 = scmp.ne.s32.totalorder %s101, %s103
      %p107 = scmp.eq.s32.totalorder %s30, 0
      %p108 = por %p106, %p107
      %p109 = scmp.ne.s32.totalorder %s101, %s103
      %p110 = scmp.eq.s32.totalorder %s35, 1
      %p111 = por %p109, %p110
      %p112 = scmp.ne.s32.totalorder %s103, %s104
      %p113 = scmp.eq.s32.totalorder %s35, 0
      %p114 = por %p112, %p113
      %p115 = scmp.ne.s32.totalorder %s103, %s104
      %p116 = scmp.eq.s32.totalorder %s36, 1
      %p117 = por %p115, %p116
      %p119 = scmp.ne.s32.totalorder %s104, %s118
      %p120 = scmp.eq.s32.totalorder %s36, 0
      %p121 = por %p119, %p120
      %s123 = sadd.s32 %s122, 1
      %p126 = scmp.eq.s32.totalorder %s30, 1
      %p127 = scmp.ne.s32.totalorder %s122, %s124
      %p128 = scmp.eq.s32.totalorder %s30, 0
      %p129 = por %p127, %p128
      %p130 = scmp.ne.s32.totalorder %s122, %s124
      %p131 = scmp.eq.s32.totalorder %s35, 1
      %p132 = por %p130, %p131
      %p133 = scmp.ne.s32.totalorder %s124, %s125
      %p134 = scmp.eq.s32.totalorder %s35, 0
      %p135 = por %p133, %p134
      %p136 = scmp.ne.s32.totalorder %s124, %s125
      %p137 = scmp.eq.s32.totalorder %s36, 1
      %p138 = por %p136, %p137
      %p140 = scmp.ne.s32.totalorder %s125, %s139
      %p141 = scmp.eq.s32.totalorder %s36, 0
      %p142 = por %p140, %p141
      %s144 = sadd.s32 %s143, 1
      %p147 = scmp.eq.s32.totalorder %s30, 1
      %p148 = scmp.ne.s32.totalorder %s143, %s145
      %p149 = scmp.eq.s32.totalorder %s30, 0
      %p150 = por %p148, %p149
      %p151 = scmp.ne.s32.totalorder %s143, %s145
      %p152 = scmp.eq.s32.totalorder %s35, 1
      %p153 = por %p151, %p152
      %p154 = scmp.ne.s32.totalorder %s145, %s146
      %p155 = scmp.eq.s32.totalorder %s35, 0
      %p156 = por %p154, %p155
      %p157 = scmp.ne.s32.totalorder %s145, %s146
      %p158 = scmp.eq.s32.totalorder %s36, 1
      %p159 = por %p157, %p158
      %p161 = scmp.ne.s32.totalorder %s146, %s160
      %p162 = scmp.eq.s32.totalorder %s36, 0
      %p163 = por %p161, %p162
      %s165 = sadd.s32 %s164, 1
      %p168 = scmp.eq.s32.totalorder %s30, 1
      %p169 = scmp.ne.s32.totalorder %s164, %s166
      %p170 = scmp.eq.s32.totalorder %s30, 0
      %p171 = por %p169, %p170
      %p172 = scmp.ne.s32.totalorder %s164, %s166
      %p173 = scmp.eq.s32.totalorder %s35, 1
      %p174 = por %p172, %p173
      %p175 = scmp.ne.s32.totalorder %s166, %s167
      %p176 = scmp.eq.s32.totalorder %s35, 0
      %p177 = por %p175, %p176
      %p178 = scmp.ne.s32.totalorder %s166, %s167
      %p179 = scmp.eq.s32.totalorder %s36, 1
      %p180 = por %p178, %p179
      %p182 = scmp.ne.s32.totalorder %s167, %s181
      %p183 = scmp.eq.s32.totalorder %s36, 0
      %p184 = por %p182, %p183
      %s186 = sadd.s32 %s185, 1
      %p189 = scmp.eq.s32.totalorder %s30, 1
      %p190 = scmp.ne.s32.totalorder %s185, %s187
      %p191 = scmp.eq.s32.totalorder %s30, 0
      %p192 = por %p190, %p191
      %p193 = scmp.ne.s32.totalorder %s185, %s187
      %p194 = scmp.eq.s32.totalorder %s35, 1
      %p195 = por %p193, %p194
      %p196 = scmp.ne.s32.totalorder %s187, %s188
      %p197 = scmp.eq.s32.totalorder %s35, 0
      %p198 = por %p196, %p197
      %p199 = scmp.ne.s32.totalorder %s187, %s188
      %p200 = scmp.eq.s32.totalorder %s36, 1
      %p201 = por %p199, %p200
      %p203 = scmp.ne.s32.totalorder %s188, %s202
      %p204 = scmp.eq.s32.totalorder %s36, 0
      %p205 = por %p203, %p204
      %s207 = sadd.s32 %s206, 1
      %p210 = scmp.eq.s32.totalorder %s30, 1
      %p211 = scmp.ne.s32.totalorder %s206, %s208
      %p212 = scmp.eq.s32.totalorder %s30, 0
      %p213 = por %p211, %p212
      %p214 = scmp.ne.s32.totalorder %s206, %s208
      %p215 = scmp.eq.s32.totalorder %s35, 1
      %p216 = por %p214, %p215
      %p217 = scmp.ne.s32.totalorder %s208, %s209
      %p218 = scmp.eq.s32.totalorder %s35, 0
      %p219 = por %p217, %p218
      %p220 = scmp.ne.s32.totalorder %s208, %s209
      %p221 = scmp.eq.s32.totalorder %s36, 1
      %p222 = por %p220, %p221
      %p224 = scmp.ne.s32.totalorder %s209, %s223
      %p225 = scmp.eq.s32.totalorder %s36, 0
      %p226 = por %p224, %p225
      %s228 = sadd.s32 %s227, 1
      %p231 = scmp.eq.s32.totalorder %s30, 1
      %p232 = scmp.ne.s32.totalorder %s227, %s229
      %p233 = scmp.eq.s32.totalorder %s30, 0
      %p234 = por %p232, %p233
      %p235 = scmp.ne.s32.totalorder %s227, %s229
      %p236 = scmp.eq.s32.totalorder %s35, 1
      %p237 = por %p235, %p236
      %p238 = scmp.ne.s32.totalorder %s229, %s230
      %p239 = scmp.eq.s32.totalorder %s35, 0
      %p240 = por %p238, %p239
      %p241 = scmp.ne.s32.totalorder %s229, %s230
      %p242 = scmp.eq.s32.totalorder %s36, 1
      %p243 = por %p241, %p242
      %p245 = scmp.ne.s32.totalorder %s230, %s244
      %p246 = scmp.eq.s32.totalorder %s36, 0
      %p247 = por %p245, %p246
      %s249 = sadd.s32 %s248, 1
      %p252 = scmp.eq.s32.totalorder %s30, 1
      %p253 = scmp.ne.s32.totalorder %s248, %s250
      %p254 = scmp.eq.s32.totalorder %s30, 0
      %p255 = por %p253, %p254
      %p256 = scmp.ne.s32.totalorder %s248, %s250
      %p257 = scmp.eq.s32.totalorder %s35, 1
      %p258 = por %p256, %p257
      %p259 = scmp.ne.s32.totalorder %s250, %s251
      %p260 = scmp.eq.s32.totalorder %s35, 0
      %p261 = por %p259, %p260
      %p262 = scmp.ne.s32.totalorder %s250, %s251
      %p263 = scmp.eq.s32.totalorder %s36, 1
      %p264 = por %p262, %p263
      %p266 = scmp.ne.s32.totalorder %s251, %s265
      %p267 = scmp.eq.s32.totalorder %s36, 0
      %p268 = por %p266, %p267
      %s269 = ssub.s32 %s30, %s37
      %p270 = scmp.eq.s32.totalorder %s269, 0
      %s272 = sadd.s32 %s271, 1
      %s273 = scalar_select %p270, %s271, %s272
      %p276 = pneg %p270
      %p277 = scmp.eq.s32.totalorder %s30, 1
      %p278 = por %p276, %p277
      %p279 = scmp.ne.s32.totalorder %s271, %s274
      %p280 = scmp.eq.s32.totalorder %s30, 0
      %p281 = por %p279, %p280
      %p282 = scmp.ne.s32.totalorder %s271, %s274
      %p283 = scmp.eq.s32.totalorder %s35, 1
      %p284 = por %p282, %p283
      %p285 = scmp.ne.s32.totalorder %s274, %s275
      %p286 = scmp.eq.s32.totalorder %s35, 0
      %p287 = por %p285, %p286
      %p288 = scmp.ne.s32.totalorder %s274, %s275
      %p289 = scmp.eq.s32.totalorder %s36, 1
      %p290 = por %p288, %p289
      %p292 = scmp.ne.s32.totalorder %s275, %s291
      %p293 = scmp.eq.s32.totalorder %s36, 0
      %p294 = por %p292, %p293
      %s295 = ssub.s32 %s30, %s37
      %p296 = scmp.eq.s32.totalorder %s295, 0
      %s298 = sadd.s32 %s297, 1
      %s299 = scalar_select %p296, %s297, %s298
      %p302 = pneg %p296
      %p303 = scmp.eq.s32.totalorder %s30, 1
      %p304 = por %p302, %p303
      %p305 = scmp.ne.s32.totalorder %s297, %s300
      %p306 = scmp.eq.s32.totalorder %s30, 0
      %p307 = por %p305, %p306
      %p308 = scmp.ne.s32.totalorder %s297, %s300
      %p309 = scmp.eq.s32.totalorder %s35, 1
      %p310 = por %p308, %p309
      %p311 = scmp.ne.s32.totalorder %s300, %s301
      %p312 = scmp.eq.s32.totalorder %s35, 0
      %p313 = por %p311, %p312
      %p314 = scmp.ne.s32.totalorder %s300, %s301
      %p315 = scmp.eq.s32.totalorder %s36, 1
      %p316 = por %p314, %p315
      %p318 = scmp.ne.s32.totalorder %s301, %s317
      %p319 = scmp.eq.s32.totalorder %s36, 0
      %p320 = por %p318, %p319
      %s321 = ssub.s32 %s30, %s37
      %p322 = scmp.eq.s32.totalorder %s321, 0
      %s324 = sadd.s32 %s323, 1
      %s325 = scalar_select %p322, %s323, %s324
      %p328 = pneg %p322
      %p329 = scmp.eq.s32.totalorder %s30, 1
      %p330 = por %p328, %p329
      %p331 = scmp.ne.s32.totalorder %s323, %s326
      %p332 = scmp.eq.s32.totalorder %s30, 0
      %p333 = por %p331, %p332
      %p334 = scmp.ne.s32.totalorder %s323, %s326
      %p335 = scmp.eq.s32.totalorder %s35, 1
      %p336 = por %p334, %p335
      %p337 = scmp.ne.s32.totalorder %s326, %s327
      %p338 = scmp.eq.s32.totalorder %s35, 0
      %p339 = por %p337, %p338
      %p340 = scmp.ne.s32.totalorder %s326, %s327
      %p341 = scmp.eq.s32.totalorder %s36, 1
      %p342 = por %p340, %p341
      %p344 = scmp.ne.s32.totalorder %s327, %s343
      %p345 = scmp.eq.s32.totalorder %s36, 0
      %p346 = por %p344, %p345
      %s347 = ssub.s32 %s30, %s37
      %p348 = scmp.eq.s32.totalorder %s347, 0
      %s350 = sadd.s32 %s349, 1
      %s351 = scalar_select %p348, %s349, %s350
      %p354 = pneg %p348
      %p355 = scmp.eq.s32.totalorder %s30, 1
      %p356 = por %p354, %p355
      %p357 = scmp.ne.s32.totalorder %s349, %s352
      %p358 = scmp.eq.s32.totalorder %s30, 0
      %p359 = por %p357, %p358
      %p360 = scmp.ne.s32.totalorder %s349, %s352
      %p361 = scmp.eq.s32.totalorder %s35, 1
      %p362 = por %p360, %p361
      %p363 = scmp.ne.s32.totalorder %s352, %s353
      %p364 = scmp.eq.s32.totalorder %s35, 0
      %p365 = por %p363, %p364
      %p366 = scmp.ne.s32.totalorder %s352, %s353
      %p367 = scmp.eq.s32.totalorder %s36, 1
      %p368 = por %p366, %p367
      %p370 = scmp.ne.s32.totalorder %s353, %s369
      %p371 = scmp.eq.s32.totalorder %s36, 0
      %p372 = por %p370, %p371
      %s373 = ssub.s32 %s30, %s37
      %p374 = scmp.eq.s32.totalorder %s373, 0
      %s376 = sadd.s32 %s375, 1
      %s377 = scalar_select %p374, %s375, %s376
      %p380 = pneg %p374
      %p381 = scmp.eq.s32.totalorder %s30, 1
      %p382 = por %p380, %p381
      %p383 = scmp.ne.s32.totalorder %s375, %s378
      %p384 = scmp.eq.s32.totalorder %s30, 0
      %p385 = por %p383, %p384
      %p386 = scmp.ne.s32.totalorder %s375, %s378
      %p387 = scmp.eq.s32.totalorder %s35, 1
      %p388 = por %p386, %p387
      %p389 = scmp.ne.s32.totalorder %s378, %s379
      %p390 = scmp.eq.s32.totalorder %s35, 0
      %p391 = por %p389, %p390
      %p392 = scmp.ne.s32.totalorder %s378, %s379
      %p393 = scmp.eq.s32.totalorder %s36, 1
      %p394 = por %p392, %p393
      %p396 = scmp.ne.s32.totalorder %s379, %s395
      %p397 = scmp.eq.s32.totalorder %s36, 0
      %p398 = por %p396, %p397
      %s399 = ssub.s32 %s30, %s37
      %p400 = scmp.eq.s32.totalorder %s399, 0
      %s402 = sadd.s32 %s401, 1
      %s403 = scalar_select %p400, %s401, %s402
      %p406 = pneg %p400
      %p407 = scmp.eq.s32.totalorder %s30, 1
      %p408 = por %p406, %p407
      %p409 = scmp.ne.s32.totalorder %s401, %s404
      %p410 = scmp.eq.s32.totalorder %s30, 0
      %p411 = por %p409, %p410
      %p412 = scmp.ne.s32.totalorder %s401, %s404
      %p413 = scmp.eq.s32.totalorder %s35, 1
      %p414 = por %p412, %p413
      %p415 = scmp.ne.s32.totalorder %s404, %s405
      %p416 = scmp.eq.s32.totalorder %s35, 0
      %p417 = por %p415, %p416
      %p418 = scmp.ne.s32.totalorder %s404, %s405
      %p419 = scmp.eq.s32.totalorder %s36, 1
      %p420 = por %p418, %p419
      %p422 = scmp.ne.s32.totalorder %s405, %s421
      %p423 = scmp.eq.s32.totalorder %s36, 0
      %p424 = por %p422, %p423
      %s426 = sadd.s32 %s425, 1
      %p429 = scmp.eq.s32.totalorder %s30, 1
      %p430 = scmp.ne.s32.totalorder %s425, %s427
      %p431 = scmp.eq.s32.totalorder %s30, 0
      %p432 = por %p430, %p431
      %p433 = scmp.ne.s32.totalorder %s425, %s427
      %p434 = scmp.eq.s32.totalorder %s35, 1
      %p435 = por %p433, %p434
      %p436 = scmp.ne.s32.totalorder %s427, %s428
      %p437 = scmp.eq.s32.totalorder %s35, 0
      %p438 = por %p436, %p437
      %p439 = scmp.ne.s32.totalorder %s427, %s428
      %p440 = scmp.eq.s32.totalorder %s36, 1
      %p441 = por %p439, %p440
      %p443 = scmp.ne.s32.totalorder %s428, %s442
      %p444 = scmp.eq.s32.totalorder %s36, 0
      %p445 = por %p443, %p444
      %s447 = sadd.s32 %s446, 1
      %p450 = scmp.eq.s32.totalorder %s30, 1
      %p451 = scmp.ne.s32.totalorder %s446, %s448
      %p452 = scmp.eq.s32.totalorder %s30, 0
      %p453 = por %p451, %p452
      %p454 = scmp.ne.s32.totalorder %s446, %s448
      %p455 = scmp.eq.s32.totalorder %s35, 1
      %p456 = por %p454, %p455
      %p457 = scmp.ne.s32.totalorder %s448, %s449
      %p458 = scmp.eq.s32.totalorder %s35, 0
      %p459 = por %p457, %p458
      %p460 = scmp.ne.s32.totalorder %s448, %s449
      %p461 = scmp.eq.s32.totalorder %s36, 1
      %p462 = por %p460, %p461
      %p464 = scmp.ne.s32.totalorder %s449, %s463
      %p465 = scmp.eq.s32.totalorder %s36, 0
      %p466 = por %p464, %p465
      %p467 = scmp.le.s32.totalorder 1, %s30
      %p468 = scmp.lt.s32.totalorder %s30, 3
      %p469 = pnand %p467, %p468
      %p470 = pneg %p469
      // Predicated region
      $region9: #{tpu_custom_call.1} parent=5 // pred_check
        _
      $region10: #{tpu_custom_call.1} parent=5 // pred_check_branch
        %472 = sbr.rel (%p469) target = $region12
      $region11: #{tpu_custom_call.1} parent=5 // pred_region
        %s473 = ssub.s32 %s30, 1
        // Predicated region
        $region13: #{tpu_custom_call.1} parent=11 // pred_check
          %p474 = pneg %p51
        $region14: #{tpu_custom_call.1} parent=11 // pred_check_branch
          %476 = sbr.rel (%p474) target = $region16
        $region15: #{tpu_custom_call.1} parent=11 // pred_region
          _
        $region16: #{tpu_custom_call.1} parent=11 // pred_fallthru
          _
        // Predicated region
        $region17: #{tpu_custom_call.1} parent=11 // pred_check
          %p477 = pneg %p72
        $region18: #{tpu_custom_call.1} parent=11 // pred_check_branch
          %479 = sbr.rel (%p477) target = $region20
        $region19: #{tpu_custom_call.1} parent=11 // pred_region
          _
        $region20: #{tpu_custom_call.1} parent=11 // pred_fallthru
          _
        // Predicated region
        $region21: #{tpu_custom_call.1} parent=11 // pred_check
          %p480 = pneg %p93
        $region22: #{tpu_custom_call.1} parent=11 // pred_check_branch
          %482 = sbr.rel (%p480) target = $region24
        $region23: #{tpu_custom_call.1} parent=11 // pred_region
          _
        $region24: #{tpu_custom_call.1} parent=11 // pred_fallthru
          _
        // Predicated region
        $region25: #{tpu_custom_call.1} parent=11 // pred_check
          %p483 = pneg %p114
        $region26: #{tpu_custom_call.1} parent=11 // pred_check_branch
          %485 = sbr.rel (%p483) target = $region28
        $region27: #{tpu_custom_call.1} parent=11 // pred_region
          _
        $region28: #{tpu_custom_call.1} parent=11 // pred_fallthru
          _
        // Predicated region
        $region29: #{tpu_custom_call.1} parent=11 // pred_check
          %p486 = pneg %p135
        $region30: #{tpu_custom_call.1} parent=11 // pred_check_branch
          %488 = sbr.rel (%p486) target = $region32
        $region31: #{tpu_custom_call.1} parent=11 // pred_region
          _
        $region32: #{tpu_custom_call.1} parent=11 // pred_fallthru
          _
        // Predicated region
        $region33: #{tpu_custom_call.1} parent=11 // pred_check
          %p489 = pneg %p156
        $region34: #{tpu_custom_call.1} parent=11 // pred_check_branch
          %491 = sbr.rel (%p489) target = $region36
        $region35: #{tpu_custom_call.1} parent=11 // pred_region
          _
        $region36: #{tpu_custom_call.1} parent=11 // pred_fallthru
          _
        // Predicated region
        $region37: #{tpu_custom_call.1} parent=11 // pred_check
          %p492 = pneg %p177
        $region38: #{tpu_custom_call.1} parent=11 // pred_check_branch
          %494 = sbr.rel (%p492) target = $region40
        $region39: #{tpu_custom_call.1} parent=11 // pred_region
          _
        $region40: #{tpu_custom_call.1} parent=11 // pred_fallthru
          _
        // Predicated region
        $region41: #{tpu_custom_call.1} parent=11 // pred_check
          %p495 = pneg %p198
        $region42: #{tpu_custom_call.1} parent=11 // pred_check_branch
          %497 = sbr.rel (%p495) target = $region44
        $region43: #{tpu_custom_call.1} parent=11 // pred_region
          _
        $region44: #{tpu_custom_call.1} parent=11 // pred_fallthru
          _
        // Predicated region
        $region45: #{tpu_custom_call.1} parent=11 // pred_check
          %p498 = pneg %p219
        $region46: #{tpu_custom_call.1} parent=11 // pred_check_branch
          %500 = sbr.rel (%p498) target = $region48
        $region47: #{tpu_custom_call.1} parent=11 // pred_region
          _
        $region48: #{tpu_custom_call.1} parent=11 // pred_fallthru
          _
        // Predicated region
        $region49: #{tpu_custom_call.1} parent=11 // pred_check
          %p501 = pneg %p240
        $region50: #{tpu_custom_call.1} parent=11 // pred_check_branch
          %503 = sbr.rel (%p501) target = $region52
        $region51: #{tpu_custom_call.1} parent=11 // pred_region
          _
        $region52: #{tpu_custom_call.1} parent=11 // pred_fallthru
          _
        // Predicated region
        $region53: #{tpu_custom_call.1} parent=11 // pred_check
          %p504 = pneg %p261
        $region54: #{tpu_custom_call.1} parent=11 // pred_check_branch
          %506 = sbr.rel (%p504) target = $region56
        $region55: #{tpu_custom_call.1} parent=11 // pred_region
          _
        $region56: #{tpu_custom_call.1} parent=11 // pred_fallthru
          _
      $region12: #{tpu_custom_call.1} parent=5 // pred_fallthru
        _
      %p507 = scmp.lt.s32.totalorder %s30, 2
      // Predicated region
      $region57: #{tpu_custom_call.1} parent=5 // pred_check
        %p508 = pneg %p507
      $region58: #{tpu_custom_call.1} parent=5 // pred_check_branch
        %510 = sbr.rel (%p508) target = $region60
      $region59: #{tpu_custom_call.1} parent=5 // pred_region
        // Predicated region
        $region61: #{tpu_custom_call.1} parent=59 // pred_check
          %p511 = pneg %p281
        $region62: #{tpu_custom_call.1} parent=59 // pred_check_branch
          %513 = sbr.rel (%p511) target = $region64
        $region63: #{tpu_custom_call.1} parent=59 // pred_region
          %s514 = sand.u32 %s271, 1
          %s515 = scalar_lea.sflag [#allocation4], %s514
          %s516 = sand.u32 %s271, 1
          %s517 = smul.addr %s516, 384
          %s518 = scalar_lea.vmem [#allocation3], %s517
          %520 = vsyncadd %s515, 0
          %s521 = smul.addr %s30, 96
          %s522 = smul.addr %s521, 4
          %s523 = scalar_lea.hbm %s11, %s522
          %s524 = sshll.u32 %s523, 4
          %s525 = int_to_ptr.hbm [resolvable:$true] %s524
          %s526 = sshll.u32 %s518, 4
          %s527 = int_to_ptr.vmem [resolvable:$true] %s526
          %532 = dma.hbm_to_vmem [thread:$0]  %s525, 6144, %s527, %s515, 128, 128, 8
        $region64: #{tpu_custom_call.1} parent=59 // pred_fallthru
          _
        // Predicated region
        $region65: #{tpu_custom_call.1} parent=59 // pred_check
          %p533 = pneg %p307
        $region66: #{tpu_custom_call.1} parent=59 // pred_check_branch
          %535 = sbr.rel (%p533) target = $region68
        $region67: #{tpu_custom_call.1} parent=59 // pred_region
          %p536 = scmp.lt.s32.totalorder %s30, 1
          %s537 = scalar_select %p536, %s30, 1
          %s538 = smul.addr %s537, 6
          %s539 = scalar_lea.vmem %s12, %s538
        $region68: #{tpu_custom_call.1} parent=59 // pred_fallthru
          _
        // Predicated region
        $region69: #{tpu_custom_call.1} parent=59 // pred_check
          %p540 = pneg %p333
        $region70: #{tpu_custom_call.1} parent=59 // pred_check_branch
          %542 = sbr.rel (%p540) target = $region72
        $region71: #{tpu_custom_call.1} parent=59 // pred_region
          %p543 = scmp.lt.s32.totalorder %s30, 1
          %s544 = scalar_select %p543, %s30, 1
          %s545 = smul.addr %s544, 3
          %s546 = scalar_lea.vmem %s13, %s545
        $region72: #{tpu_custom_call.1} parent=59 // pred_fallthru
          _
        // Predicated region
        $region73: #{tpu_custom_call.1} parent=59 // pred_check
          %p547 = pneg %p359
        $region74: #{tpu_custom_call.1} parent=59 // pred_check_branch
          %549 = sbr.rel (%p547) target = $region76
        $region75: #{tpu_custom_call.1} parent=59 // pred_region
          %p550 = scmp.lt.s32.totalorder %s30, 1
          %s551 = scalar_select %p550, %s30, 1
          %s552 = smul.addr %s551, 3
          %s553 = scalar_lea.vmem %s14, %s552
        $region76: #{tpu_custom_call.1} parent=59 // pred_fallthru
          _
        // Predicated region
        $region77: #{tpu_custom_call.1} parent=59 // pred_check
          %p554 = pneg %p385
        $region78: #{tpu_custom_call.1} parent=59 // pred_check_branch
          %556 = sbr.rel (%p554) target = $region80
        $region79: #{tpu_custom_call.1} parent=59 // pred_region
          %p557 = scmp.lt.s32.totalorder %s30, 1
          %s558 = scalar_select %p557, %s30, 1
          %s559 = smul.addr %s558, 16
          %s560 = smul.addr %s559, 4
          %s561 = scalar_lea.vmem %s15, %s560
        $region80: #{tpu_custom_call.1} parent=59 // pred_fallthru
          _
        // Predicated region
        $region81: #{tpu_custom_call.1} parent=59 // pred_check
          %p562 = pneg %p411
        $region82: #{tpu_custom_call.1} parent=59 // pred_check_branch
          %564 = sbr.rel (%p562) target = $region84
        $region83: #{tpu_custom_call.1} parent=59 // pred_region
          %p565 = scmp.lt.s32.totalorder %s30, 1
          %s566 = scalar_select %p565, %s30, 1
          %s567 = scalar_lea.vmem %s16, %s566
        $region84: #{tpu_custom_call.1} parent=59 // pred_fallthru
          _
      $region60: #{tpu_custom_call.1} parent=5 // pred_fallthru
        _
      %p568 = scmp.le.s32.totalorder 1, %s30
      %p569 = scmp.lt.s32.totalorder %s30, 3
      %p570 = pnand %p568, %p569
      %p571 = pneg %p570
      // Predicated region
      $region85: #{tpu_custom_call.1} parent=5 // pred_check
        _
      $region86: #{tpu_custom_call.1} parent=5 // pred_check_branch
        %573 = sbr.rel (%p570) target = $region88
      $region87: #{tpu_custom_call.1} parent=5 // pred_region
        %s574 = ssub.s32 %s30, 1
        %s575 = sand.u32 %s274, 1
        %s576 = scalar_lea.sflag [#allocation4], %s575
        %s577 = sand.u32 %s274, 1
        %s578 = smul.addr %s577, 384
        %s579 = scalar_lea.vmem [#allocation3], %s578
        // Predicated region
        $region89: #{tpu_custom_call.1} parent=87 // pred_check
          %p580 = pneg %p287
        $region90: #{tpu_custom_call.1} parent=87 // pred_check_branch
          %582 = sbr.rel (%p580) target = $region92
        $region91: #{tpu_custom_call.1} parent=87 // pred_region
          %584 = dma.done %s576, 6144
        $region92: #{tpu_custom_call.1} parent=87 // pred_fallthru
          _
        %p585 = pneg %p51
        %p586 = pneg %p48
        %p587 = pneg %p72
        %p588 = pneg %p69
        %p589 = pneg %p93
        %p590 = pneg %p90
        %p591 = pneg %p114
        %p592 = pneg %p111
        %p593 = pneg %p135
        %p594 = pneg %p132
        %p595 = pneg %p156
        %p596 = pneg %p153
        %p597 = pneg %p177
        %p598 = pneg %p174
        %p599 = pneg %p198
        %p600 = pneg %p195
        %p601 = pneg %p219
        %p602 = pneg %p216
        %p603 = pneg %p240
        %p604 = pneg %p237
        %p605 = pneg %p261
        %p606 = pneg %p258
        %s607 = sand.u32 %s274, 1
        %s608 = scalar_lea.sflag [#allocation4], %s607
        %s609 = sand.u32 %s274, 1
        %s610 = smul.addr %s609, 384
        %s611 = scalar_lea.vmem [#allocation3], %s610
        %p612 = pneg %p287
        %p613 = pneg %p284
        %p614 = scmp.lt.s32.totalorder %s35, 1
        %s615 = scalar_select %p614, %s35, 1
        %s616 = smul.addr %s615, 6
        %s617 = scalar_lea.vmem %s12, %s616
        %p618 = pneg %p313
        %p619 = pneg %p310
        %p620 = scmp.lt.s32.totalorder %s35, 1
        %s621 = scalar_select %p620, %s35, 1
        %s622 = smul.addr %s621, 3
        %s623 = scalar_lea.vmem %s13, %s622
        %p624 = pneg %p339
        %p625 = pneg %p336
        %p626 = scmp.lt.s32.totalorder %s35, 1
        %s627 = scalar_select %p626, %s35, 1
        %s628 = smul.addr %s627, 3
        %s629 = scalar_lea.vmem %s14, %s628
        %p630 = pneg %p365
        %p631 = pneg %p362
        %p632 = scmp.lt.s32.totalorder %s35, 1
        %s633 = scalar_select %p632, %s35, 1
        %s634 = smul.addr %s633, 16
        %s635 = smul.addr %s634, 4
        %s636 = scalar_lea.vmem %s15, %s635
        %p637 = pneg %p391
        %p638 = pneg %p388
        %p639 = scmp.lt.s32.totalorder %s35, 1
        %s640 = scalar_select %p639, %s35, 1
        %s641 = scalar_lea.vmem %s16, %s640
        %p642 = pneg %p417
        %p643 = pneg %p414
        %p644 = pneg %p438
        %p645 = pneg %p435
        %p646 = pneg %p459
        %p647 = pneg %p456
        %p648 = scmp.lt.s32.totalorder %s35, 1
        %s649 = scalar_select %p648, %s35, 1
        %s650 = smul.addr %s649, 6
        %s651 = scalar_lea.vmem %s12, %s650
        %p652 = scmp.lt.s32.totalorder %s35, 1
        %s653 = scalar_select %p652, %s35, 1
        %s654 = smul.addr %s653, 3
        %s655 = scalar_lea.vmem %s13, %s654
        %p656 = scmp.lt.s32.totalorder %s35, 1
        %s657 = scalar_select %p656, %s35, 1
        %s658 = smul.addr %s657, 3
        %s659 = scalar_lea.vmem %s14, %s658
        %p660 = scmp.lt.s32.totalorder %s35, 1
        %s661 = scalar_select %p660, %s35, 1
        %s662 = smul.addr %s661, 16
        %s663 = smul.addr %s662, 4
        %s664 = scalar_lea.vmem %s15, %s663
        %p665 = scmp.lt.s32.totalorder %s35, 1
        %s666 = scalar_select %p665, %s35, 1
        %s667 = scalar_lea.vmem %s16, %s666
        %p669 = scmp.eq.s32.totalorder %s35, 0
        // Predicated region
        $region93: #{tpu_custom_call.1} parent=87 // pred_check
          %p670 = pneg %p669
        $region94: #{tpu_custom_call.1} parent=87 // pred_check_branch
          %672 = sbr.rel (%p670) target = $region96
        $region95: #{tpu_custom_call.1} parent=87 // pred_region
          %v673 = vld [vmem:[%s0] sm:$0xff]
          %v674 = vld [vmem:[%s0 + $0x8] sm:$0xff]
          %v675 = vld [vmem:[%s0 + $0x10] sm:$0xff]
          %v676 = vld [vmem:[%s0 + $0x18] sm:$0xff]
          %v677 = vld [vmem:[%s0 + $0x20] sm:$0xff]
          %v678 = vld [vmem:[%s0 + $0x28] sm:$0xff]
          %v679 = vld [vmem:[%s0 + $0x30] sm:$0xff]
          %v680 = vld [vmem:[%s0 + $0x38] sm:$0xff]
          %681 = vst [vmem:[#allocation6] sm:$0xff] %v673
          %682 = vst [vmem:[#allocation6 + $0x8] sm:$0xff] %v674
          %683 = vst [vmem:[#allocation6 + $0x10] sm:$0xff] %v675
          %684 = vst [vmem:[#allocation6 + $0x18] sm:$0xff] %v676
          %685 = vst [vmem:[#allocation6 + $0x20] sm:$0xff] %v677
          %686 = vst [vmem:[#allocation6 + $0x28] sm:$0xff] %v678
          %687 = vst [vmem:[#allocation6 + $0x30] sm:$0xff] %v679
          %688 = vst [vmem:[#allocation6 + $0x38] sm:$0xff] %v680
          %v689 = vld [vmem:[%s1] sm:$0xff]
          %690 = vst [vmem:[#allocation7] sm:$0xff] %v689
        $region96: #{tpu_custom_call.1} parent=87 // pred_fallthru
          _
        %v691 = vld [vmem:[#allocation6] sm:$0xff]
        %v692 = vld [vmem:[#allocation6 + $0x8] sm:$0xff]
        %v693 = vld [vmem:[#allocation6 + $0x10] sm:$0xff]
        %v694 = vld [vmem:[#allocation6 + $0x18] sm:$0xff]
        %v695 = vld [vmem:[#allocation6 + $0x20] sm:$0xff]
        %v696 = vld [vmem:[#allocation6 + $0x28] sm:$0xff]
        %v697 = vld [vmem:[#allocation6 + $0x30] sm:$0xff]
        %v698 = vld [vmem:[#allocation6 + $0x38] sm:$0xff]
        %v699 = vld [vmem:[#allocation7] sm:$0xff]
        %v700 = vpack.c.bf16 %v692, %v691
        %v701 = vpack.c.bf16 %v694, %v693
        %v702 = vpack.c.bf16 %v696, %v695
        %v703 = vpack.c.bf16 %v698, %v697
        %v704 = vpack.c.bf16 %v699, %v699
        %v705 = vld [vmem:[%s2] sm:$0xf]
        %v706 = vld [vmem:[%s2 + $0x4] sm:$0xf]
        %v707 = vld [vmem:[%s2 + $0x8] sm:$0xf]
        %v708 = vld [vmem:[%s2 + $0xc] sm:$0xf]
        %v709 = vld [vmem:[%s2 + $0x10] sm:$0xf]
        %v710 = vld [vmem:[%s2 + $0x14] sm:$0xf]
        %v711 = vld [vmem:[%s2 + $0x18] sm:$0xf]
        %v712 = vld [vmem:[%s2 + $0x1c] sm:$0xf]
        %v713 = vld [vmem:[%s2 + $0x20] sm:$0xf]
        %v714 = vld [vmem:[%s2 + $0x24] sm:$0xf]
        %v715 = vld [vmem:[%s2 + $0x28] sm:$0xf]
        %v716 = vld [vmem:[%s2 + $0x2c] sm:$0xf]
        %v717 = vld [vmem:[%s2 + $0x30] sm:$0xf]
        %v718 = vld [vmem:[%s2 + $0x34] sm:$0xf]
        %v719 = vld [vmem:[%s2 + $0x38] sm:$0xf]
        %v720 = vld [vmem:[%s2 + $0x3c] sm:$0xf]
        %v737 = vunpack.c.l.b16 %v705
        %v738 = vunpack.c.l.b16 %v706
        %v739 = vunpack.c.l.b16 %v707
        %v740 = vunpack.c.l.b16 %v708
        %v741 = vunpack.c.l.b16 %v709
        %v742 = vunpack.c.l.b16 %v710
        %v743 = vunpack.c.l.b16 %v711
        %v744 = vunpack.c.l.b16 %v712
        %v745 = vunpack.c.l.b16 %v713
        %v746 = vunpack.c.l.b16 %v714
        %v747 = vunpack.c.l.b16 %v715
        %v748 = vunpack.c.l.b16 %v716
        %v749 = vunpack.c.l.b16 %v717
        %v750 = vunpack.c.l.b16 %v718
        %v751 = vunpack.c.l.b16 %v719
        %v752 = vunpack.c.l.b16 %v720
        %v753 = vpack.c.b16 %v738, %v737
        %v754 = vpack.c.b16 %v740, %v739
        %v755 = vpack.c.b16 %v742, %v741
        %v756 = vpack.c.b16 %v744, %v743
        %v757 = vpack.c.b16 %v746, %v745
        %v758 = vpack.c.b16 %v748, %v747
        %v759 = vpack.c.b16 %v750, %v749
        %v760 = vpack.c.b16 %v752, %v751
        %vm761 = vcmask 523264
        %v763 = vsel %vm761, %v753, 0
        %v766 = vsel %vm761, %v754, 0
        %v769 = vsel %vm761, %v755, 0
        %v772 = vsel %vm761, %v756, 0
        %v775 = vsel %vm761, %v757, 0
        %v778 = vsel %vm761, %v758, 0
        %v781 = vsel %vm761, %v759, 0
        %v784 = vsel %vm761, %v760, 0
        %786 = vmatpush.bf16.msra.mxu0 0
        %787 = vmatpush.bf16.msra.mxu0 0
        %788 = vmatpush.bf16.msra.mxu0 0
        %789 = vmatpush.bf16.msra.mxu0 0
        %790 = vmatpush.bf16.msra.mxu0 %v703
        %791 = vmatpush.bf16.msra.mxu0 %v702
        %792 = vmatpush.bf16.msra.mxu0 %v701
        %793 = vmatpush.bf16.msra.mxu0 %v700
        %794 = vmatmul.bf16.gmra.mxu0 %v763
        %v795 = vpop.f32.mrf.mxu0
        %v796 = vadd.f32 0.0, %v795
        %v797 = vpop.f32.mrf.mxu0
        %v798 = vadd.f32 0.0, %v797
        %799 = vmatmul.bf16.gmra.mxu0 %v766
        %v800 = vpop.f32.mrf.mxu0
        %v801 = vadd.f32 0.0, %v800
        %v802 = vpop.f32.mrf.mxu0
        %v803 = vadd.f32 0.0, %v802
        %804 = vmatmul.bf16.gmra.mxu0 %v769
        %v805 = vpop.f32.mrf.mxu0
        %v806 = vadd.f32 0.0, %v805
        %v807 = vpop.f32.mrf.mxu0
        %v808 = vadd.f32 0.0, %v807
        %809 = vmatmul.bf16.gmra.mxu0 %v772
        %v810 = vpop.f32.mrf.mxu0
        %v811 = vadd.f32 0.0, %v810
        %v812 = vpop.f32.mrf.mxu0
        %v813 = vadd.f32 0.0, %v812
        %814 = vmatmul.bf16.gmra.mxu0 %v775
        %v815 = vpop.f32.mrf.mxu0
        %v816 = vadd.f32 0.0, %v815
        %v817 = vpop.f32.mrf.mxu0
        %v818 = vadd.f32 0.0, %v817
        %819 = vmatmul.bf16.gmra.mxu0 %v778
        %v820 = vpop.f32.mrf.mxu0
        %v821 = vadd.f32 0.0, %v820
        %v822 = vpop.f32.mrf.mxu0
        %v823 = vadd.f32 0.0, %v822
        %824 = vmatmul.bf16.gmra.mxu0 %v781
        %v825 = vpop.f32.mrf.mxu0
        %v826 = vadd.f32 0.0, %v825
        %v827 = vpop.f32.mrf.mxu0
        %v828 = vadd.f32 0.0, %v827
        %829 = vmatmul.bf16.gmra.mxu0 %v784
        %v830 = vpop.f32.mrf.mxu0
        %v831 = vadd.f32 0.0, %v830
        %v832 = vpop.f32.mrf.mxu0
        %v833 = vadd.f32 0.0, %v832
        %834 = vdwg.mxu0
        %v835 = vld [vmem:[%s3] sm:$0xf]
        %v836 = vld [vmem:[%s3 + $0x4] sm:$0xf]
        %v837 = vld [vmem:[%s3 + $0x8] sm:$0xf]
        %v838 = vld [vmem:[%s3 + $0xc] sm:$0xf]
        %v839 = vld [vmem:[%s3 + $0x10] sm:$0xf]
        %v840 = vld [vmem:[%s3 + $0x14] sm:$0xf]
        %v841 = vld [vmem:[%s3 + $0x18] sm:$0xf]
        %v842 = vld [vmem:[%s3 + $0x1c] sm:$0xf]
        %v843 = vld [vmem:[%s3 + $0x20] sm:$0xf]
        %v844 = vld [vmem:[%s3 + $0x24] sm:$0xf]
        %v845 = vld [vmem:[%s3 + $0x28] sm:$0xf]
        %v846 = vld [vmem:[%s3 + $0x2c] sm:$0xf]
        %v847 = vld [vmem:[%s3 + $0x30] sm:$0xf]
        %v848 = vld [vmem:[%s3 + $0x34] sm:$0xf]
        %v849 = vld [vmem:[%s3 + $0x38] sm:$0xf]
        %v850 = vld [vmem:[%s3 + $0x3c] sm:$0xf]
        %v867 = vunpack.c.l.b16 %v835
        %v868 = vunpack.c.l.b16 %v836
        %v869 = vunpack.c.l.b16 %v837
        %v870 = vunpack.c.l.b16 %v838
        %v871 = vunpack.c.l.b16 %v839
        %v872 = vunpack.c.l.b16 %v840
        %v873 = vunpack.c.l.b16 %v841
        %v874 = vunpack.c.l.b16 %v842
        %v875 = vunpack.c.l.b16 %v843
        %v876 = vunpack.c.l.b16 %v844
        %v877 = vunpack.c.l.b16 %v845
        %v878 = vunpack.c.l.b16 %v846
        %v879 = vunpack.c.l.b16 %v847
        %v880 = vunpack.c.l.b16 %v848
        %v881 = vunpack.c.l.b16 %v849
        %v882 = vunpack.c.l.b16 %v850
        %v883 = vpack.c.b16 %v868, %v867
        %v884 = vpack.c.b16 %v870, %v869
        %v885 = vpack.c.b16 %v872, %v871
        %v886 = vpack.c.b16 %v874, %v873
        %v887 = vpack.c.b16 %v876, %v875
        %v888 = vpack.c.b16 %v878, %v877
        %v889 = vpack.c.b16 %v880, %v879
        %v890 = vpack.c.b16 %v882, %v881
        %v892 = vsel %vm761, %v883, 0
        %v895 = vsel %vm761, %v884, 0
        %v898 = vsel %vm761, %v885, 0
        %v901 = vsel %vm761, %v886, 0
        %v904 = vsel %vm761, %v887, 0
        %v907 = vsel %vm761, %v888, 0
        %v910 = vsel %vm761, %v889, 0
        %v913 = vsel %vm761, %v890, 0
        %915 = vmatpush.bf16.msra.mxu0 0
        %916 = vmatpush.bf16.msra.mxu0 0
        %917 = vmatpush.bf16.msra.mxu0 0
        %918 = vmatpush.bf16.msra.mxu0 0
        %919 = vmatpush.bf16.msra.mxu0 %v703
        %920 = vmatpush.bf16.msra.mxu0 %v702
        %921 = vmatpush.bf16.msra.mxu0 %v701
        %922 = vmatpush.bf16.msra.mxu0 %v700
        %923 = vmatmul.bf16.gmra.mxu0 %v892
        %v924 = vpop.f32.mrf.mxu0
        %v925 = vadd.f32 0.0, %v924
        %v926 = vpop.f32.mrf.mxu0
        %v927 = vadd.f32 0.0, %v926
        %928 = vmatmul.bf16.gmra.mxu0 %v895
        %v929 = vpop.f32.mrf.mxu0
        %v930 = vadd.f32 0.0, %v929
        %v931 = vpop.f32.mrf.mxu0
        %v932 = vadd.f32 0.0, %v931
        %933 = vmatmul.bf16.gmra.mxu0 %v898
        %v934 = vpop.f32.mrf.mxu0
        %v935 = vadd.f32 0.0, %v934
        %v936 = vpop.f32.mrf.mxu0
        %v937 = vadd.f32 0.0, %v936
        %938 = vmatmul.bf16.gmra.mxu0 %v901
        %v939 = vpop.f32.mrf.mxu0
        %v940 = vadd.f32 0.0, %v939
        %v941 = vpop.f32.mrf.mxu0
        %v942 = vadd.f32 0.0, %v941
        %943 = vmatmul.bf16.gmra.mxu0 %v904
        %v944 = vpop.f32.mrf.mxu0
        %v945 = vadd.f32 0.0, %v944
        %v946 = vpop.f32.mrf.mxu0
        %v947 = vadd.f32 0.0, %v946
        %948 = vmatmul.bf16.gmra.mxu0 %v907
        %v949 = vpop.f32.mrf.mxu0
        %v950 = vadd.f32 0.0, %v949
        %v951 = vpop.f32.mrf.mxu0
        %v952 = vadd.f32 0.0, %v951
        %953 = vmatmul.bf16.gmra.mxu0 %v910
        %v954 = vpop.f32.mrf.mxu0
        %v955 = vadd.f32 0.0, %v954
        %v956 = vpop.f32.mrf.mxu0
        %v957 = vadd.f32 0.0, %v956
        %958 = vmatmul.bf16.gmra.mxu0 %v913
        %v959 = vpop.f32.mrf.mxu0
        %v960 = vadd.f32 0.0, %v959
        %v961 = vpop.f32.mrf.mxu0
        %v962 = vadd.f32 0.0, %v961
        %963 = vdwg.mxu0
        %v964 = vld [vmem:[%s4] sm:$0xf]
        %v965 = vld [vmem:[%s4 + $0x4] sm:$0xf]
        %v966 = vld [vmem:[%s4 + $0x8] sm:$0xf]
        %v967 = vld [vmem:[%s4 + $0xc] sm:$0xf]
        %v968 = vld [vmem:[%s4 + $0x10] sm:$0xf]
        %v969 = vld [vmem:[%s4 + $0x14] sm:$0xf]
        %v970 = vld [vmem:[%s4 + $0x18] sm:$0xf]
        %v971 = vld [vmem:[%s4 + $0x1c] sm:$0xf]
        %v972 = vld [vmem:[%s4 + $0x20] sm:$0xf]
        %v973 = vld [vmem:[%s4 + $0x24] sm:$0xf]
        %v974 = vld [vmem:[%s4 + $0x28] sm:$0xf]
        %v975 = vld [vmem:[%s4 + $0x2c] sm:$0xf]
        %v976 = vld [vmem:[%s4 + $0x30] sm:$0xf]
        %v977 = vld [vmem:[%s4 + $0x34] sm:$0xf]
        %v978 = vld [vmem:[%s4 + $0x38] sm:$0xf]
        %v979 = vld [vmem:[%s4 + $0x3c] sm:$0xf]
        %v996 = vunpack.c.l.b16 %v964
        %v997 = vunpack.c.l.b16 %v965
        %v998 = vunpack.c.l.b16 %v966
        %v999 = vunpack.c.l.b16 %v967
        %v1000 = vunpack.c.l.b16 %v968
        %v1001 = vunpack.c.l.b16 %v969
        %v1002 = vunpack.c.l.b16 %v970
        %v1003 = vunpack.c.l.b16 %v971
        %v1004 = vunpack.c.l.b16 %v972
        %v1005 = vunpack.c.l.b16 %v973
        %v1006 = vunpack.c.l.b16 %v974
        %v1007 = vunpack.c.l.b16 %v975
        %v1008 = vunpack.c.l.b16 %v976
        %v1009 = vunpack.c.l.b16 %v977
        %v1010 = vunpack.c.l.b16 %v978
        %v1011 = vunpack.c.l.b16 %v979
        %v1012 = vpack.c.b16 %v997, %v996
        %v1013 = vpack.c.b16 %v999, %v998
        %v1014 = vpack.c.b16 %v1001, %v1000
        %v1015 = vpack.c.b16 %v1003, %v1002
        %v1016 = vpack.c.b16 %v1005, %v1004
        %v1017 = vpack.c.b16 %v1007, %v1006
        %v1018 = vpack.c.b16 %v1009, %v1008
        %v1019 = vpack.c.b16 %v1011, %v1010
        %vm1020 = vcmask 64512
        %v1022 = vsel %vm1020, %v1012, 0
        %v1025 = vsel %vm1020, %v1013, 0
        %v1028 = vsel %vm1020, %v1014, 0
        %v1031 = vsel %vm1020, %v1015, 0
        %v1034 = vsel %vm1020, %v1016, 0
        %v1037 = vsel %vm1020, %v1017, 0
        %v1040 = vsel %vm1020, %v1018, 0
        %v1043 = vsel %vm1020, %v1019, 0
        %vm1045 = vcmask 1043456
        %v1047 = vsel %vm1045, %v704, 0
        %1049 = vmatpush.bf16.msra.mxu0 0
        %1050 = vmatpush.bf16.msra.mxu0 0
        %1051 = vmatpush.bf16.msra.mxu0 0
        %1052 = vmatpush.bf16.msra.mxu0 0
        %1053 = vmatpush.bf16.msra.mxu0 0
        %1054 = vmatpush.bf16.msra.mxu0 0
        %1055 = vmatpush.bf16.msra.mxu0 0
        %1056 = vmatpush.bf16.msra.mxu0 %v1047
        %1057 = vmatmul.bf16.gmra.mxu0 %v1022
        %v1058 = vpop.f32.mrf.mxu0
        %v1059 = vadd.f32 0.0, %v1058
        %v1060 = vpop.f32.mrf.mxu0
        %v1061 = vadd.f32 0.0, %v1060
        %1062 = vmatmul.bf16.gmra.mxu0 %v1025
        %v1063 = vpop.f32.mrf.mxu0
        %v1064 = vadd.f32 0.0, %v1063
        %v1065 = vpop.f32.mrf.mxu0
        %v1066 = vadd.f32 0.0, %v1065
        %1067 = vmatmul.bf16.gmra.mxu0 %v1028
        %v1068 = vpop.f32.mrf.mxu0
        %v1069 = vadd.f32 0.0, %v1068
        %v1070 = vpop.f32.mrf.mxu0
        %v1071 = vadd.f32 0.0, %v1070
        %1072 = vmatmul.bf16.gmra.mxu0 %v1031
        %v1073 = vpop.f32.mrf.mxu0
        %v1074 = vadd.f32 0.0, %v1073
        %v1075 = vpop.f32.mrf.mxu0
        %v1076 = vadd.f32 0.0, %v1075
        %1077 = vmatmul.bf16.gmra.mxu0 %v1034
        %v1078 = vpop.f32.mrf.mxu0
        %v1079 = vadd.f32 0.0, %v1078
        %v1080 = vpop.f32.mrf.mxu0
        %v1081 = vadd.f32 0.0, %v1080
        %1082 = vmatmul.bf16.gmra.mxu0 %v1037
        %v1083 = vpop.f32.mrf.mxu0
        %v1084 = vadd.f32 0.0, %v1083
        %v1085 = vpop.f32.mrf.mxu0
        %v1086 = vadd.f32 0.0, %v1085
        %1087 = vmatmul.bf16.gmra.mxu0 %v1040
        %v1088 = vpop.f32.mrf.mxu0
        %v1089 = vadd.f32 0.0, %v1088
        %v1090 = vpop.f32.mrf.mxu0
        %v1091 = vadd.f32 0.0, %v1090
        %1092 = vmatmul.bf16.gmra.mxu0 %v1043
        %v1093 = vpop.f32.mrf.mxu0
        %v1094 = vadd.f32 0.0, %v1093
        %v1095 = vpop.f32.mrf.mxu0
        %v1096 = vadd.f32 0.0, %v1095
        %1097 = vdwg.mxu0
        %v1098 = vmul.f32 %v796, %v1059
        %v1099 = vmul.f32 %v798, %v1061
        %v1100 = vmul.f32 %v801, %v1064
        %v1101 = vmul.f32 %v803, %v1066
        %v1102 = vmul.f32 %v806, %v1069
        %v1103 = vmul.f32 %v808, %v1071
        %v1104 = vmul.f32 %v811, %v1074
        %v1105 = vmul.f32 %v813, %v1076
        %v1106 = vmul.f32 %v816, %v1079
        %v1107 = vmul.f32 %v818, %v1081
        %v1108 = vmul.f32 %v821, %v1084
        %v1109 = vmul.f32 %v823, %v1086
        %v1110 = vmul.f32 %v826, %v1089
        %v1111 = vmul.f32 %v828, %v1091
        %v1112 = vmul.f32 %v831, %v1094
        %v1113 = vmul.f32 %v833, %v1096
        %v1114 = vld [vmem:[%s7] sm:$0xff]
        %v1115 = vld [vmem:[%s7 + $0x8] sm:$0xff]
        %v1116 = vld [vmem:[%s7 + $0x10] sm:$0xff]
        %v1117 = vld [vmem:[%s7 + $0x18] sm:$0xff]
        %v1118 = vld [vmem:[%s7 + $0x20] sm:$0xff]
        %v1119 = vld [vmem:[%s7 + $0x28] sm:$0xff]
        %v1120 = vld [vmem:[%s7 + $0x30] sm:$0xff]
        %v1121 = vld [vmem:[%s7 + $0x38] sm:$0xff]
        %v1122 = vld [vmem:[%s7 + $0x40] sm:$0xff]
        %v1123 = vld [vmem:[%s7 + $0x48] sm:$0xff]
        %v1124 = vld [vmem:[%s7 + $0x50] sm:$0xff]
        %v1125 = vld [vmem:[%s7 + $0x58] sm:$0xff]
        %v1126 = vld [vmem:[%s7 + $0x60] sm:$0xff]
        %v1127 = vld [vmem:[%s7 + $0x68] sm:$0xff]
        %v1128 = vld [vmem:[%s7 + $0x70] sm:$0xff]
        %v1129 = vld [vmem:[%s7 + $0x78] sm:$0xff]
        %v1130 = vld [vmem:[%s8] sm:$0xff]
        %v1131 = vld [vmem:[%s8 + $0x8] sm:$0xff]
        %v1132 = vld [vmem:[%s8 + $0x10] sm:$0xff]
        %v1133 = vld [vmem:[%s8 + $0x18] sm:$0xff]
        %v1134 = vld [vmem:[%s8 + $0x20] sm:$0xff]
        %v1135 = vld [vmem:[%s8 + $0x28] sm:$0xff]
        %v1136 = vld [vmem:[%s8 + $0x30] sm:$0xff]
        %v1137 = vld [vmem:[%s8 + $0x38] sm:$0xff]
        %v1138 = vld [vmem:[%s8 + $0x40] sm:$0xff]
        %v1139 = vld [vmem:[%s8 + $0x48] sm:$0xff]
        %v1140 = vld [vmem:[%s8 + $0x50] sm:$0xff]
        %v1141 = vld [vmem:[%s8 + $0x58] sm:$0xff]
        %v1142 = vld [vmem:[%s8 + $0x60] sm:$0xff]
        %v1143 = vld [vmem:[%s8 + $0x68] sm:$0xff]
        %v1144 = vld [vmem:[%s8 + $0x70] sm:$0xff]
        %v1145 = vld [vmem:[%s8 + $0x78] sm:$0xff]
        %v1146 = vmul.f32 %v1059, %v925
        %v1147 = vmul.f32 %v1061, %v927
        %v1148 = vmul.f32 %v1064, %v930
        %v1149 = vmul.f32 %v1066, %v932
        %v1150 = vmul.f32 %v1069, %v935
        %v1151 = vmul.f32 %v1071, %v937
        %v1152 = vmul.f32 %v1074, %v940
        %v1153 = vmul.f32 %v1076, %v942
        %v1154 = vmul.f32 %v1079, %v945
        %v1155 = vmul.f32 %v1081, %v947
        %v1156 = vmul.f32 %v1084, %v950
        %v1157 = vmul.f32 %v1086, %v952
        %v1158 = vmul.f32 %v1089, %v955
        %v1159 = vmul.f32 %v1091, %v957
        %v1160 = vmul.f32 %v1094, %v960
        %v1161 = vmul.f32 %v1096, %v962
        %1162 = vadd.xlane.f32.xlu0 %v1146
        %v1163 = vpop.xlane.xlu0 %1162
        %1164 = vadd.xlane.f32.xlu0 %v1147
        %v1165 = vpop.xlane.xlu0 %1164
        %1166 = vadd.xlane.f32.xlu0 %v1148
        %v1167 = vpop.xlane.xlu0 %1166
        %1168 = vadd.xlane.f32.xlu0 %v1149
        %v1169 = vpop.xlane.xlu0 %1168
        %1170 = vadd.xlane.f32.xlu0 %v1150
        %v1171 = vpop.xlane.xlu0 %1170
        %1172 = vadd.xlane.f32.xlu0 %v1151
        %v1173 = vpop.xlane.xlu0 %1172
        %1174 = vadd.xlane.f32.xlu0 %v1152
        %v1175 = vpop.xlane.xlu0 %1174
        %1176 = vadd.xlane.f32.xlu0 %v1153
        %v1177 = vpop.xlane.xlu0 %1176
        %1178 = vadd.xlane.f32.xlu0 %v1154
        %v1179 = vpop.xlane.xlu0 %1178
        %1180 = vadd.xlane.f32.xlu0 %v1155
        %v1181 = vpop.xlane.xlu0 %1180
        %1182 = vadd.xlane.f32.xlu0 %v1156
        %v1183 = vpop.xlane.xlu0 %1182
        %1184 = vadd.xlane.f32.xlu0 %v1157
        %v1185 = vpop.xlane.xlu0 %1184
        %1186 = vadd.xlane.f32.xlu0 %v1158
        %v1187 = vpop.xlane.xlu0 %1186
        %1188 = vadd.xlane.f32.xlu0 %v1159
        %v1189 = vpop.xlane.xlu0 %1188
        %1190 = vadd.xlane.f32.xlu0 %v1160
        %v1191 = vpop.xlane.xlu0 %1190
        %1192 = vadd.xlane.f32.xlu0 %v1161
        %v1193 = vpop.xlane.xlu0 %1192
        %v1194 = vmax.f32 %v1163, %v1171
        %v1195 = vmax.f32 %v1165, %v1173
        %v1196 = vmax.f32 %v1167, %v1175
        %v1197 = vmax.f32 %v1169, %v1177
        %v1198 = vmax.f32 %v1194, %v1179
        %v1199 = vmax.f32 %v1195, %v1181
        %v1200 = vmax.f32 %v1196, %v1183
        %v1201 = vmax.f32 %v1197, %v1185
        %v1202 = vmax.f32 %v1198, %v1187
        %v1203 = vmax.f32 %v1199, %v1189
        %v1204 = vmax.f32 %v1200, %v1191
        %v1205 = vmax.f32 %v1201, %v1193
        %v1206 = vmax.f32 %v1202, %v1203
        %v1207 = vmax.f32 %v1204, %v1205
        %v1208 = vmax.f32 %v1206, %v1207
        %v1209 = vrot.slane %v1208, 4
        %v1210 = vmax.f32 %v1208, %v1209
        %v1211 = vrot.slane %v1210, 2
        %v1212 = vmax.f32 %v1210, %v1211
        %v1213 = vrot.slane %v1212, 1
        %v1214 = vmax.f32 %v1212, %v1213
        %s1215 = vtos %v1214
        %v1216 = vstv %s1215
        %v1217 = vsub.f32 %v1163, %v1216
        %v1218 = vsub.f32 %v1165, %v1216
        %v1219 = vsub.f32 %v1167, %v1216
        %v1220 = vsub.f32 %v1169, %v1216
        %v1221 = vsub.f32 %v1171, %v1216
        %v1222 = vsub.f32 %v1173, %v1216
        %v1223 = vsub.f32 %v1175, %v1216
        %v1224 = vsub.f32 %v1177, %v1216
        %v1225 = vsub.f32 %v1179, %v1216
        %v1226 = vsub.f32 %v1181, %v1216
        %v1227 = vsub.f32 %v1183, %v1216
        %v1228 = vsub.f32 %v1185, %v1216
        %v1229 = vsub.f32 %v1187, %v1216
        %v1230 = vsub.f32 %v1189, %v1216
        %v1231 = vsub.f32 %v1191, %v1216
        %v1232 = vsub.f32 %v1193, %v1216
        %v1233 = vmul.f32 %v1217, 1.442695
        %v1234 = vpow.pop %v1233
        %v1235 = vmul.f32 %v1218, 1.442695
        %v1236 = vpow.pop %v1235
        %v1237 = vmul.f32 %v1219, 1.442695
        %v1238 = vpow.pop %v1237
        %v1239 = vmul.f32 %v1220, 1.442695
        %v1240 = vpow.pop %v1239
        %v1241 = vmul.f32 %v1221, 1.442695
        %v1242 = vpow.pop %v1241
        %v1243 = vmul.f32 %v1222, 1.442695
        %v1244 = vpow.pop %v1243
        %v1245 = vmul.f32 %v1223, 1.442695
        %v1246 = vpow.pop %v1245
        %v1247 = vmul.f32 %v1224, 1.442695
        %v1248 = vpow.pop %v1247
        %v1249 = vmul.f32 %v1225, 1.442695
        %v1250 = vpow.pop %v1249
        %v1251 = vmul.f32 %v1226, 1.442695
        %v1252 = vpow.pop %v1251
        %v1253 = vmul.f32 %v1227, 1.442695
        %v1254 = vpow.pop %v1253
        %v1255 = vmul.f32 %v1228, 1.442695
        %v1256 = vpow.pop %v1255
        %v1257 = vmul.f32 %v1229, 1.442695
        %v1258 = vpow.pop %v1257
        %v1259 = vmul.f32 %v1230, 1.442695
        %v1260 = vpow.pop %v1259
        %v1261 = vmul.f32 %v1231, 1.442695
        %v1262 = vpow.pop %v1261
        %v1263 = vmul.f32 %v1232, 1.442695
        %v1264 = vpow.pop %v1263
        %v1265 = vmul.f32 %v796, %v925
        %v1266 = vmul.f32 %v798, %v927
        %v1267 = vmul.f32 %v801, %v930
        %v1268 = vmul.f32 %v803, %v932
        %v1269 = vmul.f32 %v806, %v935
        %v1270 = vmul.f32 %v808, %v937
        %v1271 = vmul.f32 %v811, %v940
        %v1272 = vmul.f32 %v813, %v942
        %v1273 = vmul.f32 %v816, %v945
        %v1274 = vmul.f32 %v818, %v947
        %v1275 = vmul.f32 %v821, %v950
        %v1276 = vmul.f32 %v823, %v952
        %v1277 = vmul.f32 %v826, %v955
        %v1278 = vmul.f32 %v828, %v957
        %v1279 = vmul.f32 %v831, %v960
        %v1280 = vmul.f32 %v833, %v962
        %1281 = vadd.xlane.f32.xlu0 %v1265
        %v1282 = vpop.xlane.xlu0 %1281
        %1283 = vadd.xlane.f32.xlu0 %v1266
        %v1284 = vpop.xlane.xlu0 %1283
        %1285 = vadd.xlane.f32.xlu0 %v1267
        %v1286 = vpop.xlane.xlu0 %1285
        %1287 = vadd.xlane.f32.xlu0 %v1268
        %v1288 = vpop.xlane.xlu0 %1287
        %1289 = vadd.xlane.f32.xlu0 %v1269
        %v1290 = vpop.xlane.xlu0 %1289
        %1291 = vadd.xlane.f32.xlu0 %v1270
        %v1292 = vpop.xlane.xlu0 %1291
        %1293 = vadd.xlane.f32.xlu0 %v1271
        %v1294 = vpop.xlane.xlu0 %1293
        %1295 = vadd.xlane.f32.xlu0 %v1272
        %v1296 = vpop.xlane.xlu0 %1295
        %1297 = vadd.xlane.f32.xlu0 %v1273
        %v1298 = vpop.xlane.xlu0 %1297
        %1299 = vadd.xlane.f32.xlu0 %v1274
        %v1300 = vpop.xlane.xlu0 %1299
        %1301 = vadd.xlane.f32.xlu0 %v1275
        %v1302 = vpop.xlane.xlu0 %1301
        %1303 = vadd.xlane.f32.xlu0 %v1276
        %v1304 = vpop.xlane.xlu0 %1303
        %1305 = vadd.xlane.f32.xlu0 %v1277
        %v1306 = vpop.xlane.xlu0 %1305
        %1307 = vadd.xlane.f32.xlu0 %v1278
        %v1308 = vpop.xlane.xlu0 %1307
        %1309 = vadd.xlane.f32.xlu0 %v1279
        %v1310 = vpop.xlane.xlu0 %1309
        %1311 = vadd.xlane.f32.xlu0 %v1280
        %v1312 = vpop.xlane.xlu0 %1311
        %v1313 = vmax.f32 %v1282, %v1290
        %v1314 = vmax.f32 %v1284, %v1292
        %v1315 = vmax.f32 %v1286, %v1294
        %v1316 = vmax.f32 %v1288, %v1296
        %v1317 = vmax.f32 %v1313, %v1298
        %v1318 = vmax.f32 %v1314, %v1300
        %v1319 = vmax.f32 %v1315, %v1302
        %v1320 = vmax.f32 %v1316, %v1304
        %v1321 = vmax.f32 %v1317, %v1306
        %v1322 = vmax.f32 %v1318, %v1308
        %v1323 = vmax.f32 %v1319, %v1310
        %v1324 = vmax.f32 %v1320, %v1312
        %v1325 = vmax.f32 %v1321, %v1322
        %v1326 = vmax.f32 %v1323, %v1324
        %v1327 = vmax.f32 %v1325, %v1326
        %v1328 = vrot.slane %v1327, 4
        %v1329 = vmax.f32 %v1327, %v1328
        %v1330 = vrot.slane %v1329, 2
        %v1331 = vmax.f32 %v1329, %v1330
        %v1332 = vrot.slane %v1331, 1
        %v1333 = vmax.f32 %v1331, %v1332
        %s1334 = vtos %v1333
        %v1335 = vstv %s1334
        %v1336 = vsub.f32 %v1282, %v1335
        %v1337 = vsub.f32 %v1284, %v1335
        %v1338 = vsub.f32 %v1286, %v1335
        %v1339 = vsub.f32 %v1288, %v1335
        %v1340 = vsub.f32 %v1290, %v1335
        %v1341 = vsub.f32 %v1292, %v1335
        %v1342 = vsub.f32 %v1294, %v1335
        %v1343 = vsub.f32 %v1296, %v1335
        %v1344 = vsub.f32 %v1298, %v1335
        %v1345 = vsub.f32 %v1300, %v1335
        %v1346 = vsub.f32 %v1302, %v1335
        %v1347 = vsub.f32 %v1304, %v1335
        %v1348 = vsub.f32 %v1306, %v1335
        %v1349 = vsub.f32 %v1308, %v1335
        %v1350 = vsub.f32 %v1310, %v1335
        %v1351 = vsub.f32 %v1312, %v1335
        %v1352 = vmul.f32 %v1336, 1.442695
        %v1353 = vpow.pop %v1352
        %v1354 = vmul.f32 %v1337, 1.442695
        %v1355 = vpow.pop %v1354
        %v1356 = vmul.f32 %v1338, 1.442695
        %v1357 = vpow.pop %v1356
        %v1358 = vmul.f32 %v1339, 1.442695
        %v1359 = vpow.pop %v1358
        %v1360 = vmul.f32 %v1340, 1.442695
        %v1361 = vpow.pop %v1360
        %v1362 = vmul.f32 %v1341, 1.442695
        %v1363 = vpow.pop %v1362
        %v1364 = vmul.f32 %v1342, 1.442695
        %v1365 = vpow.pop %v1364
        %v1366 = vmul.f32 %v1343, 1.442695
        %v1367 = vpow.pop %v1366
        %v1368 = vmul.f32 %v1344, 1.442695
        %v1369 = vpow.pop %v1368
        %v1370 = vmul.f32 %v1345, 1.442695
        %v1371 = vpow.pop %v1370
        %v1372 = vmul.f32 %v1346, 1.442695
        %v1373 = vpow.pop %v1372
        %v1374 = vmul.f32 %v1347, 1.442695
        %v1375 = vpow.pop %v1374
        %v1376 = vmul.f32 %v1348, 1.442695
        %v1377 = vpow.pop %v1376
        %v1378 = vmul.f32 %v1349, 1.442695
        %v1379 = vpow.pop %v1378
        %v1380 = vmul.f32 %v1350, 1.442695
        %v1381 = vpow.pop %v1380
        %v1382 = vmul.f32 %v1351, 1.442695
        %v1383 = vpow.pop %v1382
        %v1384 = vmul.f32 %v1098, %v925
        %v1385 = vmul.f32 %v1099, %v927
        %v1386 = vmul.f32 %v1100, %v930
        %v1387 = vmul.f32 %v1101, %v932
        %v1388 = vmul.f32 %v1102, %v935
        %v1389 = vmul.f32 %v1103, %v937
        %v1390 = vmul.f32 %v1104, %v940
        %v1391 = vmul.f32 %v1105, %v942
        %v1392 = vmul.f32 %v1106, %v945
        %v1393 = vmul.f32 %v1107, %v947
        %v1394 = vmul.f32 %v1108, %v950
        %v1395 = vmul.f32 %v1109, %v952
        %v1396 = vmul.f32 %v1110, %v955
        %v1397 = vmul.f32 %v1111, %v957
        %v1398 = vmul.f32 %v1112, %v960
        %v1399 = vmul.f32 %v1113, %v962
        %1400 = vadd.xlane.f32.xlu0 %v1384
        %v1401 = vpop.xlane.xlu0 %1400
        %1402 = vadd.xlane.f32.xlu0 %v1385
        %v1403 = vpop.xlane.xlu0 %1402
        %1404 = vadd.xlane.f32.xlu0 %v1386
        %v1405 = vpop.xlane.xlu0 %1404
        %1406 = vadd.xlane.f32.xlu0 %v1387
        %v1407 = vpop.xlane.xlu0 %1406
        %1408 = vadd.xlane.f32.xlu0 %v1388
        %v1409 = vpop.xlane.xlu0 %1408
        %1410 = vadd.xlane.f32.xlu0 %v1389
        %v1411 = vpop.xlane.xlu0 %1410
        %1412 = vadd.xlane.f32.xlu0 %v1390
        %v1413 = vpop.xlane.xlu0 %1412
        %1414 = vadd.xlane.f32.xlu0 %v1391
        %v1415 = vpop.xlane.xlu0 %1414
        %1416 = vadd.xlane.f32.xlu0 %v1392
        %v1417 = vpop.xlane.xlu0 %1416
        %1418 = vadd.xlane.f32.xlu0 %v1393
        %v1419 = vpop.xlane.xlu0 %1418
        %1420 = vadd.xlane.f32.xlu0 %v1394
        %v1421 = vpop.xlane.xlu0 %1420
        %1422 = vadd.xlane.f32.xlu0 %v1395
        %v1423 = vpop.xlane.xlu0 %1422
        %1424 = vadd.xlane.f32.xlu0 %v1396
        %v1425 = vpop.xlane.xlu0 %1424
        %1426 = vadd.xlane.f32.xlu0 %v1397
        %v1427 = vpop.xlane.xlu0 %1426
        %1428 = vadd.xlane.f32.xlu0 %v1398
        %v1429 = vpop.xlane.xlu0 %1428
        %1430 = vadd.xlane.f32.xlu0 %v1399
        %v1431 = vpop.xlane.xlu0 %1430
        %v1432 = vmax.f32 %v1401, %v1409
        %v1433 = vmax.f32 %v1403, %v1411
        %v1434 = vmax.f32 %v1405, %v1413
        %v1435 = vmax.f32 %v1407, %v1415
        %v1436 = vmax.f32 %v1432, %v1417
        %v1437 = vmax.f32 %v1433, %v1419
        %v1438 = vmax.f32 %v1434, %v1421
        %v1439 = vmax.f32 %v1435, %v1423
        %v1440 = vmax.f32 %v1436, %v1425
        %v1441 = vmax.f32 %v1437, %v1427
        %v1442 = vmax.f32 %v1438, %v1429
        %v1443 = vmax.f32 %v1439, %v1431
        %v1444 = vmax.f32 %v1440, %v1441
        %v1445 = vmax.f32 %v1442, %v1443
        %v1446 = vmax.f32 %v1444, %v1445
        %v1447 = vrot.slane %v1446, 4
        %v1448 = vmax.f32 %v1446, %v1447
        %v1449 = vrot.slane %v1448, 2
        %v1450 = vmax.f32 %v1448, %v1449
        %v1451 = vrot.slane %v1450, 1
        %v1452 = vmax.f32 %v1450, %v1451
        %s1453 = vtos %v1452
        %v1454 = vstv %s1453
        %v1455 = vsub.f32 %v1401, %v1454
        %v1456 = vsub.f32 %v1403, %v1454
        %v1457 = vsub.f32 %v1405, %v1454
        %v1458 = vsub.f32 %v1407, %v1454
        %v1459 = vsub.f32 %v1409, %v1454
        %v1460 = vsub.f32 %v1411, %v1454
        %v1461 = vsub.f32 %v1413, %v1454
        %v1462 = vsub.f32 %v1415, %v1454
        %v1463 = vsub.f32 %v1417, %v1454
        %v1464 = vsub.f32 %v1419, %v1454
        %v1465 = vsub.f32 %v1421, %v1454
        %v1466 = vsub.f32 %v1423, %v1454
        %v1467 = vsub.f32 %v1425, %v1454
        %v1468 = vsub.f32 %v1427, %v1454
        %v1469 = vsub.f32 %v1429, %v1454
        %v1470 = vsub.f32 %v1431, %v1454
        %v1471 = vmul.f32 %v1455, 1.442695
        %v1472 = vpow.pop %v1471
        %v1473 = vmul.f32 %v1456, 1.442695
        %v1474 = vpow.pop %v1473
        %v1475 = vmul.f32 %v1457, 1.442695
        %v1476 = vpow.pop %v1475
        %v1477 = vmul.f32 %v1458, 1.442695
        %v1478 = vpow.pop %v1477
        %v1479 = vmul.f32 %v1459, 1.442695
        %v1480 = vpow.pop %v1479
        %v1481 = vmul.f32 %v1460, 1.442695
        %v1482 = vpow.pop %v1481
        %v1483 = vmul.f32 %v1461, 1.442695
        %v1484 = vpow.pop %v1483
        %v1485 = vmul.f32 %v1462, 1.442695
        %v1486 = vpow.pop %v1485
        %v1487 = vmul.f32 %v1463, 1.442695
        %v1488 = vpow.pop %v1487
        %v1489 = vmul.f32 %v1464, 1.442695
        %v1490 = vpow.pop %v1489
        %v1491 = vmul.f32 %v1465, 1.442695
        %v1492 = vpow.pop %v1491
        %v1493 = vmul.f32 %v1466, 1.442695
        %v1494 = vpow.pop %v1493
        %v1495 = vmul.f32 %v1467, 1.442695
        %v1496 = vpow.pop %v1495
        %v1497 = vmul.f32 %v1468, 1.442695
        %v1498 = vpow.pop %v1497
        %v1499 = vmul.f32 %v1469, 1.442695
        %v1500 = vpow.pop %v1499
        %v1501 = vmul.f32 %v1470, 1.442695
        %v1502 = vpow.pop %v1501
        %v1503 = vpack.c.bf16 %v1061, %v1059
        %v1504 = vpack.c.bf16 %v1066, %v1064
        %v1505 = vpack.c.bf16 %v1071, %v1069
        %v1506 = vpack.c.bf16 %v1076, %v1074
        %v1507 = vpack.c.bf16 %v1081, %v1079
        %v1508 = vpack.c.bf16 %v1086, %v1084
        %v1509 = vpack.c.bf16 %v1091, %v1089
        %v1510 = vpack.c.bf16 %v1096, %v1094
        %v1511 = vld [vmem:[%s579] sm:$0xff]
        %v1512 = vld [vmem:[%s579 + $0x8] sm:$0xff]
        %v1513 = vld [vmem:[%s579 + $0x10] sm:$0xff]
        %v1514 = vld [vmem:[%s579 + $0x18] sm:$0xff]
        %v1515 = vld [vmem:[%s579 + $0x20] sm:$0xff]
        %v1516 = vld [vmem:[%s579 + $0x28] sm:$0xff]
        %v1517 = vld [vmem:[%s579 + $0x30] sm:$0xff]
        %v1518 = vld [vmem:[%s579 + $0x38] sm:$0xff]
        %v1519 = vld [vmem:[%s579 + $0x40] sm:$0xff]
        %v1520 = vld [vmem:[%s579 + $0x48] sm:$0xff]
        %v1521 = vld [vmem:[%s579 + $0x50] sm:$0xff]
        %v1522 = vld [vmem:[%s579 + $0x58] sm:$0xff]
        %v1523 = vld [vmem:[%s579 + $0x60] sm:$0xff]
        %v1524 = vld [vmem:[%s579 + $0x68] sm:$0xff]
        %v1525 = vld [vmem:[%s579 + $0x70] sm:$0xff]
        %v1526 = vld [vmem:[%s579 + $0x78] sm:$0xff]
        %v1527 = vld [vmem:[%s651] sm:$0x3]
        %v1529 = vperm.slane %v1527, 0
        %v1530 = vperm.slane %v1527, 1
        %v1549 = vunpack.c.l.b16 %v1511
        %v1550 = vunpack.c.h.b16 %v1511
        %v1551 = vunpack.c.l.b16 %v1512
        %v1552 = vunpack.c.h.b16 %v1512
        %v1553 = vunpack.c.l.b16 %v1513
        %v1554 = vunpack.c.h.b16 %v1513
        %v1555 = vunpack.c.l.b16 %v1514
        %v1556 = vunpack.c.h.b16 %v1514
        %v1557 = vunpack.c.l.b16 %v1515
        %v1558 = vunpack.c.h.b16 %v1515
        %v1559 = vunpack.c.l.b16 %v1516
        %v1560 = vunpack.c.h.b16 %v1516
        %v1561 = vunpack.c.l.b16 %v1517
        %v1562 = vunpack.c.h.b16 %v1517
        %v1563 = vunpack.c.l.b16 %v1518
        %v1564 = vunpack.c.h.b16 %v1518
        %v1565 = vunpack.c.l.b16 %v1519
        %v1566 = vunpack.c.h.b16 %v1519
        %v1567 = vunpack.c.l.b16 %v1520
        %v1568 = vunpack.c.h.b16 %v1520
        %v1569 = vunpack.c.l.b16 %v1521
        %v1570 = vunpack.c.h.b16 %v1521
        %v1571 = vunpack.c.l.b16 %v1522
        %v1572 = vunpack.c.h.b16 %v1522
        %v1573 = vunpack.c.l.b16 %v1523
        %v1574 = vunpack.c.h.b16 %v1523
        %v1575 = vunpack.c.l.b16 %v1524
        %v1576 = vunpack.c.h.b16 %v1524
        %v1577 = vunpack.c.l.b16 %v1525
        %v1578 = vunpack.c.h.b16 %v1525
        %v1579 = vunpack.c.l.b16 %v1526
        %v1580 = vunpack.c.h.b16 %v1526
        %v1581 = vpack.c.b16 %v1551, %v1549
        %v1582 = vpack.c.b16 %v1552, %v1550
        %v1583 = vpack.c.b16 %v1555, %v1553
        %v1584 = vpack.c.b16 %v1556, %v1554
        %v1585 = vpack.c.b16 %v1559, %v1557
        %v1586 = vpack.c.b16 %v1560, %v1558
        %v1587 = vpack.c.b16 %v1563, %v1561
        %v1588 = vpack.c.b16 %v1564, %v1562
        %v1589 = vpack.c.b16 %v1567, %v1565
        %v1590 = vpack.c.b16 %v1568, %v1566
        %v1591 = vpack.c.b16 %v1571, %v1569
        %v1592 = vpack.c.b16 %v1572, %v1570
        %v1593 = vpack.c.b16 %v1575, %v1573
        %v1594 = vpack.c.b16 %v1576, %v1574
        %v1595 = vpack.c.b16 %v1579, %v1577
        %v1596 = vpack.c.b16 %v1580, %v1578
        %1613 = vmatpush.bf16.msra.mxu0 %v1595
        %1614 = vmatpush.bf16.msra.mxu0 %v1593
        %1615 = vmatpush.bf16.msra.mxu0 %v1591
        %1616 = vmatpush.bf16.msra.mxu0 %v1589
        %1617 = vmatpush.bf16.msra.mxu0 %v1587
        %1618 = vmatpush.bf16.msra.mxu0 %v1585
        %1619 = vmatpush.bf16.msra.mxu0 %v1583
        %1620 = vmatpush.bf16.msra.mxu0 %v1581
        %1621 = vmatmul.bf16.gmra.mxu0 %v1503
        %v1622 = vpop.f32.mrf.mxu0
        %v1623 = vadd.f32 %v1529, %v1622
        %v1624 = vpop.f32.mrf.mxu0
        %v1625 = vadd.f32 %v1529, %v1624
        %1626 = vmatmul.bf16.gmra.mxu0 %v1504
        %v1627 = vpop.f32.mrf.mxu0
        %v1628 = vadd.f32 %v1529, %v1627
        %v1629 = vpop.f32.mrf.mxu0
        %v1630 = vadd.f32 %v1529, %v1629
        %1631 = vmatmul.bf16.gmra.mxu0 %v1505
        %v1632 = vpop.f32.mrf.mxu0
        %v1633 = vadd.f32 %v1529, %v1632
        %v1634 = vpop.f32.mrf.mxu0
        %v1635 = vadd.f32 %v1529, %v1634
        %1636 = vmatmul.bf16.gmra.mxu0 %v1506
        %v1637 = vpop.f32.mrf.mxu0
        %v1638 = vadd.f32 %v1529, %v1637
        %v1639 = vpop.f32.mrf.mxu0
        %v1640 = vadd.f32 %v1529, %v1639
        %1641 = vmatmul.bf16.gmra.mxu0 %v1507
        %v1642 = vpop.f32.mrf.mxu0
        %v1643 = vadd.f32 %v1529, %v1642
        %v1644 = vpop.f32.mrf.mxu0
        %v1645 = vadd.f32 %v1529, %v1644
        %1646 = vmatmul.bf16.gmra.mxu0 %v1508
        %v1647 = vpop.f32.mrf.mxu0
        %v1648 = vadd.f32 %v1529, %v1647
        %v1649 = vpop.f32.mrf.mxu0
        %v1650 = vadd.f32 %v1529, %v1649
        %1651 = vmatmul.bf16.gmra.mxu0 %v1509
        %v1652 = vpop.f32.mrf.mxu0
        %v1653 = vadd.f32 %v1529, %v1652
        %v1654 = vpop.f32.mrf.mxu0
        %v1655 = vadd.f32 %v1529, %v1654
        %1656 = vmatmul.bf16.gmra.mxu0 %v1510
        %v1657 = vpop.f32.mrf.mxu0
        %v1658 = vadd.f32 %v1529, %v1657
        %v1659 = vpop.f32.mrf.mxu0
        %v1660 = vadd.f32 %v1529, %v1659
        %1661 = vdwg.mxu0
        %1662 = vmatpush.bf16.msra.mxu0 %v1596
        %1663 = vmatpush.bf16.msra.mxu0 %v1594
        %1664 = vmatpush.bf16.msra.mxu0 %v1592
        %1665 = vmatpush.bf16.msra.mxu0 %v1590
        %1666 = vmatpush.bf16.msra.mxu0 %v1588
        %1667 = vmatpush.bf16.msra.mxu0 %v1586
        %1668 = vmatpush.bf16.msra.mxu0 %v1584
        %1669 = vmatpush.bf16.msra.mxu0 %v1582
        %1670 = vmatmul.bf16.gmra.mxu0 %v1503
        %v1671 = vpop.f32.mrf.mxu0
        %v1672 = vadd.f32 %v1530, %v1671
        %v1673 = vpop.f32.mrf.mxu0
        %v1674 = vadd.f32 %v1530, %v1673
        %1675 = vmatmul.bf16.gmra.mxu0 %v1504
        %v1676 = vpop.f32.mrf.mxu0
        %v1677 = vadd.f32 %v1530, %v1676
        %v1678 = vpop.f32.mrf.mxu0
        %v1679 = vadd.f32 %v1530, %v1678
        %1680 = vmatmul.bf16.gmra.mxu0 %v1505
        %v1681 = vpop.f32.mrf.mxu0
        %v1682 = vadd.f32 %v1530, %v1681
        %v1683 = vpop.f32.mrf.mxu0
        %v1684 = vadd.f32 %v1530, %v1683
        %1685 = vmatmul.bf16.gmra.mxu0 %v1506
        %v1686 = vpop.f32.mrf.mxu0
        %v1687 = vadd.f32 %v1530, %v1686
        %v1688 = vpop.f32.mrf.mxu0
        %v1689 = vadd.f32 %v1530, %v1688
        %1690 = vmatmul.bf16.gmra.mxu0 %v1507
        %v1691 = vpop.f32.mrf.mxu0
        %v1692 = vadd.f32 %v1530, %v1691
        %v1693 = vpop.f32.mrf.mxu0
        %v1694 = vadd.f32 %v1530, %v1693
        %1695 = vmatmul.bf16.gmra.mxu0 %v1508
        %v1696 = vpop.f32.mrf.mxu0
        %v1697 = vadd.f32 %v1530, %v1696
        %v1698 = vpop.f32.mrf.mxu0
        %v1699 = vadd.f32 %v1530, %v1698
        %1700 = vmatmul.bf16.gmra.mxu0 %v1509
        %v1701 = vpop.f32.mrf.mxu0
        %v1702 = vadd.f32 %v1530, %v1701
        %v1703 = vpop.f32.mrf.mxu0
        %v1704 = vadd.f32 %v1530, %v1703
        %1705 = vmatmul.bf16.gmra.mxu0 %v1510
        %v1706 = vpop.f32.mrf.mxu0
        %v1707 = vadd.f32 %v1530, %v1706
        %v1708 = vpop.f32.mrf.mxu0
        %v1709 = vadd.f32 %v1530, %v1708
        %1710 = vdwg.mxu0
        %1712 = vset.pattern.permute.xlu0 0
        %1713 = vperm.xlu0 %1712, %v1130
        %v1714 = vpop.permute.xlu0 %1713
        %1717 = vset.pattern.permute.xlu0 0
        %1718 = vperm.xlu0 %1717, %v1131
        %v1719 = vpop.permute.xlu0 %1718
        %1722 = vset.pattern.permute.xlu0 0
        %1723 = vperm.xlu0 %1722, %v1132
        %v1724 = vpop.permute.xlu0 %1723
        %1727 = vset.pattern.permute.xlu0 0
        %1728 = vperm.xlu0 %1727, %v1133
        %v1729 = vpop.permute.xlu0 %1728
        %1732 = vset.pattern.permute.xlu0 0
        %1733 = vperm.xlu0 %1732, %v1134
        %v1734 = vpop.permute.xlu0 %1733
        %1737 = vset.pattern.permute.xlu0 0
        %1738 = vperm.xlu0 %1737, %v1135
        %v1739 = vpop.permute.xlu0 %1738
        %1742 = vset.pattern.permute.xlu0 0
        %1743 = vperm.xlu0 %1742, %v1136
        %v1744 = vpop.permute.xlu0 %1743
        %1747 = vset.pattern.permute.xlu0 0
        %1748 = vperm.xlu0 %1747, %v1137
        %v1749 = vpop.permute.xlu0 %1748
        %1752 = vset.pattern.permute.xlu0 0
        %1753 = vperm.xlu0 %1752, %v1138
        %v1754 = vpop.permute.xlu0 %1753
        %1757 = vset.pattern.permute.xlu0 0
        %1758 = vperm.xlu0 %1757, %v1139
        %v1759 = vpop.permute.xlu0 %1758
        %1762 = vset.pattern.permute.xlu0 0
        %1763 = vperm.xlu0 %1762, %v1140
        %v1764 = vpop.permute.xlu0 %1763
        %1767 = vset.pattern.permute.xlu0 0
        %1768 = vperm.xlu0 %1767, %v1141
        %v1769 = vpop.permute.xlu0 %1768
        %1772 = vset.pattern.permute.xlu0 0
        %1773 = vperm.xlu0 %1772, %v1142
        %v1774 = vpop.permute.xlu0 %1773
        %1777 = vset.pattern.permute.xlu0 0
        %1778 = vperm.xlu0 %1777, %v1143
        %v1779 = vpop.permute.xlu0 %1778
        %1782 = vset.pattern.permute.xlu0 0
        %1783 = vperm.xlu0 %1782, %v1144
        %v1784 = vpop.permute.xlu0 %1783
        %1787 = vset.pattern.permute.xlu0 0
        %1788 = vperm.xlu0 %1787, %v1145
        %v1789 = vpop.permute.xlu0 %1788
        %v1791 = vmul.f32 %v1714, %v1623
        %v1792 = vmul.f32 %v1719, %v1625
        %v1793 = vmul.f32 %v1724, %v1628
        %v1794 = vmul.f32 %v1729, %v1630
        %v1795 = vmul.f32 %v1734, %v1633
        %v1796 = vmul.f32 %v1739, %v1635
        %v1797 = vmul.f32 %v1744, %v1638
        %v1798 = vmul.f32 %v1749, %v1640
        %v1799 = vmul.f32 %v1754, %v1643
        %v1800 = vmul.f32 %v1759, %v1645
        %v1801 = vmul.f32 %v1764, %v1648
        %v1802 = vmul.f32 %v1769, %v1650
        %v1803 = vmul.f32 %v1774, %v1653
        %v1804 = vmul.f32 %v1779, %v1655
        %v1805 = vmul.f32 %v1784, %v1658
        %v1806 = vmul.f32 %v1789, %v1660
        %1808 = vset.pattern.permute.xlu0 0
        %1809 = vperm.xlu0 %1808, %v1114
        %v1810 = vpop.permute.xlu0 %1809
        %1813 = vset.pattern.permute.xlu0 0
        %1814 = vperm.xlu0 %1813, %v1115
        %v1815 = vpop.permute.xlu0 %1814
        %1818 = vset.pattern.permute.xlu0 0
        %1819 = vperm.xlu0 %1818, %v1116
        %v1820 = vpop.permute.xlu0 %1819
        %1823 = vset.pattern.permute.xlu0 0
        %1824 = vperm.xlu0 %1823, %v1117
        %v1825 = vpop.permute.xlu0 %1824
        %1828 = vset.pattern.permute.xlu0 0
        %1829 = vperm.xlu0 %1828, %v1118
        %v1830 = vpop.permute.xlu0 %1829
        %1833 = vset.pattern.permute.xlu0 0
        %1834 = vperm.xlu0 %1833, %v1119
        %v1835 = vpop.permute.xlu0 %1834
        %1838 = vset.pattern.permute.xlu0 0
        %1839 = vperm.xlu0 %1838, %v1120
        %v1840 = vpop.permute.xlu0 %1839
        %1843 = vset.pattern.permute.xlu0 0
        %1844 = vperm.xlu0 %1843, %v1121
        %v1845 = vpop.permute.xlu0 %1844
        %1848 = vset.pattern.permute.xlu0 0
        %1849 = vperm.xlu0 %1848, %v1122
        %v1850 = vpop.permute.xlu0 %1849
        %1853 = vset.pattern.permute.xlu0 0
        %1854 = vperm.xlu0 %1853, %v1123
        %v1855 = vpop.permute.xlu0 %1854
        %1858 = vset.pattern.permute.xlu0 0
        %1859 = vperm.xlu0 %1858, %v1124
        %v1860 = vpop.permute.xlu0 %1859
        %1863 = vset.pattern.permute.xlu0 0
        %1864 = vperm.xlu0 %1863, %v1125
        %v1865 = vpop.permute.xlu0 %1864
        %1868 = vset.pattern.permute.xlu0 0
        %1869 = vperm.xlu0 %1868, %v1126
        %v1870 = vpop.permute.xlu0 %1869
        %1873 = vset.pattern.permute.xlu0 0
        %1874 = vperm.xlu0 %1873, %v1127
        %v1875 = vpop.permute.xlu0 %1874
        %1878 = vset.pattern.permute.xlu0 0
        %1879 = vperm.xlu0 %1878, %v1128
        %v1880 = vpop.permute.xlu0 %1879
        %1883 = vset.pattern.permute.xlu0 0
        %1884 = vperm.xlu0 %1883, %v1129
        %v1885 = vpop.permute.xlu0 %1884
        %v1887 = vmul.f32 %v1810, %v1672
        %v1888 = vmul.f32 %v1815, %v1674
        %v1889 = vmul.f32 %v1820, %v1677
        %v1890 = vmul.f32 %v1825, %v1679
        %v1891 = vmul.f32 %v1830, %v1682
        %v1892 = vmul.f32 %v1835, %v1684
        %v1893 = vmul.f32 %v1840, %v1687
        %v1894 = vmul.f32 %v1845, %v1689
        %v1895 = vmul.f32 %v1850, %v1692
        %v1896 = vmul.f32 %v1855, %v1694
        %v1897 = vmul.f32 %v1860, %v1697
        %v1898 = vmul.f32 %v1865, %v1699
        %v1899 = vmul.f32 %v1870, %v1702
        %v1900 = vmul.f32 %v1875, %v1704
        %v1901 = vmul.f32 %v1880, %v1707
        %v1902 = vmul.f32 %v1885, %v1709
        %v1903 = vadd.f32 %v1791, %v1887
        %v1904 = vadd.f32 %v1792, %v1888
        %v1905 = vadd.f32 %v1793, %v1889
        %v1906 = vadd.f32 %v1794, %v1890
        %v1907 = vadd.f32 %v1795, %v1891
        %v1908 = vadd.f32 %v1796, %v1892
        %v1909 = vadd.f32 %v1797, %v1893
        %v1910 = vadd.f32 %v1798, %v1894
        %v1911 = vadd.f32 %v1799, %v1895
        %v1912 = vadd.f32 %v1800, %v1896
        %v1913 = vadd.f32 %v1801, %v1897
        %v1914 = vadd.f32 %v1802, %v1898
        %v1915 = vadd.f32 %v1803, %v1899
        %v1916 = vadd.f32 %v1804, %v1900
        %v1917 = vadd.f32 %v1805, %v1901
        %v1918 = vadd.f32 %v1806, %v1902
        %v1919 = vpack.c.bf16 %v798, %v796
        %v1920 = vpack.c.bf16 %v803, %v801
        %v1921 = vpack.c.bf16 %v808, %v806
        %v1922 = vpack.c.bf16 %v813, %v811
        %v1923 = vpack.c.bf16 %v818, %v816
        %v1924 = vpack.c.bf16 %v823, %v821
        %v1925 = vpack.c.bf16 %v828, %v826
        %v1926 = vpack.c.bf16 %v833, %v831
        %s1927 = scalar_lea.vmem %s579, 128 [#allocation3]
        %v1928 = vld [vmem:[%s1927] sm:$0xff]
        %v1929 = vld [vmem:[%s1927 + $0x8] sm:$0xff]
        %v1930 = vld [vmem:[%s1927 + $0x10] sm:$0xff]
        %v1931 = vld [vmem:[%s1927 + $0x18] sm:$0xff]
        %v1932 = vld [vmem:[%s1927 + $0x20] sm:$0xff]
        %v1933 = vld [vmem:[%s1927 + $0x28] sm:$0xff]
        %v1934 = vld [vmem:[%s1927 + $0x30] sm:$0xff]
        %v1935 = vld [vmem:[%s1927 + $0x38] sm:$0xff]
        %v1936 = vld [vmem:[%s1927 + $0x40] sm:$0xff]
        %v1937 = vld [vmem:[%s1927 + $0x48] sm:$0xff]
        %v1938 = vld [vmem:[%s1927 + $0x50] sm:$0xff]
        %v1939 = vld [vmem:[%s1927 + $0x58] sm:$0xff]
        %v1940 = vld [vmem:[%s1927 + $0x60] sm:$0xff]
        %v1941 = vld [vmem:[%s1927 + $0x68] sm:$0xff]
        %v1942 = vld [vmem:[%s1927 + $0x70] sm:$0xff]
        %v1943 = vld [vmem:[%s1927 + $0x78] sm:$0xff]
        %s1944 = scalar_lea.vmem %s651, 2
        %v1945 = vld [vmem:[%s1944] sm:$0x3]
        %v1947 = vperm.slane %v1945, 0
        %v1948 = vperm.slane %v1945, 1
        %v1967 = vunpack.c.l.b16 %v1928
        %v1968 = vunpack.c.h.b16 %v1928
        %v1969 = vunpack.c.l.b16 %v1929
        %v1970 = vunpack.c.h.b16 %v1929
        %v1971 = vunpack.c.l.b16 %v1930
        %v1972 = vunpack.c.h.b16 %v1930
        %v1973 = vunpack.c.l.b16 %v1931
        %v1974 = vunpack.c.h.b16 %v1931
        %v1975 = vunpack.c.l.b16 %v1932
        %v1976 = vunpack.c.h.b16 %v1932
        %v1977 = vunpack.c.l.b16 %v1933
        %v1978 = vunpack.c.h.b16 %v1933
        %v1979 = vunpack.c.l.b16 %v1934
        %v1980 = vunpack.c.h.b16 %v1934
        %v1981 = vunpack.c.l.b16 %v1935
        %v1982 = vunpack.c.h.b16 %v1935
        %v1983 = vunpack.c.l.b16 %v1936
        %v1984 = vunpack.c.h.b16 %v1936
        %v1985 = vunpack.c.l.b16 %v1937
        %v1986 = vunpack.c.h.b16 %v1937
        %v1987 = vunpack.c.l.b16 %v1938
        %v1988 = vunpack.c.h.b16 %v1938
        %v1989 = vunpack.c.l.b16 %v1939
        %v1990 = vunpack.c.h.b16 %v1939
        %v1991 = vunpack.c.l.b16 %v1940
        %v1992 = vunpack.c.h.b16 %v1940
        %v1993 = vunpack.c.l.b16 %v1941
        %v1994 = vunpack.c.h.b16 %v1941
        %v1995 = vunpack.c.l.b16 %v1942
        %v1996 = vunpack.c.h.b16 %v1942
        %v1997 = vunpack.c.l.b16 %v1943
        %v1998 = vunpack.c.h.b16 %v1943
        %v1999 = vpack.c.b16 %v1969, %v1967
        %v2000 = vpack.c.b16 %v1970, %v1968
        %v2001 = vpack.c.b16 %v1973, %v1971
        %v2002 = vpack.c.b16 %v1974, %v1972
        %v2003 = vpack.c.b16 %v1977, %v1975
        %v2004 = vpack.c.b16 %v1978, %v1976
        %v2005 = vpack.c.b16 %v1981, %v1979
        %v2006 = vpack.c.b16 %v1982, %v1980
        %v2007 = vpack.c.b16 %v1985, %v1983
        %v2008 = vpack.c.b16 %v1986, %v1984
        %v2009 = vpack.c.b16 %v1989, %v1987
        %v2010 = vpack.c.b16 %v1990, %v1988
        %v2011 = vpack.c.b16 %v1993, %v1991
        %v2012 = vpack.c.b16 %v1994, %v1992
        %v2013 = vpack.c.b16 %v1997, %v1995
        %v2014 = vpack.c.b16 %v1998, %v1996
        %2031 = vmatpush.bf16.msra.mxu0 %v2013
        %2032 = vmatpush.bf16.msra.mxu0 %v2011
        %2033 = vmatpush.bf16.msra.mxu0 %v2009
        %2034 = vmatpush.bf16.msra.mxu0 %v2007
        %2035 = vmatpush.bf16.msra.mxu0 %v2005
        %2036 = vmatpush.bf16.msra.mxu0 %v2003
        %2037 = vmatpush.bf16.msra.mxu0 %v2001
        %2038 = vmatpush.bf16.msra.mxu0 %v1999
        %2039 = vmatmul.bf16.gmra.mxu0 %v1919
        %v2040 = vpop.f32.mrf.mxu0
        %v2041 = vadd.f32 %v1947, %v2040
        %v2042 = vpop.f32.mrf.mxu0
        %v2043 = vadd.f32 %v1947, %v2042
        %2044 = vmatmul.bf16.gmra.mxu0 %v1920
        %v2045 = vpop.f32.mrf.mxu0
        %v2046 = vadd.f32 %v1947, %v2045
        %v2047 = vpop.f32.mrf.mxu0
        %v2048 = vadd.f32 %v1947, %v2047
        %2049 = vmatmul.bf16.gmra.mxu0 %v1921
        %v2050 = vpop.f32.mrf.mxu0
        %v2051 = vadd.f32 %v1947, %v2050
        %v2052 = vpop.f32.mrf.mxu0
        %v2053 = vadd.f32 %v1947, %v2052
        %2054 = vmatmul.bf16.gmra.mxu0 %v1922
        %v2055 = vpop.f32.mrf.mxu0
        %v2056 = vadd.f32 %v1947, %v2055
        %v2057 = vpop.f32.mrf.mxu0
        %v2058 = vadd.f32 %v1947, %v2057
        %2059 = vmatmul.bf16.gmra.mxu0 %v1923
        %v2060 = vpop.f32.mrf.mxu0
        %v2061 = vadd.f32 %v1947, %v2060
        %v2062 = vpop.f32.mrf.mxu0
        %v2063 = vadd.f32 %v1947, %v2062
        %2064 = vmatmul.bf16.gmra.mxu0 %v1924
        %v2065 = vpop.f32.mrf.mxu0
        %v2066 = vadd.f32 %v1947, %v2065
        %v2067 = vpop.f32.mrf.mxu0
        %v2068 = vadd.f32 %v1947, %v2067
        %2069 = vmatmul.bf16.gmra.mxu0 %v1925
        %v2070 = vpop.f32.mrf.mxu0
        %v2071 = vadd.f32 %v1947, %v2070
        %v2072 = vpop.f32.mrf.mxu0
        %v2073 = vadd.f32 %v1947, %v2072
        %2074 = vmatmul.bf16.gmra.mxu0 %v1926
        %v2075 = vpop.f32.mrf.mxu0
        %v2076 = vadd.f32 %v1947, %v2075
        %v2077 = vpop.f32.mrf.mxu0
        %v2078 = vadd.f32 %v1947, %v2077
        %2079 = vdwg.mxu0
        %2080 = vmatpush.bf16.msra.mxu0 %v2014
        %2081 = vmatpush.bf16.msra.mxu0 %v2012
        %2082 = vmatpush.bf16.msra.mxu0 %v2010
        %2083 = vmatpush.bf16.msra.mxu0 %v2008
        %2084 = vmatpush.bf16.msra.mxu0 %v2006
        %2085 = vmatpush.bf16.msra.mxu0 %v2004
        %2086 = vmatpush.bf16.msra.mxu0 %v2002
        %2087 = vmatpush.bf16.msra.mxu0 %v2000
        %2088 = vmatmul.bf16.gmra.mxu0 %v1919
        %v2089 = vpop.f32.mrf.mxu0
        %v2090 = vadd.f32 %v1948, %v2089
        %v2091 = vpop.f32.mrf.mxu0
        %v2092 = vadd.f32 %v1948, %v2091
        %2093 = vmatmul.bf16.gmra.mxu0 %v1920
        %v2094 = vpop.f32.mrf.mxu0
        %v2095 = vadd.f32 %v1948, %v2094
        %v2096 = vpop.f32.mrf.mxu0
        %v2097 = vadd.f32 %v1948, %v2096
        %2098 = vmatmul.bf16.gmra.mxu0 %v1921
        %v2099 = vpop.f32.mrf.mxu0
        %v2100 = vadd.f32 %v1948, %v2099
        %v2101 = vpop.f32.mrf.mxu0
        %v2102 = vadd.f32 %v1948, %v2101
        %2103 = vmatmul.bf16.gmra.mxu0 %v1922
        %v2104 = vpop.f32.mrf.mxu0
        %v2105 = vadd.f32 %v1948, %v2104
        %v2106 = vpop.f32.mrf.mxu0
        %v2107 = vadd.f32 %v1948, %v2106
        %2108 = vmatmul.bf16.gmra.mxu0 %v1923
        %v2109 = vpop.f32.mrf.mxu0
        %v2110 = vadd.f32 %v1948, %v2109
        %v2111 = vpop.f32.mrf.mxu0
        %v2112 = vadd.f32 %v1948, %v2111
        %2113 = vmatmul.bf16.gmra.mxu0 %v1924
        %v2114 = vpop.f32.mrf.mxu0
        %v2115 = vadd.f32 %v1948, %v2114
        %v2116 = vpop.f32.mrf.mxu0
        %v2117 = vadd.f32 %v1948, %v2116
        %2118 = vmatmul.bf16.gmra.mxu0 %v1925
        %v2119 = vpop.f32.mrf.mxu0
        %v2120 = vadd.f32 %v1948, %v2119
        %v2121 = vpop.f32.mrf.mxu0
        %v2122 = vadd.f32 %v1948, %v2121
        %2123 = vmatmul.bf16.gmra.mxu0 %v1926
        %v2124 = vpop.f32.mrf.mxu0
        %v2125 = vadd.f32 %v1948, %v2124
        %v2126 = vpop.f32.mrf.mxu0
        %v2127 = vadd.f32 %v1948, %v2126
        %2128 = vdwg.mxu0
        %v2129 = vmul.f32 %v1714, %v2041
        %v2130 = vmul.f32 %v1719, %v2043
        %v2131 = vmul.f32 %v1724, %v2046
        %v2132 = vmul.f32 %v1729, %v2048
        %v2133 = vmul.f32 %v1734, %v2051
        %v2134 = vmul.f32 %v1739, %v2053
        %v2135 = vmul.f32 %v1744, %v2056
        %v2136 = vmul.f32 %v1749, %v2058
        %v2137 = vmul.f32 %v1754, %v2061
        %v2138 = vmul.f32 %v1759, %v2063
        %v2139 = vmul.f32 %v1764, %v2066
        %v2140 = vmul.f32 %v1769, %v2068
        %v2141 = vmul.f32 %v1774, %v2071
        %v2142 = vmul.f32 %v1779, %v2073
        %v2143 = vmul.f32 %v1784, %v2076
        %v2144 = vmul.f32 %v1789, %v2078
        %v2145 = vmul.f32 %v1810, %v2090
        %v2146 = vmul.f32 %v1815, %v2092
        %v2147 = vmul.f32 %v1820, %v2095
        %v2148 = vmul.f32 %v1825, %v2097
        %v2149 = vmul.f32 %v1830, %v2100
        %v2150 = vmul.f32 %v1835, %v2102
        %v2151 = vmul.f32 %v1840, %v2105
        %v2152 = vmul.f32 %v1845, %v2107
        %v2153 = vmul.f32 %v1850, %v2110
        %v2154 = vmul.f32 %v1855, %v2112
        %v2155 = vmul.f32 %v1860, %v2115
        %v2156 = vmul.f32 %v1865, %v2117
        %v2157 = vmul.f32 %v1870, %v2120
        %v2158 = vmul.f32 %v1875, %v2122
        %v2159 = vmul.f32 %v1880, %v2125
        %v2160 = vmul.f32 %v1885, %v2127
        %v2161 = vadd.f32 %v2129, %v2145
        %v2162 = vadd.f32 %v2130, %v2146
        %v2163 = vadd.f32 %v2131, %v2147
        %v2164 = vadd.f32 %v2132, %v2148
        %v2165 = vadd.f32 %v2133, %v2149
        %v2166 = vadd.f32 %v2134, %v2150
        %v2167 = vadd.f32 %v2135, %v2151
        %v2168 = vadd.f32 %v2136, %v2152
        %v2169 = vadd.f32 %v2137, %v2153
        %v2170 = vadd.f32 %v2138, %v2154
        %v2171 = vadd.f32 %v2139, %v2155
        %v2172 = vadd.f32 %v2140, %v2156
        %v2173 = vadd.f32 %v2141, %v2157
        %v2174 = vadd.f32 %v2142, %v2158
        %v2175 = vadd.f32 %v2143, %v2159
        %v2176 = vadd.f32 %v2144, %v2160
        %v2177 = vpack.c.bf16 %v1099, %v1098
        %v2178 = vpack.c.bf16 %v1101, %v1100
        %v2179 = vpack.c.bf16 %v1103, %v1102
        %v2180 = vpack.c.bf16 %v1105, %v1104
        %v2181 = vpack.c.bf16 %v1107, %v1106
        %v2182 = vpack.c.bf16 %v1109, %v1108
        %v2183 = vpack.c.bf16 %v1111, %v1110
        %v2184 = vpack.c.bf16 %v1113, %v1112
        %s2185 = scalar_lea.vmem %s579, 256 [#allocation3]
        %v2186 = vld [vmem:[%s2185] sm:$0xff]
        %v2187 = vld [vmem:[%s2185 + $0x8] sm:$0xff]
        %v2188 = vld [vmem:[%s2185 + $0x10] sm:$0xff]
        %v2189 = vld [vmem:[%s2185 + $0x18] sm:$0xff]
        %v2190 = vld [vmem:[%s2185 + $0x20] sm:$0xff]
        %v2191 = vld [vmem:[%s2185 + $0x28] sm:$0xff]
        %v2192 = vld [vmem:[%s2185 + $0x30] sm:$0xff]
        %v2193 = vld [vmem:[%s2185 + $0x38] sm:$0xff]
        %v2194 = vld [vmem:[%s2185 + $0x40] sm:$0xff]
        %v2195 = vld [vmem:[%s2185 + $0x48] sm:$0xff]
        %v2196 = vld [vmem:[%s2185 + $0x50] sm:$0xff]
        %v2197 = vld [vmem:[%s2185 + $0x58] sm:$0xff]
        %v2198 = vld [vmem:[%s2185 + $0x60] sm:$0xff]
        %v2199 = vld [vmem:[%s2185 + $0x68] sm:$0xff]
        %v2200 = vld [vmem:[%s2185 + $0x70] sm:$0xff]
        %v2201 = vld [vmem:[%s2185 + $0x78] sm:$0xff]
        %s2202 = scalar_lea.vmem %s651, 4
        %v2203 = vld [vmem:[%s2202] sm:$0x3]
        %v2205 = vperm.slane %v2203, 0
        %v2206 = vperm.slane %v2203, 1
        %v2225 = vunpack.c.l.b16 %v2186
        %v2226 = vunpack.c.h.b16 %v2186
        %v2227 = vunpack.c.l.b16 %v2187
        %v2228 = vunpack.c.h.b16 %v2187
        %v2229 = vunpack.c.l.b16 %v2188
        %v2230 = vunpack.c.h.b16 %v2188
        %v2231 = vunpack.c.l.b16 %v2189
        %v2232 = vunpack.c.h.b16 %v2189
        %v2233 = vunpack.c.l.b16 %v2190
        %v2234 = vunpack.c.h.b16 %v2190
        %v2235 = vunpack.c.l.b16 %v2191
        %v2236 = vunpack.c.h.b16 %v2191
        %v2237 = vunpack.c.l.b16 %v2192
        %v2238 = vunpack.c.h.b16 %v2192
        %v2239 = vunpack.c.l.b16 %v2193
        %v2240 = vunpack.c.h.b16 %v2193
        %v2241 = vunpack.c.l.b16 %v2194
        %v2242 = vunpack.c.h.b16 %v2194
        %v2243 = vunpack.c.l.b16 %v2195
        %v2244 = vunpack.c.h.b16 %v2195
        %v2245 = vunpack.c.l.b16 %v2196
        %v2246 = vunpack.c.h.b16 %v2196
        %v2247 = vunpack.c.l.b16 %v2197
        %v2248 = vunpack.c.h.b16 %v2197
        %v2249 = vunpack.c.l.b16 %v2198
        %v2250 = vunpack.c.h.b16 %v2198
        %v2251 = vunpack.c.l.b16 %v2199
        %v2252 = vunpack.c.h.b16 %v2199
        %v2253 = vunpack.c.l.b16 %v2200
        %v2254 = vunpack.c.h.b16 %v2200
        %v2255 = vunpack.c.l.b16 %v2201
        %v2256 = vunpack.c.h.b16 %v2201
        %v2257 = vpack.c.b16 %v2227, %v2225
        %v2258 = vpack.c.b16 %v2228, %v2226
        %v2259 = vpack.c.b16 %v2231, %v2229
        %v2260 = vpack.c.b16 %v2232, %v2230
        %v2261 = vpack.c.b16 %v2235, %v2233
        %v2262 = vpack.c.b16 %v2236, %v2234
        %v2263 = vpack.c.b16 %v2239, %v2237
        %v2264 = vpack.c.b16 %v2240, %v2238
        %v2265 = vpack.c.b16 %v2243, %v2241
        %v2266 = vpack.c.b16 %v2244, %v2242
        %v2267 = vpack.c.b16 %v2247, %v2245
        %v2268 = vpack.c.b16 %v2248, %v2246
        %v2269 = vpack.c.b16 %v2251, %v2249
        %v2270 = vpack.c.b16 %v2252, %v2250
        %v2271 = vpack.c.b16 %v2255, %v2253
        %v2272 = vpack.c.b16 %v2256, %v2254
        %2289 = vmatpush.bf16.msra.mxu0 %v2271
        %2290 = vmatpush.bf16.msra.mxu0 %v2269
        %2291 = vmatpush.bf16.msra.mxu0 %v2267
        %2292 = vmatpush.bf16.msra.mxu0 %v2265
        %2293 = vmatpush.bf16.msra.mxu0 %v2263
        %2294 = vmatpush.bf16.msra.mxu0 %v2261
        %2295 = vmatpush.bf16.msra.mxu0 %v2259
        %2296 = vmatpush.bf16.msra.mxu0 %v2257
        %2297 = vmatmul.bf16.gmra.mxu0 %v2177
        %v2298 = vpop.f32.mrf.mxu0
        %v2299 = vadd.f32 %v2205, %v2298
        %v2300 = vpop.f32.mrf.mxu0
        %v2301 = vadd.f32 %v2205, %v2300
        %2302 = vmatmul.bf16.gmra.mxu0 %v2178
        %v2303 = vpop.f32.mrf.mxu0
        %v2304 = vadd.f32 %v2205, %v2303
        %v2305 = vpop.f32.mrf.mxu0
        %v2306 = vadd.f32 %v2205, %v2305
        %2307 = vmatmul.bf16.gmra.mxu0 %v2179
        %v2308 = vpop.f32.mrf.mxu0
        %v2309 = vadd.f32 %v2205, %v2308
        %v2310 = vpop.f32.mrf.mxu0
        %v2311 = vadd.f32 %v2205, %v2310
        %2312 = vmatmul.bf16.gmra.mxu0 %v2180
        %v2313 = vpop.f32.mrf.mxu0
        %v2314 = vadd.f32 %v2205, %v2313
        %v2315 = vpop.f32.mrf.mxu0
        %v2316 = vadd.f32 %v2205, %v2315
        %2317 = vmatmul.bf16.gmra.mxu0 %v2181
        %v2318 = vpop.f32.mrf.mxu0
        %v2319 = vadd.f32 %v2205, %v2318
        %v2320 = vpop.f32.mrf.mxu0
        %v2321 = vadd.f32 %v2205, %v2320
        %2322 = vmatmul.bf16.gmra.mxu0 %v2182
        %v2323 = vpop.f32.mrf.mxu0
        %v2324 = vadd.f32 %v2205, %v2323
        %v2325 = vpop.f32.mrf.mxu0
        %v2326 = vadd.f32 %v2205, %v2325
        %2327 = vmatmul.bf16.gmra.mxu0 %v2183
        %v2328 = vpop.f32.mrf.mxu0
        %v2329 = vadd.f32 %v2205, %v2328
        %v2330 = vpop.f32.mrf.mxu0
        %v2331 = vadd.f32 %v2205, %v2330
        %2332 = vmatmul.bf16.gmra.mxu0 %v2184
        %v2333 = vpop.f32.mrf.mxu0
        %v2334 = vadd.f32 %v2205, %v2333
        %v2335 = vpop.f32.mrf.mxu0
        %v2336 = vadd.f32 %v2205, %v2335
        %2337 = vdwg.mxu0
        %2338 = vmatpush.bf16.msra.mxu0 %v2272
        %2339 = vmatpush.bf16.msra.mxu0 %v2270
        %2340 = vmatpush.bf16.msra.mxu0 %v2268
        %2341 = vmatpush.bf16.msra.mxu0 %v2266
        %2342 = vmatpush.bf16.msra.mxu0 %v2264
        %2343 = vmatpush.bf16.msra.mxu0 %v2262
        %2344 = vmatpush.bf16.msra.mxu0 %v2260
        %2345 = vmatpush.bf16.msra.mxu0 %v2258
        %2346 = vmatmul.bf16.gmra.mxu0 %v2177
        %v2347 = vpop.f32.mrf.mxu0
        %v2348 = vadd.f32 %v2206, %v2347
        %v2349 = vpop.f32.mrf.mxu0
        %v2350 = vadd.f32 %v2206, %v2349
        %2351 = vmatmul.bf16.gmra.mxu0 %v2178
        %v2352 = vpop.f32.mrf.mxu0
        %v2353 = vadd.f32 %v2206, %v2352
        %v2354 = vpop.f32.mrf.mxu0
        %v2355 = vadd.f32 %v2206, %v2354
        %2356 = vmatmul.bf16.gmra.mxu0 %v2179
        %v2357 = vpop.f32.mrf.mxu0
        %v2358 = vadd.f32 %v2206, %v2357
        %v2359 = vpop.f32.mrf.mxu0
        %v2360 = vadd.f32 %v2206, %v2359
        %2361 = vmatmul.bf16.gmra.mxu0 %v2180
        %v2362 = vpop.f32.mrf.mxu0
        %v2363 = vadd.f32 %v2206, %v2362
        %v2364 = vpop.f32.mrf.mxu0
        %v2365 = vadd.f32 %v2206, %v2364
        %2366 = vmatmul.bf16.gmra.mxu0 %v2181
        %v2367 = vpop.f32.mrf.mxu0
        %v2368 = vadd.f32 %v2206, %v2367
        %v2369 = vpop.f32.mrf.mxu0
        %v2370 = vadd.f32 %v2206, %v2369
        %2371 = vmatmul.bf16.gmra.mxu0 %v2182
        %v2372 = vpop.f32.mrf.mxu0
        %v2373 = vadd.f32 %v2206, %v2372
        %v2374 = vpop.f32.mrf.mxu0
        %v2375 = vadd.f32 %v2206, %v2374
        %2376 = vmatmul.bf16.gmra.mxu0 %v2183
        %v2377 = vpop.f32.mrf.mxu0
        %v2378 = vadd.f32 %v2206, %v2377
        %v2379 = vpop.f32.mrf.mxu0
        %v2380 = vadd.f32 %v2206, %v2379
        %2381 = vmatmul.bf16.gmra.mxu0 %v2184
        %v2382 = vpop.f32.mrf.mxu0
        %v2383 = vadd.f32 %v2206, %v2382
        %v2384 = vpop.f32.mrf.mxu0
        %v2385 = vadd.f32 %v2206, %v2384
        %2386 = vdwg.mxu0
        %v2387 = vmul.f32 %v1714, %v2299
        %v2388 = vmul.f32 %v1719, %v2301
        %v2389 = vmul.f32 %v1724, %v2304
        %v2390 = vmul.f32 %v1729, %v2306
        %v2391 = vmul.f32 %v1734, %v2309
        %v2392 = vmul.f32 %v1739, %v2311
        %v2393 = vmul.f32 %v1744, %v2314
        %v2394 = vmul.f32 %v1749, %v2316
        %v2395 = vmul.f32 %v1754, %v2319
        %v2396 = vmul.f32 %v1759, %v2321
        %v2397 = vmul.f32 %v1764, %v2324
        %v2398 = vmul.f32 %v1769, %v2326
        %v2399 = vmul.f32 %v1774, %v2329
        %v2400 = vmul.f32 %v1779, %v2331
        %v2401 = vmul.f32 %v1784, %v2334
        %v2402 = vmul.f32 %v1789, %v2336
        %v2403 = vmul.f32 %v1810, %v2348
        %v2404 = vmul.f32 %v1815, %v2350
        %v2405 = vmul.f32 %v1820, %v2353
        %v2406 = vmul.f32 %v1825, %v2355
        %v2407 = vmul.f32 %v1830, %v2358
        %v2408 = vmul.f32 %v1835, %v2360
        %v2409 = vmul.f32 %v1840, %v2363
        %v2410 = vmul.f32 %v1845, %v2365
        %v2411 = vmul.f32 %v1850, %v2368
        %v2412 = vmul.f32 %v1855, %v2370
        %v2413 = vmul.f32 %v1860, %v2373
        %v2414 = vmul.f32 %v1865, %v2375
        %v2415 = vmul.f32 %v1870, %v2378
        %v2416 = vmul.f32 %v1875, %v2380
        %v2417 = vmul.f32 %v1880, %v2383
        %v2418 = vmul.f32 %v1885, %v2385
        %v2419 = vadd.f32 %v2387, %v2403
        %v2420 = vadd.f32 %v2388, %v2404
        %v2421 = vadd.f32 %v2389, %v2405
        %v2422 = vadd.f32 %v2390, %v2406
        %v2423 = vadd.f32 %v2391, %v2407
        %v2424 = vadd.f32 %v2392, %v2408
        %v2425 = vadd.f32 %v2393, %v2409
        %v2426 = vadd.f32 %v2394, %v2410
        %v2427 = vadd.f32 %v2395, %v2411
        %v2428 = vadd.f32 %v2396, %v2412
        %v2429 = vadd.f32 %v2397, %v2413
        %v2430 = vadd.f32 %v2398, %v2414
        %v2431 = vadd.f32 %v2399, %v2415
        %v2432 = vadd.f32 %v2400, %v2416
        %v2433 = vadd.f32 %v2401, %v2417
        %v2434 = vadd.f32 %v2402, %v2418
        %v2435 = vmul.f32 %v1903, %v1234
        %v2436 = vmul.f32 %v1904, %v1236
        %v2437 = vmul.f32 %v1905, %v1238
        %v2438 = vmul.f32 %v1906, %v1240
        %v2439 = vmul.f32 %v1907, %v1242
        %v2440 = vmul.f32 %v1908, %v1244
        %v2441 = vmul.f32 %v1909, %v1246
        %v2442 = vmul.f32 %v1910, %v1248
        %v2443 = vmul.f32 %v1911, %v1250
        %v2444 = vmul.f32 %v1912, %v1252
        %v2445 = vmul.f32 %v1913, %v1254
        %v2446 = vmul.f32 %v1914, %v1256
        %v2447 = vmul.f32 %v1915, %v1258
        %v2448 = vmul.f32 %v1916, %v1260
        %v2449 = vmul.f32 %v1917, %v1262
        %v2450 = vmul.f32 %v1918, %v1264
        %v2451 = vpack.c.bf16 %v2435, %v2435
        %v2452 = vpack.c.bf16 %v2436, %v2436
        %v2453 = vpack.c.bf16 %v2437, %v2437
        %v2454 = vpack.c.bf16 %v2438, %v2438
        %v2455 = vpack.c.bf16 %v2439, %v2439
        %v2456 = vpack.c.bf16 %v2440, %v2440
        %v2457 = vpack.c.bf16 %v2441, %v2441
        %v2458 = vpack.c.bf16 %v2442, %v2442
        %v2459 = vpack.c.bf16 %v2443, %v2443
        %v2460 = vpack.c.bf16 %v2444, %v2444
        %v2461 = vpack.c.bf16 %v2445, %v2445
        %v2462 = vpack.c.bf16 %v2446, %v2446
        %v2463 = vpack.c.bf16 %v2447, %v2447
        %v2464 = vpack.c.bf16 %v2448, %v2448
        %v2465 = vpack.c.bf16 %v2449, %v2449
        %v2466 = vpack.c.bf16 %v2450, %v2450
        %2467 = vst [vmem:[#allocation2] sm:$0xf] %v2451
        %2468 = vst [vmem:[#allocation2 + $0x10] sm:$0xf] %v2452
        %2469 = vst [vmem:[#allocation2 + $0x20] sm:$0xf] %v2453
        %2470 = vst [vmem:[#allocation2 + $0x30] sm:$0xf] %v2454
        %2471 = vst [vmem:[#allocation2 + $0x40] sm:$0xf] %v2455
        %2472 = vst [vmem:[#allocation2 + $0x50] sm:$0xf] %v2456
        %2473 = vst [vmem:[#allocation2 + $0x60] sm:$0xf] %v2457
        %2474 = vst [vmem:[#allocation2 + $0x70] sm:$0xf] %v2458
        %2475 = vst [vmem:[#allocation2 + $0x80] sm:$0xf] %v2459
        %2476 = vst [vmem:[#allocation2 + $0x90] sm:$0xf] %v2460
        %2477 = vst [vmem:[#allocation2 + $0xa0] sm:$0xf] %v2461
        %2478 = vst [vmem:[#allocation2 + $0xb0] sm:$0xf] %v2462
        %2479 = vst [vmem:[#allocation2 + $0xc0] sm:$0xf] %v2463
        %2480 = vst [vmem:[#allocation2 + $0xd0] sm:$0xf] %v2464
        %2481 = vst [vmem:[#allocation2 + $0xe0] sm:$0xf] %v2465
        %2482 = vst [vmem:[#allocation2 + $0xf0] sm:$0xf] %v2466
        %v2483 = vmul.f32 %v2161, %v1353
        %v2484 = vmul.f32 %v2162, %v1355
        %v2485 = vmul.f32 %v2163, %v1357
        %v2486 = vmul.f32 %v2164, %v1359
        %v2487 = vmul.f32 %v2165, %v1361
        %v2488 = vmul.f32 %v2166, %v1363
        %v2489 = vmul.f32 %v2167, %v1365
        %v2490 = vmul.f32 %v2168, %v1367
        %v2491 = vmul.f32 %v2169, %v1369
        %v2492 = vmul.f32 %v2170, %v1371
        %v2493 = vmul.f32 %v2171, %v1373
        %v2494 = vmul.f32 %v2172, %v1375
        %v2495 = vmul.f32 %v2173, %v1377
        %v2496 = vmul.f32 %v2174, %v1379
        %v2497 = vmul.f32 %v2175, %v1381
        %v2498 = vmul.f32 %v2176, %v1383
        %v2499 = vpack.c.bf16 %v2483, %v2483
        %v2500 = vpack.c.bf16 %v2484, %v2484
        %v2501 = vpack.c.bf16 %v2485, %v2485
        %v2502 = vpack.c.bf16 %v2486, %v2486
        %v2503 = vpack.c.bf16 %v2487, %v2487
        %v2504 = vpack.c.bf16 %v2488, %v2488
        %v2505 = vpack.c.bf16 %v2489, %v2489
        %v2506 = vpack.c.bf16 %v2490, %v2490
        %v2507 = vpack.c.bf16 %v2491, %v2491
        %v2508 = vpack.c.bf16 %v2492, %v2492
        %v2509 = vpack.c.bf16 %v2493, %v2493
        %v2510 = vpack.c.bf16 %v2494, %v2494
        %v2511 = vpack.c.bf16 %v2495, %v2495
        %v2512 = vpack.c.bf16 %v2496, %v2496
        %v2513 = vpack.c.bf16 %v2497, %v2497
        %v2514 = vpack.c.bf16 %v2498, %v2498
        %2515 = vst [vmem:[#allocation2 + $0x4] sm:$0xf] %v2499
        %2516 = vst [vmem:[#allocation2 + $0x14] sm:$0xf] %v2500
        %2517 = vst [vmem:[#allocation2 + $0x24] sm:$0xf] %v2501
        %2518 = vst [vmem:[#allocation2 + $0x34] sm:$0xf] %v2502
        %2519 = vst [vmem:[#allocation2 + $0x44] sm:$0xf] %v2503
        %2520 = vst [vmem:[#allocation2 + $0x54] sm:$0xf] %v2504
        %2521 = vst [vmem:[#allocation2 + $0x64] sm:$0xf] %v2505
        %2522 = vst [vmem:[#allocation2 + $0x74] sm:$0xf] %v2506
        %2523 = vst [vmem:[#allocation2 + $0x84] sm:$0xf] %v2507
        %2524 = vst [vmem:[#allocation2 + $0x94] sm:$0xf] %v2508
        %2525 = vst [vmem:[#allocation2 + $0xa4] sm:$0xf] %v2509
        %2526 = vst [vmem:[#allocation2 + $0xb4] sm:$0xf] %v2510
        %2527 = vst [vmem:[#allocation2 + $0xc4] sm:$0xf] %v2511
        %2528 = vst [vmem:[#allocation2 + $0xd4] sm:$0xf] %v2512
        %2529 = vst [vmem:[#allocation2 + $0xe4] sm:$0xf] %v2513
        %2530 = vst [vmem:[#allocation2 + $0xf4] sm:$0xf] %v2514
        %v2531 = vmul.f32 %v2419, %v1472
        %v2532 = vmul.f32 %v2420, %v1474
        %v2533 = vmul.f32 %v2421, %v1476
        %v2534 = vmul.f32 %v2422, %v1478
        %v2535 = vmul.f32 %v2423, %v1480
        %v2536 = vmul.f32 %v2424, %v1482
        %v2537 = vmul.f32 %v2425, %v1484
        %v2538 = vmul.f32 %v2426, %v1486
        %v2539 = vmul.f32 %v2427, %v1488
        %v2540 = vmul.f32 %v2428, %v1490
        %v2541 = vmul.f32 %v2429, %v1492
        %v2542 = vmul.f32 %v2430, %v1494
        %v2543 = vmul.f32 %v2431, %v1496
        %v2544 = vmul.f32 %v2432, %v1498
        %v2545 = vmul.f32 %v2433, %v1500
        %v2546 = vmul.f32 %v2434, %v1502
        %v2547 = vpack.c.bf16 %v2531, %v2531
        %v2548 = vpack.c.bf16 %v2532, %v2532
        %v2549 = vpack.c.bf16 %v2533, %v2533
        %v2550 = vpack.c.bf16 %v2534, %v2534
        %v2551 = vpack.c.bf16 %v2535, %v2535
        %v2552 = vpack.c.bf16 %v2536, %v2536
        %v2553 = vpack.c.bf16 %v2537, %v2537
        %v2554 = vpack.c.bf16 %v2538, %v2538
        %v2555 = vpack.c.bf16 %v2539, %v2539
        %v2556 = vpack.c.bf16 %v2540, %v2540
        %v2557 = vpack.c.bf16 %v2541, %v2541
        %v2558 = vpack.c.bf16 %v2542, %v2542
        %v2559 = vpack.c.bf16 %v2543, %v2543
        %v2560 = vpack.c.bf16 %v2544, %v2544
        %v2561 = vpack.c.bf16 %v2545, %v2545
        %v2562 = vpack.c.bf16 %v2546, %v2546
        %2563 = vst [vmem:[#allocation2 + $0x8] sm:$0xf] %v2547
        %2564 = vst [vmem:[#allocation2 + $0x18] sm:$0xf] %v2548
        %2565 = vst [vmem:[#allocation2 + $0x28] sm:$0xf] %v2549
        %2566 = vst [vmem:[#allocation2 + $0x38] sm:$0xf] %v2550
        %2567 = vst [vmem:[#allocation2 + $0x48] sm:$0xf] %v2551
        %2568 = vst [vmem:[#allocation2 + $0x58] sm:$0xf] %v2552
        %2569 = vst [vmem:[#allocation2 + $0x68] sm:$0xf] %v2553
        %2570 = vst [vmem:[#allocation2 + $0x78] sm:$0xf] %v2554
        %2571 = vst [vmem:[#allocation2 + $0x88] sm:$0xf] %v2555
        %2572 = vst [vmem:[#allocation2 + $0x98] sm:$0xf] %v2556
        %2573 = vst [vmem:[#allocation2 + $0xa8] sm:$0xf] %v2557
        %2574 = vst [vmem:[#allocation2 + $0xb8] sm:$0xf] %v2558
        %2575 = vst [vmem:[#allocation2 + $0xc8] sm:$0xf] %v2559
        %2576 = vst [vmem:[#allocation2 + $0xd8] sm:$0xf] %v2560
        %2577 = vst [vmem:[#allocation2 + $0xe8] sm:$0xf] %v2561
        %2578 = vst [vmem:[#allocation2 + $0xf8] sm:$0xf] %v2562
        %v2579 = vlaneseq
        %v2580 = vand.u32 %v2579, 127
        %vm2581 = vcmp.eq.s32.totalorder %v2580, 0
        %v2582 = vsel %vm2581, %v1234, 0.0
        %v2583 = vsel %vm2581, %v1236, 0.0
        %v2584 = vsel %vm2581, %v1238, 0.0
        %v2585 = vsel %vm2581, %v1240, 0.0
        %v2586 = vsel %vm2581, %v1242, 0.0
        %v2587 = vsel %vm2581, %v1244, 0.0
        %v2588 = vsel %vm2581, %v1246, 0.0
        %v2589 = vsel %vm2581, %v1248, 0.0
        %v2590 = vsel %vm2581, %v1250, 0.0
        %v2591 = vsel %vm2581, %v1252, 0.0
        %v2592 = vsel %vm2581, %v1254, 0.0
        %v2593 = vsel %vm2581, %v1256, 0.0
        %v2594 = vsel %vm2581, %v1258, 0.0
        %v2595 = vsel %vm2581, %v1260, 0.0
        %v2596 = vsel %vm2581, %v1262, 0.0
        %v2597 = vsel %vm2581, %v1264, 0.0
        %vm2598 = vcmp.eq.s32.totalorder %v2580, 1
        %v2599 = vsel %vm2598, %v1353, %v2582
        %v2600 = vsel %vm2598, %v1355, %v2583
        %v2601 = vsel %vm2598, %v1357, %v2584
        %v2602 = vsel %vm2598, %v1359, %v2585
        %v2603 = vsel %vm2598, %v1361, %v2586
        %v2604 = vsel %vm2598, %v1363, %v2587
        %v2605 = vsel %vm2598, %v1365, %v2588
        %v2606 = vsel %vm2598, %v1367, %v2589
        %v2607 = vsel %vm2598, %v1369, %v2590
        %v2608 = vsel %vm2598, %v1371, %v2591
        %v2609 = vsel %vm2598, %v1373, %v2592
        %v2610 = vsel %vm2598, %v1375, %v2593
        %v2611 = vsel %vm2598, %v1377, %v2594
        %v2612 = vsel %vm2598, %v1379, %v2595
        %v2613 = vsel %vm2598, %v1381, %v2596
        %v2614 = vsel %vm2598, %v1383, %v2597
        %vm2615 = vcmp.eq.s32.totalorder %v2580, 2
        %v2616 = vsel %vm2615, %v1472, %v2599
        %v2617 = vsel %vm2615, %v1474, %v2600
        %v2618 = vsel %vm2615, %v1476, %v2601
        %v2619 = vsel %vm2615, %v1478, %v2602
        %v2620 = vsel %vm2615, %v1480, %v2603
        %v2621 = vsel %vm2615, %v1482, %v2604
        %v2622 = vsel %vm2615, %v1484, %v2605
        %v2623 = vsel %vm2615, %v1486, %v2606
        %v2624 = vsel %vm2615, %v1488, %v2607
        %v2625 = vsel %vm2615, %v1490, %v2608
        %v2626 = vsel %vm2615, %v1492, %v2609
        %v2627 = vsel %vm2615, %v1494, %v2610
        %v2628 = vsel %vm2615, %v1496, %v2611
        %v2629 = vsel %vm2615, %v1498, %v2612
        %v2630 = vsel %vm2615, %v1500, %v2613
        %v2631 = vsel %vm2615, %v1502, %v2614
        %v2632 = vpack.c.bf16 %v2616, %v2616
        %v2633 = vpack.c.bf16 %v2617, %v2617
        %v2634 = vpack.c.bf16 %v2618, %v2618
        %v2635 = vpack.c.bf16 %v2619, %v2619
        %v2636 = vpack.c.bf16 %v2620, %v2620
        %v2637 = vpack.c.bf16 %v2621, %v2621
        %v2638 = vpack.c.bf16 %v2622, %v2622
        %v2639 = vpack.c.bf16 %v2623, %v2623
        %v2640 = vpack.c.bf16 %v2624, %v2624
        %v2641 = vpack.c.bf16 %v2625, %v2625
        %v2642 = vpack.c.bf16 %v2626, %v2626
        %v2643 = vpack.c.bf16 %v2627, %v2627
        %v2644 = vpack.c.bf16 %v2628, %v2628
        %v2645 = vpack.c.bf16 %v2629, %v2629
        %v2646 = vpack.c.bf16 %v2630, %v2630
        %v2647 = vpack.c.bf16 %v2631, %v2631
        %2648 = vst [vmem:[#allocation2 + $0xc] sm:$0xf] %v2632
        %2649 = vst [vmem:[#allocation2 + $0x1c] sm:$0xf] %v2633
        %2650 = vst [vmem:[#allocation2 + $0x2c] sm:$0xf] %v2634
        %2651 = vst [vmem:[#allocation2 + $0x3c] sm:$0xf] %v2635
        %2652 = vst [vmem:[#allocation2 + $0x4c] sm:$0xf] %v2636
        %2653 = vst [vmem:[#allocation2 + $0x5c] sm:$0xf] %v2637
        %2654 = vst [vmem:[#allocation2 + $0x6c] sm:$0xf] %v2638
        %2655 = vst [vmem:[#allocation2 + $0x7c] sm:$0xf] %v2639
        %2656 = vst [vmem:[#allocation2 + $0x8c] sm:$0xf] %v2640
        %2657 = vst [vmem:[#allocation2 + $0x9c] sm:$0xf] %v2641
        %2658 = vst [vmem:[#allocation2 + $0xac] sm:$0xf] %v2642
        %2659 = vst [vmem:[#allocation2 + $0xbc] sm:$0xf] %v2643
        %2660 = vst [vmem:[#allocation2 + $0xcc] sm:$0xf] %v2644
        %2661 = vst [vmem:[#allocation2 + $0xdc] sm:$0xf] %v2645
        %2662 = vst [vmem:[#allocation2 + $0xec] sm:$0xf] %v2646
        %2663 = vst [vmem:[#allocation2 + $0xfc] sm:$0xf] %v2647
        %v2664 = vld [vmem:[%s6] sm:$0xf]
        %v2665 = vld [vmem:[%s6 + $0x4] sm:$0xf]
        %v2666 = vld [vmem:[%s6 + $0x8] sm:$0xf]
        %v2667 = vld [vmem:[%s6 + $0xc] sm:$0xf]
        %v2668 = vld [vmem:[%s6 + $0x10] sm:$0xf]
        %v2669 = vld [vmem:[%s6 + $0x14] sm:$0xf]
        %v2670 = vld [vmem:[%s6 + $0x18] sm:$0xf]
        %v2671 = vld [vmem:[%s6 + $0x1c] sm:$0xf]
        %v2672 = vld [vmem:[#allocation2] sm:$0xff]
        %v2673 = vld [vmem:[#allocation2 + $0x8] sm:$0xff]
        %v2674 = vld [vmem:[#allocation2 + $0x10] sm:$0xff]
        %v2675 = vld [vmem:[#allocation2 + $0x18] sm:$0xff]
        %v2676 = vld [vmem:[#allocation2 + $0x20] sm:$0xff]
        %v2677 = vld [vmem:[#allocation2 + $0x28] sm:$0xff]
        %v2678 = vld [vmem:[#allocation2 + $0x30] sm:$0xff]
        %v2679 = vld [vmem:[#allocation2 + $0x38] sm:$0xff]
        %v2680 = vld [vmem:[#allocation2 + $0x40] sm:$0xff]
        %v2681 = vld [vmem:[#allocation2 + $0x48] sm:$0xff]
        %v2682 = vld [vmem:[#allocation2 + $0x50] sm:$0xff]
        %v2683 = vld [vmem:[#allocation2 + $0x58] sm:$0xff]
        %v2684 = vld [vmem:[#allocation2 + $0x60] sm:$0xff]
        %v2685 = vld [vmem:[#allocation2 + $0x68] sm:$0xff]
        %v2686 = vld [vmem:[#allocation2 + $0x70] sm:$0xff]
        %v2687 = vld [vmem:[#allocation2 + $0x78] sm:$0xff]
        %v2688 = vld [vmem:[#allocation2 + $0x80] sm:$0xff]
        %v2689 = vld [vmem:[#allocation2 + $0x88] sm:$0xff]
        %v2690 = vld [vmem:[#allocation2 + $0x90] sm:$0xff]
        %v2691 = vld [vmem:[#allocation2 + $0x98] sm:$0xff]
        %v2692 = vld [vmem:[#allocation2 + $0xa0] sm:$0xff]
        %v2693 = vld [vmem:[#allocation2 + $0xa8] sm:$0xff]
        %v2694 = vld [vmem:[#allocation2 + $0xb0] sm:$0xff]
        %v2695 = vld [vmem:[#allocation2 + $0xb8] sm:$0xff]
        %v2696 = vld [vmem:[#allocation2 + $0xc0] sm:$0xff]
        %v2697 = vld [vmem:[#allocation2 + $0xc8] sm:$0xff]
        %v2698 = vld [vmem:[#allocation2 + $0xd0] sm:$0xff]
        %v2699 = vld [vmem:[#allocation2 + $0xd8] sm:$0xff]
        %v2700 = vld [vmem:[#allocation2 + $0xe0] sm:$0xff]
        %v2701 = vld [vmem:[#allocation2 + $0xe8] sm:$0xff]
        %v2702 = vld [vmem:[#allocation2 + $0xf0] sm:$0xff]
        %v2703 = vld [vmem:[#allocation2 + $0xf8] sm:$0xff]
        %v2712 = vunpack.c.l.b16 %v2664
        %v2713 = vunpack.c.l.b16 %v2665
        %v2714 = vunpack.c.l.b16 %v2666
        %v2715 = vunpack.c.l.b16 %v2667
        %v2716 = vunpack.c.l.b16 %v2668
        %v2717 = vunpack.c.l.b16 %v2669
        %v2718 = vunpack.c.l.b16 %v2670
        %v2719 = vunpack.c.l.b16 %v2671
        %v2720 = vpack.c.b16 %v2713, %v2712
        %v2721 = vpack.c.b16 %v2715, %v2714
        %v2722 = vpack.c.b16 %v2717, %v2716
        %v2723 = vpack.c.b16 %v2719, %v2718
        %v2760 = vunpack.c.l.b16 %v2672
        %v2761 = vunpack.c.h.b16 %v2672
        %v2762 = vunpack.c.l.b16 %v2673
        %v2763 = vunpack.c.h.b16 %v2673
        %v2764 = vunpack.c.l.b16 %v2674
        %v2765 = vunpack.c.h.b16 %v2674
        %v2766 = vunpack.c.l.b16 %v2675
        %v2767 = vunpack.c.h.b16 %v2675
        %v2768 = vunpack.c.l.b16 %v2676
        %v2769 = vunpack.c.h.b16 %v2676
        %v2770 = vunpack.c.l.b16 %v2677
        %v2771 = vunpack.c.h.b16 %v2677
        %v2772 = vunpack.c.l.b16 %v2678
        %v2773 = vunpack.c.h.b16 %v2678
        %v2774 = vunpack.c.l.b16 %v2679
        %v2775 = vunpack.c.h.b16 %v2679
        %v2776 = vunpack.c.l.b16 %v2680
        %v2777 = vunpack.c.h.b16 %v2680
        %v2778 = vunpack.c.l.b16 %v2681
        %v2779 = vunpack.c.h.b16 %v2681
        %v2780 = vunpack.c.l.b16 %v2682
        %v2781 = vunpack.c.h.b16 %v2682
        %v2782 = vunpack.c.l.b16 %v2683
        %v2783 = vunpack.c.h.b16 %v2683
        %v2784 = vunpack.c.l.b16 %v2684
        %v2785 = vunpack.c.h.b16 %v2684
        %v2786 = vunpack.c.l.b16 %v2685
        %v2787 = vunpack.c.h.b16 %v2685
        %v2788 = vunpack.c.l.b16 %v2686
        %v2789 = vunpack.c.h.b16 %v2686
        %v2790 = vunpack.c.l.b16 %v2687
        %v2791 = vunpack.c.h.b16 %v2687
        %v2792 = vunpack.c.l.b16 %v2688
        %v2793 = vunpack.c.h.b16 %v2688
        %v2794 = vunpack.c.l.b16 %v2689
        %v2795 = vunpack.c.h.b16 %v2689
        %v2796 = vunpack.c.l.b16 %v2690
        %v2797 = vunpack.c.h.b16 %v2690
        %v2798 = vunpack.c.l.b16 %v2691
        %v2799 = vunpack.c.h.b16 %v2691
        %v2800 = vunpack.c.l.b16 %v2692
        %v2801 = vunpack.c.h.b16 %v2692
        %v2802 = vunpack.c.l.b16 %v2693
        %v2803 = vunpack.c.h.b16 %v2693
        %v2804 = vunpack.c.l.b16 %v2694
        %v2805 = vunpack.c.h.b16 %v2694
        %v2806 = vunpack.c.l.b16 %v2695
        %v2807 = vunpack.c.h.b16 %v2695
        %v2808 = vunpack.c.l.b16 %v2696
        %v2809 = vunpack.c.h.b16 %v2696
        %v2810 = vunpack.c.l.b16 %v2697
        %v2811 = vunpack.c.h.b16 %v2697
        %v2812 = vunpack.c.l.b16 %v2698
        %v2813 = vunpack.c.h.b16 %v2698
        %v2814 = vunpack.c.l.b16 %v2699
        %v2815 = vunpack.c.h.b16 %v2699
        %v2816 = vunpack.c.l.b16 %v2700
        %v2817 = vunpack.c.h.b16 %v2700
        %v2818 = vunpack.c.l.b16 %v2701
        %v2819 = vunpack.c.h.b16 %v2701
        %v2820 = vunpack.c.l.b16 %v2702
        %v2821 = vunpack.c.h.b16 %v2702
        %v2822 = vunpack.c.l.b16 %v2703
        %v2823 = vunpack.c.h.b16 %v2703
        %v2824 = vpack.c.b16 %v2764, %v2760
        %v2825 = vpack.c.b16 %v2765, %v2761
        %v2826 = vpack.c.b16 %v2766, %v2762
        %v2827 = vpack.c.b16 %v2767, %v2763
        %v2828 = vpack.c.b16 %v2772, %v2768
        %v2829 = vpack.c.b16 %v2773, %v2769
        %v2830 = vpack.c.b16 %v2774, %v2770
        %v2831 = vpack.c.b16 %v2775, %v2771
        %v2832 = vpack.c.b16 %v2780, %v2776
        %v2833 = vpack.c.b16 %v2781, %v2777
        %v2834 = vpack.c.b16 %v2782, %v2778
        %v2835 = vpack.c.b16 %v2783, %v2779
        %v2836 = vpack.c.b16 %v2788, %v2784
        %v2837 = vpack.c.b16 %v2789, %v2785
        %v2838 = vpack.c.b16 %v2790, %v2786
        %v2839 = vpack.c.b16 %v2791, %v2787
        %v2840 = vpack.c.b16 %v2796, %v2792
        %v2841 = vpack.c.b16 %v2797, %v2793
        %v2842 = vpack.c.b16 %v2798, %v2794
        %v2843 = vpack.c.b16 %v2799, %v2795
        %v2844 = vpack.c.b16 %v2804, %v2800
        %v2845 = vpack.c.b16 %v2805, %v2801
        %v2846 = vpack.c.b16 %v2806, %v2802
        %v2847 = vpack.c.b16 %v2807, %v2803
        %v2848 = vpack.c.b16 %v2812, %v2808
        %v2849 = vpack.c.b16 %v2813, %v2809
        %v2850 = vpack.c.b16 %v2814, %v2810
        %v2851 = vpack.c.b16 %v2815, %v2811
        %v2852 = vpack.c.b16 %v2820, %v2816
        %v2853 = vpack.c.b16 %v2821, %v2817
        %v2854 = vpack.c.b16 %v2822, %v2818
        %v2855 = vpack.c.b16 %v2823, %v2819
        %2888 = vmatpush.bf16.msra.mxu0 %v2852
        %2889 = vmatpush.bf16.msra.mxu0 %v2848
        %2890 = vmatpush.bf16.msra.mxu0 %v2844
        %2891 = vmatpush.bf16.msra.mxu0 %v2840
        %2892 = vmatpush.bf16.msra.mxu0 %v2836
        %2893 = vmatpush.bf16.msra.mxu0 %v2832
        %2894 = vmatpush.bf16.msra.mxu0 %v2828
        %2895 = vmatpush.bf16.msra.mxu0 %v2824
        %2896 = vmatmul.bf16.gmra.mxu0 %v2720
        %v2897 = vpop.f32.mrf.mxu0
        %v2898 = vadd.f32 0.0, %v2897
        %v2899 = vpop.f32.mrf.mxu0
        %v2900 = vadd.f32 0.0, %v2899
        %2901 = vmatmul.bf16.gmra.mxu0 %v2721
        %v2902 = vpop.f32.mrf.mxu0
        %v2903 = vadd.f32 0.0, %v2902
        %v2904 = vpop.f32.mrf.mxu0
        %v2905 = vadd.f32 0.0, %v2904
        %2906 = vmatmul.bf16.gmra.mxu0 %v2722
        %v2907 = vpop.f32.mrf.mxu0
        %v2908 = vadd.f32 0.0, %v2907
        %v2909 = vpop.f32.mrf.mxu0
        %v2910 = vadd.f32 0.0, %v2909
        %2911 = vmatmul.bf16.gmra.mxu0 %v2723
        %v2912 = vpop.f32.mrf.mxu0
        %v2913 = vadd.f32 0.0, %v2912
        %v2914 = vpop.f32.mrf.mxu0
        %v2915 = vadd.f32 0.0, %v2914
        %2916 = vdwg.mxu0
        %2917 = vmatpush.bf16.msra.mxu0 %v2853
        %2918 = vmatpush.bf16.msra.mxu0 %v2849
        %2919 = vmatpush.bf16.msra.mxu0 %v2845
        %2920 = vmatpush.bf16.msra.mxu0 %v2841
        %2921 = vmatpush.bf16.msra.mxu0 %v2837
        %2922 = vmatpush.bf16.msra.mxu0 %v2833
        %2923 = vmatpush.bf16.msra.mxu0 %v2829
        %2924 = vmatpush.bf16.msra.mxu0 %v2825
        %2925 = vmatmul.bf16.gmra.mxu0 %v2720
        %v2926 = vpop.f32.mrf.mxu0
        %v2927 = vadd.f32 0.0, %v2926
        %v2928 = vpop.f32.mrf.mxu0
        %v2929 = vadd.f32 0.0, %v2928
        %2930 = vmatmul.bf16.gmra.mxu0 %v2721
        %v2931 = vpop.f32.mrf.mxu0
        %v2932 = vadd.f32 0.0, %v2931
        %v2933 = vpop.f32.mrf.mxu0
        %v2934 = vadd.f32 0.0, %v2933
        %2935 = vmatmul.bf16.gmra.mxu0 %v2722
        %v2936 = vpop.f32.mrf.mxu0
        %v2937 = vadd.f32 0.0, %v2936
        %v2938 = vpop.f32.mrf.mxu0
        %v2939 = vadd.f32 0.0, %v2938
        %2940 = vmatmul.bf16.gmra.mxu0 %v2723
        %v2941 = vpop.f32.mrf.mxu0
        %v2942 = vadd.f32 0.0, %v2941
        %v2943 = vpop.f32.mrf.mxu0
        %v2944 = vadd.f32 0.0, %v2943
        %2945 = vdwg.mxu0
        %2946 = vmatpush.bf16.msra.mxu0 %v2854
        %2947 = vmatpush.bf16.msra.mxu0 %v2850
        %2948 = vmatpush.bf16.msra.mxu0 %v2846
        %2949 = vmatpush.bf16.msra.mxu0 %v2842
        %2950 = vmatpush.bf16.msra.mxu0 %v2838
        %2951 = vmatpush.bf16.msra.mxu0 %v2834
        %2952 = vmatpush.bf16.msra.mxu0 %v2830
        %2953 = vmatpush.bf16.msra.mxu0 %v2826
        %2954 = vmatmul.bf16.gmra.mxu0 %v2720
        %v2955 = vpop.f32.mrf.mxu0
        %v2956 = vadd.f32 0.0, %v2955
        %v2957 = vpop.f32.mrf.mxu0
        %v2958 = vadd.f32 0.0, %v2957
        %2959 = vmatmul.bf16.gmra.mxu0 %v2721
        %v2960 = vpop.f32.mrf.mxu0
        %v2961 = vadd.f32 0.0, %v2960
        %v2962 = vpop.f32.mrf.mxu0
        %v2963 = vadd.f32 0.0, %v2962
        %2964 = vmatmul.bf16.gmra.mxu0 %v2722
        %v2965 = vpop.f32.mrf.mxu0
        %v2966 = vadd.f32 0.0, %v2965
        %v2967 = vpop.f32.mrf.mxu0
        %v2968 = vadd.f32 0.0, %v2967
        %2969 = vmatmul.bf16.gmra.mxu0 %v2723
        %v2970 = vpop.f32.mrf.mxu0
        %v2971 = vadd.f32 0.0, %v2970
        %v2972 = vpop.f32.mrf.mxu0
        %v2973 = vadd.f32 0.0, %v2972
        %2974 = vdwg.mxu0
        %2975 = vmatpush.bf16.msra.mxu0 %v2855
        %2976 = vmatpush.bf16.msra.mxu0 %v2851
        %2977 = vmatpush.bf16.msra.mxu0 %v2847
        %2978 = vmatpush.bf16.msra.mxu0 %v2843
        %2979 = vmatpush.bf16.msra.mxu0 %v2839
        %2980 = vmatpush.bf16.msra.mxu0 %v2835
        %2981 = vmatpush.bf16.msra.mxu0 %v2831
        %2982 = vmatpush.bf16.msra.mxu0 %v2827
        %2983 = vmatmul.bf16.gmra.mxu0 %v2720
        %v2984 = vpop.f32.mrf.mxu0
        %v2985 = vadd.f32 0.0, %v2984
        %v2986 = vpop.f32.mrf.mxu0
        %v2987 = vadd.f32 0.0, %v2986
        %2988 = vmatmul.bf16.gmra.mxu0 %v2721
        %v2989 = vpop.f32.mrf.mxu0
        %v2990 = vadd.f32 0.0, %v2989
        %v2991 = vpop.f32.mrf.mxu0
        %v2992 = vadd.f32 0.0, %v2991
        %2993 = vmatmul.bf16.gmra.mxu0 %v2722
        %v2994 = vpop.f32.mrf.mxu0
        %v2995 = vadd.f32 0.0, %v2994
        %v2996 = vpop.f32.mrf.mxu0
        %v2997 = vadd.f32 0.0, %v2996
        %2998 = vmatmul.bf16.gmra.mxu0 %v2723
        %v2999 = vpop.f32.mrf.mxu0
        %v3000 = vadd.f32 0.0, %v2999
        %v3001 = vpop.f32.mrf.mxu0
        %v3002 = vadd.f32 0.0, %v3001
        %3003 = vdwg.mxu0
        %vm3004 = vcmp.gt.f32.partialorder %v2985, 0.0
        %vm3005 = vcmp.gt.f32.partialorder %v2987, 0.0
        %vm3006 = vcmp.gt.f32.partialorder %v2990, 0.0
        %vm3007 = vcmp.gt.f32.partialorder %v2992, 0.0
        %vm3008 = vcmp.gt.f32.partialorder %v2995, 0.0
        %vm3009 = vcmp.gt.f32.partialorder %v2997, 0.0
        %vm3010 = vcmp.gt.f32.partialorder %v3000, 0.0
        %vm3011 = vcmp.gt.f32.partialorder %v3002, 0.0
        %v3012 = vrcp.pop %v2985
        %v3013 = vmul.f32 %v2985, %v3012
        %v3014 = vsub.f32 1.0, %v3013
        %v3015 = vmul.f32 %v3012, %v3014
        %v3016 = vadd.f32 %v3012, %v3015
        %vm3017 = vweird.f32 %v2985
        %vm3018 = vweird.f32 %v3012
        %vm3019 = vmor %vm3017, %vm3018
        %v3020 = vsel %vm3019, %v3012, %v3016
        %v3021 = vand.u32 2147483647, %v2985
        %vm3022 = vcmp.eq.f32.partialorder %v3021, 8.507059e+37
        %v3023 = vand.u32 %v2985, 2147483648
        %v3024 = vor.u32 1.1754944e-38, %v3023
        %v3025 = vsel %vm3022, %v3024, %v3020
        %v3026 = vmul.f32 1.0, %v3025
        %v3027 = vrcp.pop %v2987
        %v3028 = vmul.f32 %v2987, %v3027
        %v3029 = vsub.f32 1.0, %v3028
        %v3030 = vmul.f32 %v3027, %v3029
        %v3031 = vadd.f32 %v3027, %v3030
        %vm3032 = vweird.f32 %v2987
        %vm3033 = vweird.f32 %v3027
        %vm3034 = vmor %vm3032, %vm3033
        %v3035 = vsel %vm3034, %v3027, %v3031
        %v3036 = vand.u32 2147483647, %v2987
        %vm3037 = vcmp.eq.f32.partialorder %v3036, 8.507059e+37
        %v3038 = vand.u32 %v2987, 2147483648
        %v3039 = vor.u32 1.1754944e-38, %v3038
        %v3040 = vsel %vm3037, %v3039, %v3035
        %v3041 = vmul.f32 1.0, %v3040
        %v3042 = vrcp.pop %v2990
        %v3043 = vmul.f32 %v2990, %v3042
        %v3044 = vsub.f32 1.0, %v3043
        %v3045 = vmul.f32 %v3042, %v3044
        %v3046 = vadd.f32 %v3042, %v3045
        %vm3047 = vweird.f32 %v2990
        %vm3048 = vweird.f32 %v3042
        %vm3049 = vmor %vm3047, %vm3048
        %v3050 = vsel %vm3049, %v3042, %v3046
        %v3051 = vand.u32 2147483647, %v2990
        %vm3052 = vcmp.eq.f32.partialorder %v3051, 8.507059e+37
        %v3053 = vand.u32 %v2990, 2147483648
        %v3054 = vor.u32 1.1754944e-38, %v3053
        %v3055 = vsel %vm3052, %v3054, %v3050
        %v3056 = vmul.f32 1.0, %v3055
        %v3057 = vrcp.pop %v2992
        %v3058 = vmul.f32 %v2992, %v3057
        %v3059 = vsub.f32 1.0, %v3058
        %v3060 = vmul.f32 %v3057, %v3059
        %v3061 = vadd.f32 %v3057, %v3060
        %vm3062 = vweird.f32 %v2992
        %vm3063 = vweird.f32 %v3057
        %vm3064 = vmor %vm3062, %vm3063
        %v3065 = vsel %vm3064, %v3057, %v3061
        %v3066 = vand.u32 2147483647, %v2992
        %vm3067 = vcmp.eq.f32.partialorder %v3066, 8.507059e+37
        %v3068 = vand.u32 %v2992, 2147483648
        %v3069 = vor.u32 1.1754944e-38, %v3068
        %v3070 = vsel %vm3067, %v3069, %v3065
        %v3071 = vmul.f32 1.0, %v3070
        %v3072 = vrcp.pop %v2995
        %v3073 = vmul.f32 %v2995, %v3072
        %v3074 = vsub.f32 1.0, %v3073
        %v3075 = vmul.f32 %v3072, %v3074
        %v3076 = vadd.f32 %v3072, %v3075
        %vm3077 = vweird.f32 %v2995
        %vm3078 = vweird.f32 %v3072
        %vm3079 = vmor %vm3077, %vm3078
        %v3080 = vsel %vm3079, %v3072, %v3076
        %v3081 = vand.u32 2147483647, %v2995
        %vm3082 = vcmp.eq.f32.partialorder %v3081, 8.507059e+37
        %v3083 = vand.u32 %v2995, 2147483648
        %v3084 = vor.u32 1.1754944e-38, %v3083
        %v3085 = vsel %vm3082, %v3084, %v3080
        %v3086 = vmul.f32 1.0, %v3085
        %v3087 = vrcp.pop %v2997
        %v3088 = vmul.f32 %v2997, %v3087
        %v3089 = vsub.f32 1.0, %v3088
        %v3090 = vmul.f32 %v3087, %v3089
        %v3091 = vadd.f32 %v3087, %v3090
        %vm3092 = vweird.f32 %v2997
        %vm3093 = vweird.f32 %v3087
        %vm3094 = vmor %vm3092, %vm3093
        %v3095 = vsel %vm3094, %v3087, %v3091
        %v3096 = vand.u32 2147483647, %v2997
        %vm3097 = vcmp.eq.f32.partialorder %v3096, 8.507059e+37
        %v3098 = vand.u32 %v2997, 2147483648
        %v3099 = vor.u32 1.1754944e-38, %v3098
        %v3100 = vsel %vm3097, %v3099, %v3095
        %v3101 = vmul.f32 1.0, %v3100
        %v3102 = vrcp.pop %v3000
        %v3103 = vmul.f32 %v3000, %v3102
        %v3104 = vsub.f32 1.0, %v3103
        %v3105 = vmul.f32 %v3102, %v3104
        %v3106 = vadd.f32 %v3102, %v3105
        %vm3107 = vweird.f32 %v3000
        %vm3108 = vweird.f32 %v3102
        %vm3109 = vmor %vm3107, %vm3108
        %v3110 = vsel %vm3109, %v3102, %v3106
        %v3111 = vand.u32 2147483647, %v3000
        %vm3112 = vcmp.eq.f32.partialorder %v3111, 8.507059e+37
        %v3113 = vand.u32 %v3000, 2147483648
        %v3114 = vor.u32 1.1754944e-38, %v3113
        %v3115 = vsel %vm3112, %v3114, %v3110
        %v3116 = vmul.f32 1.0, %v3115
        %v3117 = vrcp.pop %v3002
        %v3118 = vmul.f32 %v3002, %v3117
        %v3119 = vsub.f32 1.0, %v3118
        %v3120 = vmul.f32 %v3117, %v3119
        %v3121 = vadd.f32 %v3117, %v3120
        %vm3122 = vweird.f32 %v3002
        %vm3123 = vweird.f32 %v3117
        %vm3124 = vmor %vm3122, %vm3123
        %v3125 = vsel %vm3124, %v3117, %v3121
        %v3126 = vand.u32 2147483647, %v3002
        %vm3127 = vcmp.eq.f32.partialorder %v3126, 8.507059e+37
        %v3128 = vand.u32 %v3002, 2147483648
        %v3129 = vor.u32 1.1754944e-38, %v3128
        %v3130 = vsel %vm3127, %v3129, %v3125
        %v3131 = vmul.f32 1.0, %v3130
        %v3132 = vsel %vm3004, %v3026, 0.0
        %v3133 = vsel %vm3005, %v3041, 0.0
        %v3134 = vsel %vm3006, %v3056, 0.0
        %v3135 = vsel %vm3007, %v3071, 0.0
        %v3136 = vsel %vm3008, %v3086, 0.0
        %v3137 = vsel %vm3009, %v3101, 0.0
        %v3138 = vsel %vm3010, %v3116, 0.0
        %v3139 = vsel %vm3011, %v3131, 0.0
        %3141 = vset.pattern.permute.xlu0 0
        %3142 = vperm.xlu0 %3141, %v3132
        %v3143 = vpop.permute.xlu0 %3142
        %3146 = vset.pattern.permute.xlu0 0
        %3147 = vperm.xlu0 %3146, %v3133
        %v3148 = vpop.permute.xlu0 %3147
        %3151 = vset.pattern.permute.xlu0 0
        %3152 = vperm.xlu0 %3151, %v3134
        %v3153 = vpop.permute.xlu0 %3152
        %3156 = vset.pattern.permute.xlu0 0
        %3157 = vperm.xlu0 %3156, %v3135
        %v3158 = vpop.permute.xlu0 %3157
        %3161 = vset.pattern.permute.xlu0 0
        %3162 = vperm.xlu0 %3161, %v3136
        %v3163 = vpop.permute.xlu0 %3162
        %3166 = vset.pattern.permute.xlu0 0
        %3167 = vperm.xlu0 %3166, %v3137
        %v3168 = vpop.permute.xlu0 %3167
        %3171 = vset.pattern.permute.xlu0 0
        %3172 = vperm.xlu0 %3171, %v3138
        %v3173 = vpop.permute.xlu0 %3172
        %3176 = vset.pattern.permute.xlu0 0
        %3177 = vperm.xlu0 %3176, %v3139
        %v3178 = vpop.permute.xlu0 %3177
        %v3180 = vmul.f32 %v2898, %v3143
        %v3181 = vmul.f32 %v2900, %v3148
        %v3182 = vmul.f32 %v2903, %v3153
        %v3183 = vmul.f32 %v2905, %v3158
        %v3184 = vmul.f32 %v2908, %v3163
        %v3185 = vmul.f32 %v2910, %v3168
        %v3186 = vmul.f32 %v2913, %v3173
        %v3187 = vmul.f32 %v2915, %v3178
        %v3188 = vld [vmem:[%s655] sm:$0x1]
        %v3190 = vperm.slane %v3188, 0
        %v3192 = vmul.f32 %v3180, %v3190
        %v3193 = vmul.f32 %v3181, %v3190
        %v3194 = vmul.f32 %v3182, %v3190
        %v3195 = vmul.f32 %v3183, %v3190
        %v3196 = vmul.f32 %v3184, %v3190
        %v3197 = vmul.f32 %v3185, %v3190
        %v3198 = vmul.f32 %v3186, %v3190
        %v3199 = vmul.f32 %v3187, %v3190
        %v3200 = vld [vmem:[%s659] sm:$0x1]
        %v3202 = vperm.slane %v3200, 0
        %v3204 = vadd.f32 %v3192, %v3202
        %v3205 = vadd.f32 %v3193, %v3202
        %v3206 = vadd.f32 %v3194, %v3202
        %v3207 = vadd.f32 %v3195, %v3202
        %v3208 = vadd.f32 %v3196, %v3202
        %v3209 = vadd.f32 %v3197, %v3202
        %v3210 = vadd.f32 %v3198, %v3202
        %v3211 = vadd.f32 %v3199, %v3202
        %v3212 = vtanh.pop %v3204
        %v3213 = vtanh.pop %v3205
        %v3214 = vtanh.pop %v3206
        %v3215 = vtanh.pop %v3207
        %v3216 = vtanh.pop %v3208
        %v3217 = vtanh.pop %v3209
        %v3218 = vtanh.pop %v3210
        %v3219 = vtanh.pop %v3211
        %3220 = vset.pattern.permute.xlu0 1
        %3221 = vperm.xlu0 %3220, %v3132
        %v3222 = vpop.permute.xlu0 %3221
        %3224 = vset.pattern.permute.xlu0 1
        %3225 = vperm.xlu0 %3224, %v3133
        %v3226 = vpop.permute.xlu0 %3225
        %3228 = vset.pattern.permute.xlu0 1
        %3229 = vperm.xlu0 %3228, %v3134
        %v3230 = vpop.permute.xlu0 %3229
        %3232 = vset.pattern.permute.xlu0 1
        %3233 = vperm.xlu0 %3232, %v3135
        %v3234 = vpop.permute.xlu0 %3233
        %3236 = vset.pattern.permute.xlu0 1
        %3237 = vperm.xlu0 %3236, %v3136
        %v3238 = vpop.permute.xlu0 %3237
        %3240 = vset.pattern.permute.xlu0 1
        %3241 = vperm.xlu0 %3240, %v3137
        %v3242 = vpop.permute.xlu0 %3241
        %3244 = vset.pattern.permute.xlu0 1
        %3245 = vperm.xlu0 %3244, %v3138
        %v3246 = vpop.permute.xlu0 %3245
        %3248 = vset.pattern.permute.xlu0 1
        %3249 = vperm.xlu0 %3248, %v3139
        %v3250 = vpop.permute.xlu0 %3249
        %v3252 = vmul.f32 %v2927, %v3222
        %v3253 = vmul.f32 %v2929, %v3226
        %v3254 = vmul.f32 %v2932, %v3230
        %v3255 = vmul.f32 %v2934, %v3234
        %v3256 = vmul.f32 %v2937, %v3238
        %v3257 = vmul.f32 %v2939, %v3242
        %v3258 = vmul.f32 %v2942, %v3246
        %v3259 = vmul.f32 %v2944, %v3250
        %s3260 = scalar_lea.vmem %s655, 1
        %v3261 = vld [vmem:[%s3260] sm:$0x1]
        %v3263 = vperm.slane %v3261, 0
        %v3265 = vmul.f32 %v3252, %v3263
        %v3266 = vmul.f32 %v3253, %v3263
        %v3267 = vmul.f32 %v3254, %v3263
        %v3268 = vmul.f32 %v3255, %v3263
        %v3269 = vmul.f32 %v3256, %v3263
        %v3270 = vmul.f32 %v3257, %v3263
        %v3271 = vmul.f32 %v3258, %v3263
        %v3272 = vmul.f32 %v3259, %v3263
        %s3273 = scalar_lea.vmem %s659, 1
        %v3274 = vld [vmem:[%s3273] sm:$0x1]
        %v3276 = vperm.slane %v3274, 0
        %v3278 = vadd.f32 %v3265, %v3276
        %v3279 = vadd.f32 %v3266, %v3276
        %v3280 = vadd.f32 %v3267, %v3276
        %v3281 = vadd.f32 %v3268, %v3276
        %v3282 = vadd.f32 %v3269, %v3276
        %v3283 = vadd.f32 %v3270, %v3276
        %v3284 = vadd.f32 %v3271, %v3276
        %v3285 = vadd.f32 %v3272, %v3276
        %v3286 = vtanh.pop %v3278
        %v3287 = vtanh.pop %v3279
        %v3288 = vtanh.pop %v3280
        %v3289 = vtanh.pop %v3281
        %v3290 = vtanh.pop %v3282
        %v3291 = vtanh.pop %v3283
        %v3292 = vtanh.pop %v3284
        %v3293 = vtanh.pop %v3285
        %3294 = vset.pattern.permute.xlu0 2
        %3295 = vperm.xlu0 %3294, %v3132
        %v3296 = vpop.permute.xlu0 %3295
        %3298 = vset.pattern.permute.xlu0 2
        %3299 = vperm.xlu0 %3298, %v3133
        %v3300 = vpop.permute.xlu0 %3299
        %3302 = vset.pattern.permute.xlu0 2
        %3303 = vperm.xlu0 %3302, %v3134
        %v3304 = vpop.permute.xlu0 %3303
        %3306 = vset.pattern.permute.xlu0 2
        %3307 = vperm.xlu0 %3306, %v3135
        %v3308 = vpop.permute.xlu0 %3307
        %3310 = vset.pattern.permute.xlu0 2
        %3311 = vperm.xlu0 %3310, %v3136
        %v3312 = vpop.permute.xlu0 %3311
        %3314 = vset.pattern.permute.xlu0 2
        %3315 = vperm.xlu0 %3314, %v3137
        %v3316 = vpop.permute.xlu0 %3315
        %3318 = vset.pattern.permute.xlu0 2
        %3319 = vperm.xlu0 %3318, %v3138
        %v3320 = vpop.permute.xlu0 %3319
        %3322 = vset.pattern.permute.xlu0 2
        %3323 = vperm.xlu0 %3322, %v3139
        %v3324 = vpop.permute.xlu0 %3323
        %v3326 = vmul.f32 %v2956, %v3296
        %v3327 = vmul.f32 %v2958, %v3300
        %v3328 = vmul.f32 %v2961, %v3304
        %v3329 = vmul.f32 %v2963, %v3308
        %v3330 = vmul.f32 %v2966, %v3312
        %v3331 = vmul.f32 %v2968, %v3316
        %v3332 = vmul.f32 %v2971, %v3320
        %v3333 = vmul.f32 %v2973, %v3324
        %s3334 = scalar_lea.vmem %s655, 2
        %v3335 = vld [vmem:[%s3334] sm:$0x1]
        %v3337 = vperm.slane %v3335, 0
        %v3339 = vmul.f32 %v3326, %v3337
        %v3340 = vmul.f32 %v3327, %v3337
        %v3341 = vmul.f32 %v3328, %v3337
        %v3342 = vmul.f32 %v3329, %v3337
        %v3343 = vmul.f32 %v3330, %v3337
        %v3344 = vmul.f32 %v3331, %v3337
        %v3345 = vmul.f32 %v3332, %v3337
        %v3346 = vmul.f32 %v3333, %v3337
        %s3347 = scalar_lea.vmem %s659, 2
        %v3348 = vld [vmem:[%s3347] sm:$0x1]
        %v3350 = vperm.slane %v3348, 0
        %v3352 = vadd.f32 %v3339, %v3350
        %v3353 = vadd.f32 %v3340, %v3350
        %v3354 = vadd.f32 %v3341, %v3350
        %v3355 = vadd.f32 %v3342, %v3350
        %v3356 = vadd.f32 %v3343, %v3350
        %v3357 = vadd.f32 %v3344, %v3350
        %v3358 = vadd.f32 %v3345, %v3350
        %v3359 = vadd.f32 %v3346, %v3350
        %v3360 = vtanh.pop %v3352
        %v3361 = vtanh.pop %v3353
        %v3362 = vtanh.pop %v3354
        %v3363 = vtanh.pop %v3355
        %v3364 = vtanh.pop %v3356
        %v3365 = vtanh.pop %v3357
        %v3366 = vtanh.pop %v3358
        %v3367 = vtanh.pop %v3359
        %v3368 = vadd.f32 %v3360, %v691
        %v3369 = vadd.f32 %v3361, %v692
        %v3370 = vadd.f32 %v3362, %v693
        %v3371 = vadd.f32 %v3363, %v694
        %v3372 = vadd.f32 %v3364, %v695
        %v3373 = vadd.f32 %v3365, %v696
        %v3374 = vadd.f32 %v3366, %v697
        %v3375 = vadd.f32 %v3367, %v698
        %v3376 = vadd.f32 %v3368, %v3212
        %v3377 = vadd.f32 %v3369, %v3213
        %v3378 = vadd.f32 %v3370, %v3214
        %v3379 = vadd.f32 %v3371, %v3215
        %v3380 = vadd.f32 %v3372, %v3216
        %v3381 = vadd.f32 %v3373, %v3217
        %v3382 = vadd.f32 %v3374, %v3218
        %v3383 = vadd.f32 %v3375, %v3219
        %v3384 = vadd.f32 %v3376, %v3286
        %v3385 = vadd.f32 %v3377, %v3287
        %v3386 = vadd.f32 %v3378, %v3288
        %v3387 = vadd.f32 %v3379, %v3289
        %v3388 = vadd.f32 %v3380, %v3290
        %v3389 = vadd.f32 %v3381, %v3291
        %v3390 = vadd.f32 %v3382, %v3292
        %v3391 = vadd.f32 %v3383, %v3293
        %3392 = vst [vmem:[#allocation6] sm:$0xff] %v3384
        %3393 = vst [vmem:[#allocation6 + $0x8] sm:$0xff] %v3385
        %3394 = vst [vmem:[#allocation6 + $0x10] sm:$0xff] %v3386
        %3395 = vst [vmem:[#allocation6 + $0x18] sm:$0xff] %v3387
        %3396 = vst [vmem:[#allocation6 + $0x20] sm:$0xff] %v3388
        %3397 = vst [vmem:[#allocation6 + $0x28] sm:$0xff] %v3389
        %3398 = vst [vmem:[#allocation6 + $0x30] sm:$0xff] %v3390
        %3399 = vst [vmem:[#allocation6 + $0x38] sm:$0xff] %v3391
        %v3400 = vld [vmem:[%s5] sm:$0xf]
        %v3402 = vsel %vm761, %v3400, 0
        %3404 = vmatpush.bf16.msra.mxu0 0
        %3405 = vmatpush.bf16.msra.mxu0 0
        %3406 = vmatpush.bf16.msra.mxu0 0
        %3407 = vmatpush.bf16.msra.mxu0 0
        %3408 = vmatpush.bf16.msra.mxu0 %v703
        %3409 = vmatpush.bf16.msra.mxu0 %v702
        %3410 = vmatpush.bf16.msra.mxu0 %v701
        %3411 = vmatpush.bf16.msra.mxu0 %v700
        %3412 = vmatmul.bf16.gmra.mxu0 %v3402
        %v3413 = vpop.f32.mrf.mxu0
        %v3414 = vadd.f32 0.0, %v3413
        %v3415 = vpop.f32.mrf.mxu0
        %3416 = vdwg.mxu0
        %v3417 = vld [vmem:[%s9] sm:$0xff]
        %3419 = vset.pattern.permute.xlu0 0
        %3420 = vperm.xlu0 %3419, %v3417
        %v3421 = vpop.permute.xlu0 %3420
        %v3423 = vmul.f32 %v3414, %v3421
        %v3424 = vpack.c.bf16 %v3423, %v3423
        %v3425 = vld [vmem:[%s664] sm:$0xf]
        %v3426 = vld [vmem:[%s664 + $0x4] sm:$0xf]
        %v3427 = vld [vmem:[%s664 + $0x8] sm:$0xf]
        %v3428 = vld [vmem:[%s664 + $0xc] sm:$0xf]
        %v3429 = vld [vmem:[%s664 + $0x10] sm:$0xf]
        %v3430 = vld [vmem:[%s664 + $0x14] sm:$0xf]
        %v3431 = vld [vmem:[%s664 + $0x18] sm:$0xf]
        %v3432 = vld [vmem:[%s664 + $0x1c] sm:$0xf]
        %v3433 = vld [vmem:[%s664 + $0x20] sm:$0xf]
        %v3434 = vld [vmem:[%s664 + $0x24] sm:$0xf]
        %v3435 = vld [vmem:[%s664 + $0x28] sm:$0xf]
        %v3436 = vld [vmem:[%s664 + $0x2c] sm:$0xf]
        %v3437 = vld [vmem:[%s664 + $0x30] sm:$0xf]
        %v3438 = vld [vmem:[%s664 + $0x34] sm:$0xf]
        %v3439 = vld [vmem:[%s664 + $0x38] sm:$0xf]
        %v3440 = vld [vmem:[%s664 + $0x3c] sm:$0xf]
        %v3441 = vld [vmem:[%s667] sm:$0x1]
        %v3443 = vperm.slane %v3441, 0
        %v3461 = vunpack.c.l.b16 %v3425
        %v3462 = vunpack.c.l.b16 %v3426
        %v3463 = vunpack.c.l.b16 %v3427
        %v3464 = vunpack.c.l.b16 %v3428
        %v3465 = vunpack.c.l.b16 %v3429
        %v3466 = vunpack.c.l.b16 %v3430
        %v3467 = vunpack.c.l.b16 %v3431
        %v3468 = vunpack.c.l.b16 %v3432
        %v3469 = vunpack.c.l.b16 %v3433
        %v3470 = vunpack.c.l.b16 %v3434
        %v3471 = vunpack.c.l.b16 %v3435
        %v3472 = vunpack.c.l.b16 %v3436
        %v3473 = vunpack.c.l.b16 %v3437
        %v3474 = vunpack.c.l.b16 %v3438
        %v3475 = vunpack.c.l.b16 %v3439
        %v3476 = vunpack.c.l.b16 %v3440
        %v3477 = vpack.c.b16 %v3462, %v3461
        %v3478 = vpack.c.b16 %v3464, %v3463
        %v3479 = vpack.c.b16 %v3466, %v3465
        %v3480 = vpack.c.b16 %v3468, %v3467
        %v3481 = vpack.c.b16 %v3470, %v3469
        %v3482 = vpack.c.b16 %v3472, %v3471
        %v3483 = vpack.c.b16 %v3474, %v3473
        %v3484 = vpack.c.b16 %v3476, %v3475
        %3493 = vmatpush.bf16.msra.mxu0 %v3484
        %3494 = vmatpush.bf16.msra.mxu0 %v3483
        %3495 = vmatpush.bf16.msra.mxu0 %v3482
        %3496 = vmatpush.bf16.msra.mxu0 %v3481
        %3497 = vmatpush.bf16.msra.mxu0 %v3480
        %3498 = vmatpush.bf16.msra.mxu0 %v3479
        %3499 = vmatpush.bf16.msra.mxu0 %v3478
        %3500 = vmatpush.bf16.msra.mxu0 %v3477
        %3501 = vmatmul.bf16.gmra.mxu0 %v3424
        %v3502 = vpop.f32.mrf.mxu0
        %v3503 = vadd.f32 %v3443, %v3502
        %v3504 = vpop.f32.mrf.mxu0
        %3505 = vdwg.mxu0
        %v3506 = vld [vmem:[%s10] sm:$0xff]
        %3508 = vset.pattern.permute.xlu0 0
        %3509 = vperm.xlu0 %3508, %v3506
        %v3510 = vpop.permute.xlu0 %3509
        %v3512 = vmul.f32 %v3503, %v3510
        %v3513 = vtanh.pop %v3512
        %v3514 = vadd.f32 %v699, %v3513
        %3515 = vst [vmem:[#allocation7] sm:$0xff] %v3514
        // Predicated region
        $region97: #{tpu_custom_call.1} parent=87 // pred_check
          %p3516 = pneg %p435
        $region98: #{tpu_custom_call.1} parent=87 // pred_check_branch
          %3518 = sbr.rel (%p3516) target = $region100
        $region99: #{tpu_custom_call.1} parent=87 // pred_region
          %3520 = vsyncadd [#allocation5], 0
          %s3521 = sshll.u32 [#allocation6], 4
          %s3522 = int_to_ptr.vmem [resolvable:$true] %s3521
          %s3523 = sshll.u32 %s17, 4
          %s3524 = int_to_ptr.hbm [resolvable:$true] %s3523
          %3529 = dma.vmem_to_hbm [thread:$0]  %s3522, 1024, %s3524, [#allocation5], 128, 128, 8
        $region100: #{tpu_custom_call.1} parent=87 // pred_fallthru
          _
        // Predicated region
        $region101: #{tpu_custom_call.1} parent=87 // pred_check
          %p3530 = pneg %p456
        $region102: #{tpu_custom_call.1} parent=87 // pred_check_branch
          %3532 = sbr.rel (%p3530) target = $region104
        $region103: #{tpu_custom_call.1} parent=87 // pred_region
          %3534 = vsyncadd [#allocation8], 0
          %s3536 = sshll.u32 [#allocation7], 4
          %s3537 = int_to_ptr.vmem [resolvable:$true] %s3536
          %s3538 = sshll.u32 %s18, 4
          %s3539 = int_to_ptr.hbm [resolvable:$true] %s3538
          %3541 = dma.vmem_to_hbm [thread:$0]  %s3537, 128, %s3539, [#allocation8]
        $region104: #{tpu_custom_call.1} parent=87 // pred_fallthru
          _
        // Predicated region
        $region105: #{tpu_custom_call.1} parent=87 // pred_check
          %p3542 = pneg %p435
        $region106: #{tpu_custom_call.1} parent=87 // pred_check_branch
          %3544 = sbr.rel (%p3542) target = $region108
        $region107: #{tpu_custom_call.1} parent=87 // pred_region
          %3546 = dma.done [#allocation5], 1024
        $region108: #{tpu_custom_call.1} parent=87 // pred_fallthru
          _
        // Predicated region
        $region109: #{tpu_custom_call.1} parent=87 // pred_check
          %p3547 = pneg %p456
        $region110: #{tpu_custom_call.1} parent=87 // pred_check_branch
          %3549 = sbr.rel (%p3547) target = $region112
        $region111: #{tpu_custom_call.1} parent=87 // pred_region
          %3551 = dma.done [#allocation8], 128
        $region112: #{tpu_custom_call.1} parent=87 // pred_fallthru
          _
      $region88: #{tpu_custom_call.1} parent=5 // pred_fallthru
        _
      %p3552 = scmp.le.s32.totalorder 2, %s30
      // Predicated region
      $region113: #{tpu_custom_call.1} parent=5 // pred_check
        %p3553 = pneg %p3552
      $region114: #{tpu_custom_call.1} parent=5 // pred_check_branch
        %3555 = sbr.rel (%p3553) target = $region116
      $region115: #{tpu_custom_call.1} parent=5 // pred_region
        %s3556 = ssub.s32 %s30, 2
      $region116: #{tpu_custom_call.1} parent=5 // pred_fallthru
        _
    $region6: #{tpu_custom_call.1} parent=1 // loop_footer
      %s34 = sadd.s32 1, %s30
    $region7: #{tpu_custom_call.1} parent=1 // loop_footer_branch
      %29 = sbr.rel target = $region3
    $region8: #{tpu_custom_call.1} parent=1 // loop_exit
      _
    %3557 = vsyncpa [#allocation4], 1
    %s3558 = scalar_lea.sflag [#allocation4], 1
    %3559 = vsyncpa %s3558, 1
    %3560 = vsyncpa [#allocation5], 1
    %s3561 = scalar_lea.sflag [#allocation5], 1
    %3562 = vsyncpa %s3561, 1
    %3563 = vsyncpa [#allocation8], 1

</llo_original>
